<compile_context>
chip_gen: v6e
topology: v6e:2x2x1
jax: 0.10.0
libtpu: 0.0.40
codegen_flags: <defaults>
</compile_context>

<pallas_src>
import functools

import jax
import jax.numpy as jnp
from jax.experimental import pallas as pl
from jax.experimental.pallas import tpu as pltpu


def get_same_padding(kernel_size: int) -> int:
    return kernel_size // 2


def _conv_kernel(x_ref, w_ref, o_ref, *, k, stride, dilation, th_out, w_out,
                 n_ht):
    """One (batch, H-tile) grid step.

    x_ref: (1, Cin, Hp, Wp)      compute dtype, whole padded image (resident per batch)
    w_ref: (Cout, K*K*Cin)       compute dtype, rows ordered (kh, kw, ci)
    o_ref: (1, Cout, TH, Wout)   NCHW output tile
    """
    rows_in = (th_out - 1) * stride + (k - 1) * dilation + 1
    if n_ht == 1:
        h_base = 0                                   # fully static slice
    else:
        h_base = pl.program_id(1) * (th_out * stride)
        if (th_out * stride) % 8 == 0:               # true by construction
            h_base = pl.multiple_of(h_base, 8)

    # One (8-aligned) dynamic slice of the resident image; everything below is
    # static slicing of small values.
    x_win = x_ref[0, :, pl.ds(h_base, rows_in), :]       # (Cin, rows_in, Wp)
    wmat = w_ref[...]                                    # (Cout, K*K*Cin)
    wspan = (w_out - 1) * stride + 1

    # TODO(synk): for stride > 1 prefer ref-side strided pl.ds loads over the
    # value-level strided slice below (only the stride == 1 path is exercised
    # by the self-test).
    for th in range(th_out):
        pieces = []
        for kh in range(k):
            row = x_win[:, th * stride + kh * dilation, :]        # (Cin, Wp)
            for kw in range(k):
                c0 = kw * dilation
                if stride == 1:
                    pieces.append(row[:, c0:c0 + w_out])
                else:
                    pieces.append(row[:, c0:c0 + wspan:stride])
        patch = jnp.concatenate(pieces, axis=0)                   # (K*K*Cin, Wout)
        y = jnp.dot(wmat, patch, preferred_element_type=jnp.float32)
        o_ref[0, :, th, :] = y.astype(o_ref.dtype)                # (Cout, Wout)


def dynamic_point_conv2d(x_nchw, weight, out_channel=None, *, kernel_size=3,
                         stride=1, dilation=1, h_tile=None,
                         compute_dtype=jnp.bfloat16):
    """x_nchw: (N, Cin, H, W); weight: (MaxOut, MaxIn, K, K). Returns NCHW."""
    if out_channel is None:
        out_channel = weight.shape[0]
    n, cin, h, w = x_nchw.shape
    k = kernel_size
    pad = get_same_padding(k)

    h_out = (h + 2 * pad - dilation * (k - 1) - 1) // stride + 1
    w_out = (w + 2 * pad - dilation * (k - 1) - 1) // stride + 1

    # ---- H tiling of the output --------------------------------------------
    if h_tile is None:
        h_tile = 16
    h_tile = max(1, min(h_tile, h_out))
    if h_tile < h_out:
        # multiple of 8: satisfies the (8,128) block rule on the output tile
        # and keeps the in-kernel dynamic H slice 8-sublane aligned.
        h_tile = ((h_tile + 7) // 8) * 8
    n_ht = pl.cdiv(h_out, h_tile)
    h_out_pad = n_ht * h_tile

    # ---- input: NCHW, zero 'same' pad (+ extra rows for the last H tile),
    #      cast to the compute dtype (bf16 -> half the HBM read traffic) ------
    rows_needed = (h_out_pad - 1) * stride + (k - 1) * dilation + 1
    hp = max(h + 2 * pad, rows_needed)
    wp = w + 2 * pad
    x_pad = jnp.pad(
        x_nchw, ((0, 0), (0, 0), (pad, hp - h - pad), (pad, pad))
    ).astype(compute_dtype)

    # ---- weights: dynamic slice, (Cout, kh*kw*ci) rows, compute dtype -------
    kkc = k * k * cin
    filt = weight[:out_channel, :cin, :, :]               # (Cout, Cin, K, K)
    w2 = jnp.transpose(filt, (0, 2, 3, 1)).reshape(out_channel, kkc)
    w2 = w2.astype(compute_dtype)

    kernel = functools.partial(_conv_kernel, k=k, stride=stride,
                               dilation=dilation, th_out=h_tile, w_out=w_out,
                               n_ht=n_ht)

    out_dtype = x_nchw.dtype
    bpe_c = jnp.dtype(compute_dtype).itemsize
    bpe_o = jnp.dtype(out_dtype).itemsize

    cost = pl.CostEstimate(
        flops=2 * n * h_out * w_out * k * k * cin * out_channel,
        transcendentals=0,
        bytes_accessed=int(x_pad.size * bpe_c + w2.size * bpe_c
                           + n * out_channel * h_out_pad * w_out * bpe_o))

    # ---- generation-aware VMEM budget --------------------------------------
    try:
        vmem_cap = int(pltpu.get_tpu_info().vmem_capacity_bytes)
    except Exception:  # conservative fallback sized for v7x (64 MiB)
        vmem_cap = 64 * 1024 * 1024
    rows_in = (h_tile - 1) * stride + (k - 1) * dilation + 1
    est = (2 * cin * hp * wp * bpe_c                    # double-buffered image
           + 2 * out_channel * kkc * bpe_c              # resident weights
           + 2 * out_channel * h_tile * w_out * bpe_o   # output tile
           + 4 * cin * rows_in * wp * bpe_c             # x_win value + headroom
           + 4 * kkc * w_out * bpe_c                    # patch / matmul operands
           + (1 << 20))
    soft_cap = int(0.7 * vmem_cap)
    vmem_limit = int(min(max(2 * est, 32 * 1024 * 1024), soft_cap))

    y = pl.pallas_call(
        kernel,
        out_shape=jax.ShapeDtypeStruct((n, out_channel, h_out_pad, w_out),
                                       out_dtype),
        grid_spec=pltpu.PrefetchScalarGridSpec(
            num_scalar_prefetch=0,
            grid=(n, n_ht),
            in_specs=[
                # whole padded image, resident in VMEM for all H tiles of a
                # batch element (block index changes only with b)
                pl.BlockSpec((1, cin, hp, wp), lambda b, t: (b, 0, 0, 0)),
                # filters, resident for the whole grid
                pl.BlockSpec((out_channel, kkc), lambda b, t: (0, 0)),
            ],
            out_specs=pl.BlockSpec((1, out_channel, h_tile, w_out),
                                   lambda b, t: (b, 0, t, 0)),
        ),
        compiler_params=pltpu.CompilerParams(
            # batch axis "parallel": on v7x the two TensorCores split along
            # batch, so neither core duplicates the resident image.
            dimension_semantics=("parallel", "arbitrary"),
            vmem_limit_bytes=vmem_limit),
        cost_estimate=cost,
    )(x_pad, w2)

    if h_out_pad != h_out:
        y = y[:, :, :h_out, :]
    return y


if __name__ == "__main__":
    # small shapes consistent with the module
    batch, max_in, max_out = 2, 4, 8
    h = w = 16
    kernel_size, stride, dilation = 3, 1, 1
    active_out_channel = 6  # exercise the dynamic out-channel slicing

    key = jax.random.PRNGKey(0)
    kx, kw_ = jax.random.split(key)
    x = jax.random.normal(kx, (batch, max_in, h, w), dtype=jnp.float32)
    weight = jax.random.normal(
        kw_, (max_out, max_in, kernel_size, kernel_size), dtype=jnp.float32)

    y = dynamic_point_conv2d(x, weight, out_channel=active_out_channel,
                             kernel_size=kernel_size, stride=stride,
                             dilation=dilation)
    y = jax.block_until_ready(y)

    # Reference: XLA conv on bf16-rounded operands (the kernel computes with
    # bf16 operands + f32 accumulation; vs. the pure-f32 PyTorch reference the
    # difference is ~1e-2 relative, which is the intended compute precision).
    pad = get_same_padding(kernel_size)
    x_bf = x.astype(jnp.bfloat16).astype(jnp.float32)
    w_bf = weight[:active_out_channel, :max_in].astype(
        jnp.bfloat16).astype(jnp.float32)
    y_ref = jax.lax.conv_general_dilated(
        x_bf, w_bf,
        window_strides=(stride, stride),
        padding=((pad, pad), (pad, pad)),
        rhs_dilation=(dilation, dilation),
        dimension_numbers=("NCHW", "OIHW", "NCHW"))
    assert y.shape == y_ref.shape, (y.shape, y_ref.shape)
    assert jnp.allclose(y, y_ref, atol=3e-2, rtol=3e-2), float(
        jnp.max(jnp.abs(y - y_ref)))

    print("KERNEL_OK")
</pallas_src>

<mosaic_0001>
module attributes {stable_mosaic.version = 11 : i64} {
  func.func @_conv_kernel(%arg0: i32, %arg1: i32, %arg2: memref<1x4x18x18xbf16, #tpu.memory_space<vmem>>, %arg3: memref<6x36xbf16, #tpu.memory_space<vmem>>, %arg4: memref<1x6x16x16xf32, #tpu.memory_space<vmem>>) attributes {dimension_semantics = [#tpu.dimension_semantics<parallel>, #tpu.dimension_semantics<arbitrary>], iteration_bounds = array<i64: 2, 1>, scalar_prefetch = 0 : i64, scratch_operands = 0 : i64, tpu.core_type = #tpu.core_type<tc>, window_params = [{transform_indices = @transform_0, window_bounds = array<i64: 1, 4, 18, 18>}, {pipeline_mode = #tpu.pipeline_mode<synchronous>, transform_indices = @transform_1, window_bounds = array<i64: 6, 36>}, {transform_indices = @transform_2, window_bounds = array<i64: 1, 6, 16, 16>}]} {
    %c0 = arith.constant 0 : index
    %c0_0 = arith.constant 0 : index
    %c0_1 = arith.constant 0 : index
    %c0_2 = arith.constant 0 : index
    %0 = vector.load %arg2[%c0, %c0_0, %c0_1, %c0_2] : memref<1x4x18x18xbf16, #tpu.memory_space<vmem>>, vector<1x4x18x18xbf16>
    %1 = vector.shape_cast %0 : vector<1x4x18x18xbf16> to vector<4x18x18xbf16>
    %c0_3 = arith.constant 0 : index
    %c0_4 = arith.constant 0 : index
    %2 = vector.load %arg3[%c0_3, %c0_4] : memref<6x36xbf16, #tpu.memory_space<vmem>>, vector<6x36xbf16>
    %3 = vector.extract_strided_slice %1 {offsets = [0, 0, 0], sizes = [4, 1, 18], strides = [1, 1, 1]} : vector<4x18x18xbf16> to vector<4x1x18xbf16>
    %4 = vector.shape_cast %3 : vector<4x1x18xbf16> to vector<4x18xbf16>
    %5 = vector.extract_strided_slice %4 {offsets = [0, 0], sizes = [4, 16], strides = [1, 1]} : vector<4x18xbf16> to vector<4x16xbf16>
    %6 = vector.extract_strided_slice %4 {offsets = [0, 1], sizes = [4, 16], strides = [1, 1]} : vector<4x18xbf16> to vector<4x16xbf16>
    %7 = vector.extract_strided_slice %4 {offsets = [0, 2], sizes = [4, 16], strides = [1, 1]} : vector<4x18xbf16> to vector<4x16xbf16>
    %8 = vector.extract_strided_slice %1 {offsets = [0, 1, 0], sizes = [4, 1, 18], strides = [1, 1, 1]} : vector<4x18x18xbf16> to vector<4x1x18xbf16>
    %9 = vector.shape_cast %8 : vector<4x1x18xbf16> to vector<4x18xbf16>
    %10 = vector.extract_strided_slice %9 {offsets = [0, 0], sizes = [4, 16], strides = [1, 1]} : vector<4x18xbf16> to vector<4x16xbf16>
    %11 = vector.extract_strided_slice %9 {offsets = [0, 1], sizes = [4, 16], strides = [1, 1]} : vector<4x18xbf16> to vector<4x16xbf16>
    %12 = vector.extract_strided_slice %9 {offsets = [0, 2], sizes = [4, 16], strides = [1, 1]} : vector<4x18xbf16> to vector<4x16xbf16>
    %13 = vector.extract_strided_slice %1 {offsets = [0, 2, 0], sizes = [4, 1, 18], strides = [1, 1, 1]} : vector<4x18x18xbf16> to vector<4x1x18xbf16>
    %14 = vector.shape_cast %13 : vector<4x1x18xbf16> to vector<4x18xbf16>
    %15 = vector.extract_strided_slice %14 {offsets = [0, 0], sizes = [4, 16], strides = [1, 1]} : vector<4x18xbf16> to vector<4x16xbf16>
    %16 = vector.extract_strided_slice %14 {offsets = [0, 1], sizes = [4, 16], strides = [1, 1]} : vector<4x18xbf16> to vector<4x16xbf16>
    %17 = vector.extract_strided_slice %14 {offsets = [0, 2], sizes = [4, 16], strides = [1, 1]} : vector<4x18xbf16> to vector<4x16xbf16>
    %18 = tpu.concatenate %5, %6, %7, %10, %11, %12, %15, %16, %17 in 0 : vector<4x16xbf16>, vector<4x16xbf16>, vector<4x16xbf16>, vector<4x16xbf16>, vector<4x16xbf16>, vector<4x16xbf16>, vector<4x16xbf16>, vector<4x16xbf16>, vector<4x16xbf16> -> vector<36x16xbf16>
    %cst = arith.constant dense<0.000000e+00> : vector<6x16xf32>
    %19 = tpu.matmul %2, %18, %cst {dimension_numbers = #tpu.dot_dimension_numbers<[1], [0], [0], [1], [0, 0, 1, 1], [], []>} : vector<6x36xbf16>, vector<36x16xbf16>, vector<6x16xf32> -> vector<6x16xf32>
    %c0_5 = arith.constant 0 : index
    %c0_6 = arith.constant 0 : index
    %c0_7 = arith.constant 0 : index
    %c0_8 = arith.constant 0 : index
    %20 = vector.load %arg4[%c0_5, %c0_6, %c0_7, %c0_8] : memref<1x6x16x16xf32, #tpu.memory_space<vmem>>, vector<1x6x1x16xf32>
    %21 = vector.shape_cast %20 : vector<1x6x1x16xf32> to vector<6x16xf32>
    %22 = vector.shape_cast %19 : vector<6x16xf32> to vector<1x6x1x16xf32>
    tpu.vector_store %arg4[%c0_5, %c0_6, %c0_7, %c0_8], %22 {strides = array<i32>} : memref<1x6x16x16xf32, #tpu.memory_space<vmem>>, vector<1x6x1x16xf32>,
    %23 = vector.extract_strided_slice %1 {offsets = [0, 1, 0], sizes = [4, 1, 18], strides = [1, 1, 1]} : vector<4x18x18xbf16> to vector<4x1x18xbf16>
    %24 = vector.shape_cast %23 : vector<4x1x18xbf16> to vector<4x18xbf16>
    %25 = vector.extract_strided_slice %24 {offsets = [0, 0], sizes = [4, 16], strides = [1, 1]} : vector<4x18xbf16> to vector<4x16xbf16>
    %26 = vector.extract_strided_slice %24 {offsets = [0, 1], sizes = [4, 16], strides = [1, 1]} : vector<4x18xbf16> to vector<4x16xbf16>
    %27 = vector.extract_strided_slice %24 {offsets = [0, 2], sizes = [4, 16], strides = [1, 1]} : vector<4x18xbf16> to vector<4x16xbf16>
    %28 = vector.extract_strided_slice %1 {offsets = [0, 2, 0], sizes = [4, 1, 18], strides = [1, 1, 1]} : vector<4x18x18xbf16> to vector<4x1x18xbf16>
    %29 = vector.shape_cast %28 : vector<4x1x18xbf16> to vector<4x18xbf16>
    %30 = vector.extract_strided_slice %29 {offsets = [0, 0], sizes = [4, 16], strides = [1, 1]} : vector<4x18xbf16> to vector<4x16xbf16>
    %31 = vector.extract_strided_slice %29 {offsets = [0, 1], sizes = [4, 16], strides = [1, 1]} : vector<4x18xbf16> to vector<4x16xbf16>
    %32 = vector.extract_strided_slice %29 {offsets = [0, 2], sizes = [4, 16], strides = [1, 1]} : vector<4x18xbf16> to vector<4x16xbf16>
    %33 = vector.extract_strided_slice %1 {offsets = [0, 3, 0], sizes = [4, 1, 18], strides = [1, 1, 1]} : vector<4x18x18xbf16> to vector<4x1x18xbf16>
    %34 = vector.shape_cast %33 : vector<4x1x18xbf16> to vector<4x18xbf16>
    %35 = vector.extract_strided_slice %34 {offsets = [0, 0], sizes = [4, 16], strides = [1, 1]} : vector<4x18xbf16> to vector<4x16xbf16>
    %36 = vector.extract_strided_slice %34 {offsets = [0, 1], sizes = [4, 16], strides = [1, 1]} : vector<4x18xbf16> to vector<4x16xbf16>
    %37 = vector.extract_strided_slice %34 {offsets = [0, 2], sizes = [4, 16], strides = [1, 1]} : vector<4x18xbf16> to vector<4x16xbf16>
    %38 = tpu.concatenate %25, %26, %27, %30, %31, %32, %35, %36, %37 in 0 : vector<4x16xbf16>, vector<4x16xbf16>, vector<4x16xbf16>, vector<4x16xbf16>, vector<4x16xbf16>, vector<4x16xbf16>, vector<4x16xbf16>, vector<4x16xbf16>, vector<4x16xbf16> -> vector<36x16xbf16>
    %cst_9 = arith.constant dense<0.000000e+00> : vector<6x16xf32>
    %39 = tpu.matmul %2, %38, %cst_9 {dimension_numbers = #tpu.dot_dimension_numbers<[1], [0], [0], [1], [0, 0, 1, 1], [], []>} : vector<6x36xbf16>, vector<36x16xbf16>, vector<6x16xf32> -> vector<6x16xf32>
    %c0_10 = arith.constant 0 : index
    %c0_11 = arith.constant 0 : index
    %c1 = arith.constant 1 : index
    %c0_12 = arith.constant 0 : index
    %40 = vector.load %arg4[%c0_10, %c0_11, %c1, %c0_12] : memref<1x6x16x16xf32, #tpu.memory_space<vmem>>, vector<1x6x1x16xf32>
    %41 = vector.shape_cast %40 : vector<1x6x1x16xf32> to vector<6x16xf32>
    %42 = vector.shape_cast %39 : vector<6x16xf32> to vector<1x6x1x16xf32>
    tpu.vector_store %arg4[%c0_10, %c0_11, %c1, %c0_12], %42 {strides = array<i32>} : memref<1x6x16x16xf32, #tpu.memory_space<vmem>>, vector<1x6x1x16xf32>,
    %43 = vector.extract_strided_slice %1 {offsets = [0, 2, 0], sizes = [4, 1, 18], strides = [1, 1, 1]} : vector<4x18x18xbf16> to vector<4x1x18xbf16>
    %44 = vector.shape_cast %43 : vector<4x1x18xbf16> to vector<4x18xbf16>
    %45 = vector.extract_strided_slice %44 {offsets = [0, 0], sizes = [4, 16], strides = [1, 1]} : vector<4x18xbf16> to vector<4x16xbf16>
    %46 = vector.extract_strided_slice %44 {offsets = [0, 1], sizes = [4, 16], strides = [1, 1]} : vector<4x18xbf16> to vector<4x16xbf16>
    %47 = vector.extract_strided_slice %44 {offsets = [0, 2], sizes = [4, 16], strides = [1, 1]} : vector<4x18xbf16> to vector<4x16xbf16>
    %48 = vector.extract_strided_slice %1 {offsets = [0, 3, 0], sizes = [4, 1, 18], strides = [1, 1, 1]} : vector<4x18x18xbf16> to vector<4x1x18xbf16>
    %49 = vector.shape_cast %48 : vector<4x1x18xbf16> to vector<4x18xbf16>
    %50 = vector.extract_strided_slice %49 {offsets = [0, 0], sizes = [4, 16], strides = [1, 1]} : vector<4x18xbf16> to vector<4x16xbf16>
    %51 = vector.extract_strided_slice %49 {offsets = [0, 1], sizes = [4, 16], strides = [1, 1]} : vector<4x18xbf16> to vector<4x16xbf16>
    %52 = vector.extract_strided_slice %49 {offsets = [0, 2], sizes = [4, 16], strides = [1, 1]} : vector<4x18xbf16> to vector<4x16xbf16>
    %53 = vector.extract_strided_slice %1 {offsets = [0, 4, 0], sizes = [4, 1, 18], strides = [1, 1, 1]} : vector<4x18x18xbf16> to vector<4x1x18xbf16>
    %54 = vector.shape_cast %53 : vector<4x1x18xbf16> to vector<4x18xbf16>
    %55 = vector.extract_strided_slice %54 {offsets = [0, 0], sizes = [4, 16], strides = [1, 1]} : vector<4x18xbf16> to vector<4x16xbf16>
    %56 = vector.extract_strided_slice %54 {offsets = [0, 1], sizes = [4, 16], strides = [1, 1]} : vector<4x18xbf16> to vector<4x16xbf16>
    %57 = vector.extract_strided_slice %54 {offsets = [0, 2], sizes = [4, 16], strides = [1, 1]} : vector<4x18xbf16> to vector<4x16xbf16>
    %58 = tpu.concatenate %45, %46, %47, %50, %51, %52, %55, %56, %57 in 0 : vector<4x16xbf16>, vector<4x16xbf16>, vector<4x16xbf16>, vector<4x16xbf16>, vector<4x16xbf16>, vector<4x16xbf16>, vector<4x16xbf16>, vector<4x16xbf16>, vector<4x16xbf16> -> vector<36x16xbf16>
    %cst_13 = arith.constant dense<0.000000e+00> : vector<6x16xf32>
    %59 = tpu.matmul %2, %58, %cst_13 {dimension_numbers = #tpu.dot_dimension_numbers<[1], [0], [0], [1], [0, 0, 1, 1], [], []>} : vector<6x36xbf16>, vector<36x16xbf16>, vector<6x16xf32> -> vector<6x16xf32>
    %c0_14 = arith.constant 0 : index
    %c0_15 = arith.constant 0 : index
    %c2 = arith.constant 2 : index
    %c0_16 = arith.constant 0 : index
    %60 = vector.load %arg4[%c0_14, %c0_15, %c2, %c0_16] : memref<1x6x16x16xf32, #tpu.memory_space<vmem>>, vector<1x6x1x16xf32>
    %61 = vector.shape_cast %60 : vector<1x6x1x16xf32> to vector<6x16xf32>
    %62 = vector.shape_cast %59 : vector<6x16xf32> to vector<1x6x1x16xf32>
    tpu.vector_store %arg4[%c0_14, %c0_15, %c2, %c0_16], %62 {strides = array<i32>} : memref<1x6x16x16xf32, #tpu.memory_space<vmem>>, vector<1x6x1x16xf32>,
    %63 = vector.extract_strided_slice %1 {offsets = [0, 3, 0], sizes = [4, 1, 18], strides = [1, 1, 1]} : vector<4x18x18xbf16> to vector<4x1x18xbf16>
    %64 = vector.shape_cast %63 : vector<4x1x18xbf16> to vector<4x18xbf16>
    %65 = vector.extract_strided_slice %64 {offsets = [0, 0], sizes = [4, 16], strides = [1, 1]} : vector<4x18xbf16> to vector<4x16xbf16>
    %66 = vector.extract_strided_slice %64 {offsets = [0, 1], sizes = [4, 16], strides = [1, 1]} : vector<4x18xbf16> to vector<4x16xbf16>
    %67 = vector.extract_strided_slice %64 {offsets = [0, 2], sizes = [4, 16], strides = [1, 1]} : vector<4x18xbf16> to vector<4x16xbf16>
    %68 = vector.extract_strided_slice %1 {offsets = [0, 4, 0], sizes = [4, 1, 18], strides = [1, 1, 1]} : vector<4x18x18xbf16> to vector<4x1x18xbf16>
    %69 = vector.shape_cast %68 : vector<4x1x18xbf16> to vector<4x18xbf16>
    %70 = vector.extract_strided_slice %69 {offsets = [0, 0], sizes = [4, 16], strides = [1, 1]} : vector<4x18xbf16> to vector<4x16xbf16>
    %71 = vector.extract_strided_slice %69 {offsets = [0, 1], sizes = [4, 16], strides = [1, 1]} : vector<4x18xbf16> to vector<4x16xbf16>
    %72 = vector.extract_strided_slice %69 {offsets = [0, 2], sizes = [4, 16], strides = [1, 1]} : vector<4x18xbf16> to vector<4x16xbf16>
    %73 = vector.extract_strided_slice %1 {offsets = [0, 5, 0], sizes = [4, 1, 18], strides = [1, 1, 1]} : vector<4x18x18xbf16> to vector<4x1x18xbf16>
    %74 = vector.shape_cast %73 : vector<4x1x18xbf16> to vector<4x18xbf16>
    %75 = vector.extract_strided_slice %74 {offsets = [0, 0], sizes = [4, 16], strides = [1, 1]} : vector<4x18xbf16> to vector<4x16xbf16>
    %76 = vector.extract_strided_slice %74 {offsets = [0, 1], sizes = [4, 16], strides = [1, 1]} : vector<4x18xbf16> to vector<4x16xbf16>
    %77 = vector.extract_strided_slice %74 {offsets = [0, 2], sizes = [4, 16], strides = [1, 1]} : vector<4x18xbf16> to vector<4x16xbf16>
    %78 = tpu.concatenate %65, %66, %67, %70, %71, %72, %75, %76, %77 in 0 : vector<4x16xbf16>, vector<4x16xbf16>, vector<4x16xbf16>, vector<4x16xbf16>, vector<4x16xbf16>, vector<4x16xbf16>, vector<4x16xbf16>, vector<4x16xbf16>, vector<4x16xbf16> -> vector<36x16xbf16>
    %cst_17 = arith.constant dense<0.000000e+00> : vector<6x16xf32>
    %79 = tpu.matmul %2, %78, %cst_17 {dimension_numbers = #tpu.dot_dimension_numbers<[1], [0], [0], [1], [0, 0, 1, 1], [], []>} : vector<6x36xbf16>, vector<36x16xbf16>, vector<6x16xf32> -> vector<6x16xf32>
    %c0_18 = arith.constant 0 : index
    %c0_19 = arith.constant 0 : index
    %c3 = arith.constant 3 : index
    %c0_20 = arith.constant 0 : index
    %80 = vector.load %arg4[%c0_18, %c0_19, %c3, %c0_20] : memref<1x6x16x16xf32, #tpu.memory_space<vmem>>, vector<1x6x1x16xf32>
    %81 = vector.shape_cast %80 : vector<1x6x1x16xf32> to vector<6x16xf32>
    %82 = vector.shape_cast %79 : vector<6x16xf32> to vector<1x6x1x16xf32>
    tpu.vector_store %arg4[%c0_18, %c0_19, %c3, %c0_20], %82 {strides = array<i32>} : memref<1x6x16x16xf32, #tpu.memory_space<vmem>>, vector<1x6x1x16xf32>,
    %83 = vector.extract_strided_slice %1 {offsets = [0, 4, 0], sizes = [4, 1, 18], strides = [1, 1, 1]} : vector<4x18x18xbf16> to vector<4x1x18xbf16>
    %84 = vector.shape_cast %83 : vector<4x1x18xbf16> to vector<4x18xbf16>
    %85 = vector.extract_strided_slice %84 {offsets = [0, 0], sizes = [4, 16], strides = [1, 1]} : vector<4x18xbf16> to vector<4x16xbf16>
    %86 = vector.extract_strided_slice %84 {offsets = [0, 1], sizes = [4, 16], strides = [1, 1]} : vector<4x18xbf16> to vector<4x16xbf16>
    %87 = vector.extract_strided_slice %84 {offsets = [0, 2], sizes = [4, 16], strides = [1, 1]} : vector<4x18xbf16> to vector<4x16xbf16>
    %88 = vector.extract_strided_slice %1 {offsets = [0, 5, 0], sizes = [4, 1, 18], strides = [1, 1, 1]} : vector<4x18x18xbf16> to vector<4x1x18xbf16>
    %89 = vector.shape_cast %88 : vector<4x1x18xbf16> to vector<4x18xbf16>
    %90 = vector.extract_strided_slice %89 {offsets = [0, 0], sizes = [4, 16], strides = [1, 1]} : vector<4x18xbf16> to vector<4x16xbf16>
    %91 = vector.extract_strided_slice %89 {offsets = [0, 1], sizes = [4, 16], strides = [1, 1]} : vector<4x18xbf16> to vector<4x16xbf16>
    %92 = vector.extract_strided_slice %89 {offsets = [0, 2], sizes = [4, 16], strides = [1, 1]} : vector<4x18xbf16> to vector<4x16xbf16>
    %93 = vector.extract_strided_slice %1 {offsets = [0, 6, 0], sizes = [4, 1, 18], strides = [1, 1, 1]} : vector<4x18x18xbf16> to vector<4x1x18xbf16>
    %94 = vector.shape_cast %93 : vector<4x1x18xbf16> to vector<4x18xbf16>
    %95 = vector.extract_strided_slice %94 {offsets = [0, 0], sizes = [4, 16], strides = [1, 1]} : vector<4x18xbf16> to vector<4x16xbf16>
    %96 = vector.extract_strided_slice %94 {offsets = [0, 1], sizes = [4, 16], strides = [1, 1]} : vector<4x18xbf16> to vector<4x16xbf16>
    %97 = vector.extract_strided_slice %94 {offsets = [0, 2], sizes = [4, 16], strides = [1, 1]} : vector<4x18xbf16> to vector<4x16xbf16>
    %98 = tpu.concatenate %85, %86, %87, %90, %91, %92, %95, %96, %97 in 0 : vector<4x16xbf16>, vector<4x16xbf16>, vector<4x16xbf16>, vector<4x16xbf16>, vector<4x16xbf16>, vector<4x16xbf16>, vector<4x16xbf16>, vector<4x16xbf16>, vector<4x16xbf16> -> vector<36x16xbf16>
    %cst_21 = arith.constant dense<0.000000e+00> : vector<6x16xf32>
    %99 = tpu.matmul %2, %98, %cst_21 {dimension_numbers = #tpu.dot_dimension_numbers<[1], [0], [0], [1], [0, 0, 1, 1], [], []>} : vector<6x36xbf16>, vector<36x16xbf16>, vector<6x16xf32> -> vector<6x16xf32>
    %c0_22 = arith.constant 0 : index
    %c0_23 = arith.constant 0 : index
    %c4 = arith.constant 4 : index
    %c0_24 = arith.constant 0 : index
    %100 = vector.load %arg4[%c0_22, %c0_23, %c4, %c0_24] : memref<1x6x16x16xf32, #tpu.memory_space<vmem>>, vector<1x6x1x16xf32>
    %101 = vector.shape_cast %100 : vector<1x6x1x16xf32> to vector<6x16xf32>
    %102 = vector.shape_cast %99 : vector<6x16xf32> to vector<1x6x1x16xf32>
    tpu.vector_store %arg4[%c0_22, %c0_23, %c4, %c0_24], %102 {strides = array<i32>} : memref<1x6x16x16xf32, #tpu.memory_space<vmem>>, vector<1x6x1x16xf32>,
    %103 = vector.extract_strided_slice %1 {offsets = [0, 5, 0], sizes = [4, 1, 18], strides = [1, 1, 1]} : vector<4x18x18xbf16> to vector<4x1x18xbf16>
    %104 = vector.shape_cast %103 : vector<4x1x18xbf16> to vector<4x18xbf16>
    %105 = vector.extract_strided_slice %104 {offsets = [0, 0], sizes = [4, 16], strides = [1, 1]} : vector<4x18xbf16> to vector<4x16xbf16>
    %106 = vector.extract_strided_slice %104 {offsets = [0, 1], sizes = [4, 16], strides = [1, 1]} : vector<4x18xbf16> to vector<4x16xbf16>
    %107 = vector.extract_strided_slice %104 {offsets = [0, 2], sizes = [4, 16], strides = [1, 1]} : vector<4x18xbf16> to vector<4x16xbf16>
    %108 = vector.extract_strided_slice %1 {offsets = [0, 6, 0], sizes = [4, 1, 18], strides = [1, 1, 1]} : vector<4x18x18xbf16> to vector<4x1x18xbf16>
    %109 = vector.shape_cast %108 : vector<4x1x18xbf16> to vector<4x18xbf16>
    %110 = vector.extract_strided_slice %109 {offsets = [0, 0], sizes = [4, 16], strides = [1, 1]} : vector<4x18xbf16> to vector<4x16xbf16>
    %111 = vector.extract_strided_slice %109 {offsets = [0, 1], sizes = [4, 16], strides = [1, 1]} : vector<4x18xbf16> to vector<4x16xbf16>
    %112 = vector.extract_strided_slice %109 {offsets = [0, 2], sizes = [4, 16], strides = [1, 1]} : vector<4x18xbf16> to vector<4x16xbf16>
    %113 = vector.extract_strided_slice %1 {offsets = [0, 7, 0], sizes = [4, 1, 18], strides = [1, 1, 1]} : vector<4x18x18xbf16> to vector<4x1x18xbf16>
    %114 = vector.shape_cast %113 : vector<4x1x18xbf16> to vector<4x18xbf16>
    %115 = vector.extract_strided_slice %114 {offsets = [0, 0], sizes = [4, 16], strides = [1, 1]} : vector<4x18xbf16> to vector<4x16xbf16>
    %116 = vector.extract_strided_slice %114 {offsets = [0, 1], sizes = [4, 16], strides = [1, 1]} : vector<4x18xbf16> to vector<4x16xbf16>
    %117 = vector.extract_strided_slice %114 {offsets = [0, 2], sizes = [4, 16], strides = [1, 1]} : vector<4x18xbf16> to vector<4x16xbf16>
    %118 = tpu.concatenate %105, %106, %107, %110, %111, %112, %115, %116, %117 in 0 : vector<4x16xbf16>, vector<4x16xbf16>, vector<4x16xbf16>, vector<4x16xbf16>, vector<4x16xbf16>, vector<4x16xbf16>, vector<4x16xbf16>, vector<4x16xbf16>, vector<4x16xbf16> -> vector<36x16xbf16>
    %cst_25 = arith.constant dense<0.000000e+00> : vector<6x16xf32>
    %119 = tpu.matmul %2, %118, %cst_25 {dimension_numbers = #tpu.dot_dimension_numbers<[1], [0], [0], [1], [0, 0, 1, 1], [], []>} : vector<6x36xbf16>, vector<36x16xbf16>, vector<6x16xf32> -> vector<6x16xf32>
    %c0_26 = arith.constant 0 : index
    %c0_27 = arith.constant 0 : index
    %c5 = arith.constant 5 : index
    %c0_28 = arith.constant 0 : index
    %120 = vector.load %arg4[%c0_26, %c0_27, %c5, %c0_28] : memref<1x6x16x16xf32, #tpu.memory_space<vmem>>, vector<1x6x1x16xf32>
    %121 = vector.shape_cast %120 : vector<1x6x1x16xf32> to vector<6x16xf32>
    %122 = vector.shape_cast %119 : vector<6x16xf32> to vector<1x6x1x16xf32>
    tpu.vector_store %arg4[%c0_26, %c0_27, %c5, %c0_28], %122 {strides = array<i32>} : memref<1x6x16x16xf32, #tpu.memory_space<vmem>>, vector<1x6x1x16xf32>,
    %123 = vector.extract_strided_slice %1 {offsets = [0, 6, 0], sizes = [4, 1, 18], strides = [1, 1, 1]} : vector<4x18x18xbf16> to vector<4x1x18xbf16>
    %124 = vector.shape_cast %123 : vector<4x1x18xbf16> to vector<4x18xbf16>
    %125 = vector.extract_strided_slice %124 {offsets = [0, 0], sizes = [4, 16], strides = [1, 1]} : vector<4x18xbf16> to vector<4x16xbf16>
    %126 = vector.extract_strided_slice %124 {offsets = [0, 1], sizes = [4, 16], strides = [1, 1]} : vector<4x18xbf16> to vector<4x16xbf16>
    %127 = vector.extract_strided_slice %124 {offsets = [0, 2], sizes = [4, 16], strides = [1, 1]} : vector<4x18xbf16> to vector<4x16xbf16>
    %128 = vector.extract_strided_slice %1 {offsets = [0, 7, 0], sizes = [4, 1, 18], strides = [1, 1, 1]} : vector<4x18x18xbf16> to vector<4x1x18xbf16>
    %129 = vector.shape_cast %128 : vector<4x1x18xbf16> to vector<4x18xbf16>
    %130 = vector.extract_strided_slice %129 {offsets = [0, 0], sizes = [4, 16], strides = [1, 1]} : vector<4x18xbf16> to vector<4x16xbf16>
    %131 = vector.extract_strided_slice %129 {offsets = [0, 1], sizes = [4, 16], strides = [1, 1]} : vector<4x18xbf16> to vector<4x16xbf16>
    %132 = vector.extract_strided_slice %129 {offsets = [0, 2], sizes = [4, 16], strides = [1, 1]} : vector<4x18xbf16> to vector<4x16xbf16>
    %133 = vector.extract_strided_slice %1 {offsets = [0, 8, 0], sizes = [4, 1, 18], strides = [1, 1, 1]} : vector<4x18x18xbf16> to vector<4x1x18xbf16>
    %134 = vector.shape_cast %133 : vector<4x1x18xbf16> to vector<4x18xbf16>
    %135 = vector.extract_strided_slice %134 {offsets = [0, 0], sizes = [4, 16], strides = [1, 1]} : vector<4x18xbf16> to vector<4x16xbf16>
    %136 = vector.extract_strided_slice %134 {offsets = [0, 1], sizes = [4, 16], strides = [1, 1]} : vector<4x18xbf16> to vector<4x16xbf16>
    %137 = vector.extract_strided_slice %134 {offsets = [0, 2], sizes = [4, 16], strides = [1, 1]} : vector<4x18xbf16> to vector<4x16xbf16>
    %138 = tpu.concatenate %125, %126, %127, %130, %131, %132, %135, %136, %137 in 0 : vector<4x16xbf16>, vector<4x16xbf16>, vector<4x16xbf16>, vector<4x16xbf16>, vector<4x16xbf16>, vector<4x16xbf16>, vector<4x16xbf16>, vector<4x16xbf16>, vector<4x16xbf16> -> vector<36x16xbf16>
    %cst_29 = arith.constant dense<0.000000e+00> : vector<6x16xf32>
    %139 = tpu.matmul %2, %138, %cst_29 {dimension_numbers = #tpu.dot_dimension_numbers<[1], [0], [0], [1], [0, 0, 1, 1], [], []>} : vector<6x36xbf16>, vector<36x16xbf16>, vector<6x16xf32> -> vector<6x16xf32>
    %c0_30 = arith.constant 0 : index
    %c0_31 = arith.constant 0 : index
    %c6 = arith.constant 6 : index
    %c0_32 = arith.constant 0 : index
    %140 = vector.load %arg4[%c0_30, %c0_31, %c6, %c0_32] : memref<1x6x16x16xf32, #tpu.memory_space<vmem>>, vector<1x6x1x16xf32>
    %141 = vector.shape_cast %140 : vector<1x6x1x16xf32> to vector<6x16xf32>
    %142 = vector.shape_cast %139 : vector<6x16xf32> to vector<1x6x1x16xf32>
    tpu.vector_store %arg4[%c0_30, %c0_31, %c6, %c0_32], %142 {strides = array<i32>} : memref<1x6x16x16xf32, #tpu.memory_space<vmem>>, vector<1x6x1x16xf32>,
    %143 = vector.extract_strided_slice %1 {offsets = [0, 7, 0], sizes = [4, 1, 18], strides = [1, 1, 1]} : vector<4x18x18xbf16> to vector<4x1x18xbf16>
    %144 = vector.shape_cast %143 : vector<4x1x18xbf16> to vector<4x18xbf16>
    %145 = vector.extract_strided_slice %144 {offsets = [0, 0], sizes = [4, 16], strides = [1, 1]} : vector<4x18xbf16> to vector<4x16xbf16>
    %146 = vector.extract_strided_slice %144 {offsets = [0, 1], sizes = [4, 16], strides = [1, 1]} : vector<4x18xbf16> to vector<4x16xbf16>
    %147 = vector.extract_strided_slice %144 {offsets = [0, 2], sizes = [4, 16], strides = [1, 1]} : vector<4x18xbf16> to vector<4x16xbf16>
    %148 = vector.extract_strided_slice %1 {offsets = [0, 8, 0], sizes = [4, 1, 18], strides = [1, 1, 1]} : vector<4x18x18xbf16> to vector<4x1x18xbf16>
    %149 = vector.shape_cast %148 : vector<4x1x18xbf16> to vector<4x18xbf16>
    %150 = vector.extract_strided_slice %149 {offsets = [0, 0], sizes = [4, 16], strides = [1, 1]} : vector<4x18xbf16> to vector<4x16xbf16>
    %151 = vector.extract_strided_slice %149 {offsets = [0, 1], sizes = [4, 16], strides = [1, 1]} : vector<4x18xbf16> to vector<4x16xbf16>
    %152 = vector.extract_strided_slice %149 {offsets = [0, 2], sizes = [4, 16], strides = [1, 1]} : vector<4x18xbf16> to vector<4x16xbf16>
    %153 = vector.extract_strided_slice %1 {offsets = [0, 9, 0], sizes = [4, 1, 18], strides = [1, 1, 1]} : vector<4x18x18xbf16> to vector<4x1x18xbf16>
    %154 = vector.shape_cast %153 : vector<4x1x18xbf16> to vector<4x18xbf16>
    %155 = vector.extract_strided_slice %154 {offsets = [0, 0], sizes = [4, 16], strides = [1, 1]} : vector<4x18xbf16> to vector<4x16xbf16>
    %156 = vector.extract_strided_slice %154 {offsets = [0, 1], sizes = [4, 16], strides = [1, 1]} : vector<4x18xbf16> to vector<4x16xbf16>
    %157 = vector.extract_strided_slice %154 {offsets = [0, 2], sizes = [4, 16], strides = [1, 1]} : vector<4x18xbf16> to vector<4x16xbf16>
    %158 = tpu.concatenate %145, %146, %147, %150, %151, %152, %155, %156, %157 in 0 : vector<4x16xbf16>, vector<4x16xbf16>, vector<4x16xbf16>, vector<4x16xbf16>, vector<4x16xbf16>, vector<4x16xbf16>, vector<4x16xbf16>, vector<4x16xbf16>, vector<4x16xbf16> -> vector<36x16xbf16>
    %cst_33 = arith.constant dense<0.000000e+00> : vector<6x16xf32>
    %159 = tpu.matmul %2, %158, %cst_33 {dimension_numbers = #tpu.dot_dimension_numbers<[1], [0], [0], [1], [0, 0, 1, 1], [], []>} : vector<6x36xbf16>, vector<36x16xbf16>, vector<6x16xf32> -> vector<6x16xf32>
    %c0_34 = arith.constant 0 : index
    %c0_35 = arith.constant 0 : index
    %c7 = arith.constant 7 : index
    %c0_36 = arith.constant 0 : index
    %160 = vector.load %arg4[%c0_34, %c0_35, %c7, %c0_36] : memref<1x6x16x16xf32, #tpu.memory_space<vmem>>, vector<1x6x1x16xf32>
    %161 = vector.shape_cast %160 : vector<1x6x1x16xf32> to vector<6x16xf32>
    %162 = vector.shape_cast %159 : vector<6x16xf32> to vector<1x6x1x16xf32>
    tpu.vector_store %arg4[%c0_34, %c0_35, %c7, %c0_36], %162 {strides = array<i32>} : memref<1x6x16x16xf32, #tpu.memory_space<vmem>>, vector<1x6x1x16xf32>,
    %163 = vector.extract_strided_slice %1 {offsets = [0, 8, 0], sizes = [4, 1, 18], strides = [1, 1, 1]} : vector<4x18x18xbf16> to vector<4x1x18xbf16>
    %164 = vector.shape_cast %163 : vector<4x1x18xbf16> to vector<4x18xbf16>
    %165 = vector.extract_strided_slice %164 {offsets = [0, 0], sizes = [4, 16], strides = [1, 1]} : vector<4x18xbf16> to vector<4x16xbf16>
    %166 = vector.extract_strided_slice %164 {offsets = [0, 1], sizes = [4, 16], strides = [1, 1]} : vector<4x18xbf16> to vector<4x16xbf16>
    %167 = vector.extract_strided_slice %164 {offsets = [0, 2], sizes = [4, 16], strides = [1, 1]} : vector<4x18xbf16> to vector<4x16xbf16>
    %168 = vector.extract_strided_slice %1 {offsets = [0, 9, 0], sizes = [4, 1, 18], strides = [1, 1, 1]} : vector<4x18x18xbf16> to vector<4x1x18xbf16>
    %169 = vector.shape_cast %168 : vector<4x1x18xbf16> to vector<4x18xbf16>
    %170 = vector.extract_strided_slice %169 {offsets = [0, 0], sizes = [4, 16], strides = [1, 1]} : vector<4x18xbf16> to vector<4x16xbf16>
    %171 = vector.extract_strided_slice %169 {offsets = [0, 1], sizes = [4, 16], strides = [1, 1]} : vector<4x18xbf16> to vector<4x16xbf16>
    %172 = vector.extract_strided_slice %169 {offsets = [0, 2], sizes = [4, 16], strides = [1, 1]} : vector<4x18xbf16> to vector<4x16xbf16>
    %173 = vector.extract_strided_slice %1 {offsets = [0, 10, 0], sizes = [4, 1, 18], strides = [1, 1, 1]} : vector<4x18x18xbf16> to vector<4x1x18xbf16>
    %174 = vector.shape_cast %173 : vector<4x1x18xbf16> to vector<4x18xbf16>
    %175 = vector.extract_strided_slice %174 {offsets = [0, 0], sizes = [4, 16], strides = [1, 1]} : vector<4x18xbf16> to vector<4x16xbf16>
    %176 = vector.extract_strided_slice %174 {offsets = [0, 1], sizes = [4, 16], strides = [1, 1]} : vector<4x18xbf16> to vector<4x16xbf16>
    %177 = vector.extract_strided_slice %174 {offsets = [0, 2], sizes = [4, 16], strides = [1, 1]} : vector<4x18xbf16> to vector<4x16xbf16>
    %178 = tpu.concatenate %165, %166, %167, %170, %171, %172, %175, %176, %177 in 0 : vector<4x16xbf16>, vector<4x16xbf16>, vector<4x16xbf16>, vector<4x16xbf16>, vector<4x16xbf16>, vector<4x16xbf16>, vector<4x16xbf16>, vector<4x16xbf16>, vector<4x16xbf16> -> vector<36x16xbf16>
    %cst_37 = arith.constant dense<0.000000e+00> : vector<6x16xf32>
    %179 = tpu.matmul %2, %178, %cst_37 {dimension_numbers = #tpu.dot_dimension_numbers<[1], [0], [0], [1], [0, 0, 1, 1], [], []>} : vector<6x36xbf16>, vector<36x16xbf16>, vector<6x16xf32> -> vector<6x16xf32>
    %c0_38 = arith.constant 0 : index
    %c0_39 = arith.constant 0 : index
    %c8 = arith.constant 8 : index
    %c0_40 = arith.constant 0 : index
    %180 = vector.load %arg4[%c0_38, %c0_39, %c8, %c0_40] : memref<1x6x16x16xf32, #tpu.memory_space<vmem>>, vector<1x6x1x16xf32>
    %181 = vector.shape_cast %180 : vector<1x6x1x16xf32> to vector<6x16xf32>
    %182 = vector.shape_cast %179 : vector<6x16xf32> to vector<1x6x1x16xf32>
    tpu.vector_store %arg4[%c0_38, %c0_39, %c8, %c0_40], %182 {strides = array<i32>} : memref<1x6x16x16xf32, #tpu.memory_space<vmem>>, vector<1x6x1x16xf32>,
    %183 = vector.extract_strided_slice %1 {offsets = [0, 9, 0], sizes = [4, 1, 18], strides = [1, 1, 1]} : vector<4x18x18xbf16> to vector<4x1x18xbf16>
    %184 = vector.shape_cast %183 : vector<4x1x18xbf16> to vector<4x18xbf16>
    %185 = vector.extract_strided_slice %184 {offsets = [0, 0], sizes = [4, 16], strides = [1, 1]} : vector<4x18xbf16> to vector<4x16xbf16>
    %186 = vector.extract_strided_slice %184 {offsets = [0, 1], sizes = [4, 16], strides = [1, 1]} : vector<4x18xbf16> to vector<4x16xbf16>
    %187 = vector.extract_strided_slice %184 {offsets = [0, 2], sizes = [4, 16], strides = [1, 1]} : vector<4x18xbf16> to vector<4x16xbf16>
    %188 = vector.extract_strided_slice %1 {offsets = [0, 10, 0], sizes = [4, 1, 18], strides = [1, 1, 1]} : vector<4x18x18xbf16> to vector<4x1x18xbf16>
    %189 = vector.shape_cast %188 : vector<4x1x18xbf16> to vector<4x18xbf16>
    %190 = vector.extract_strided_slice %189 {offsets = [0, 0], sizes = [4, 16], strides = [1, 1]} : vector<4x18xbf16> to vector<4x16xbf16>
    %191 = vector.extract_strided_slice %189 {offsets = [0, 1], sizes = [4, 16], strides = [1, 1]} : vector<4x18xbf16> to vector<4x16xbf16>
    %192 = vector.extract_strided_slice %189 {offsets = [0, 2], sizes = [4, 16], strides = [1, 1]} : vector<4x18xbf16> to vector<4x16xbf16>
    %193 = vector.extract_strided_slice %1 {offsets = [0, 11, 0], sizes = [4, 1, 18], strides = [1, 1, 1]} : vector<4x18x18xbf16> to vector<4x1x18xbf16>
    %194 = vector.shape_cast %193 : vector<4x1x18xbf16> to vector<4x18xbf16>
    %195 = vector.extract_strided_slice %194 {offsets = [0, 0], sizes = [4, 16], strides = [1, 1]} : vector<4x18xbf16> to vector<4x16xbf16>
    %196 = vector.extract_strided_slice %194 {offsets = [0, 1], sizes = [4, 16], strides = [1, 1]} : vector<4x18xbf16> to vector<4x16xbf16>
    %197 = vector.extract_strided_slice %194 {offsets = [0, 2], sizes = [4, 16], strides = [1, 1]} : vector<4x18xbf16> to vector<4x16xbf16>
    %198 = tpu.concatenate %185, %186, %187, %190, %191, %192, %195, %196, %197 in 0 : vector<4x16xbf16>, vector<4x16xbf16>, vector<4x16xbf16>, vector<4x16xbf16>, vector<4x16xbf16>, vector<4x16xbf16>, vector<4x16xbf16>, vector<4x16xbf16>, vector<4x16xbf16> -> vector<36x16xbf16>
    %cst_41 = arith.constant dense<0.000000e+00> : vector<6x16xf32>
    %199 = tpu.matmul %2, %198, %cst_41 {dimension_numbers = #tpu.dot_dimension_numbers<[1], [0], [0], [1], [0, 0, 1, 1], [], []>} : vector<6x36xbf16>, vector<36x16xbf16>, vector<6x16xf32> -> vector<6x16xf32>
    %c0_42 = arith.constant 0 : index
    %c0_43 = arith.constant 0 : index
    %c9 = arith.constant 9 : index
    %c0_44 = arith.constant 0 : index
    %200 = vector.load %arg4[%c0_42, %c0_43, %c9, %c0_44] : memref<1x6x16x16xf32, #tpu.memory_space<vmem>>, vector<1x6x1x16xf32>
    %201 = vector.shape_cast %200 : vector<1x6x1x16xf32> to vector<6x16xf32>
    %202 = vector.shape_cast %199 : vector<6x16xf32> to vector<1x6x1x16xf32>
    tpu.vector_store %arg4[%c0_42, %c0_43, %c9, %c0_44], %202 {strides = array<i32>} : memref<1x6x16x16xf32, #tpu.memory_space<vmem>>, vector<1x6x1x16xf32>,
    %203 = vector.extract_strided_slice %1 {offsets = [0, 10, 0], sizes = [4, 1, 18], strides = [1, 1, 1]} : vector<4x18x18xbf16> to vector<4x1x18xbf16>
    %204 = vector.shape_cast %203 : vector<4x1x18xbf16> to vector<4x18xbf16>
    %205 = vector.extract_strided_slice %204 {offsets = [0, 0], sizes = [4, 16], strides = [1, 1]} : vector<4x18xbf16> to vector<4x16xbf16>
    %206 = vector.extract_strided_slice %204 {offsets = [0, 1], sizes = [4, 16], strides = [1, 1]} : vector<4x18xbf16> to vector<4x16xbf16>
    %207 = vector.extract_strided_slice %204 {offsets = [0, 2], sizes = [4, 16], strides = [1, 1]} : vector<4x18xbf16> to vector<4x16xbf16>
    %208 = vector.extract_strided_slice %1 {offsets = [0, 11, 0], sizes = [4, 1, 18], strides = [1, 1, 1]} : vector<4x18x18xbf16> to vector<4x1x18xbf16>
    %209 = vector.shape_cast %208 : vector<4x1x18xbf16> to vector<4x18xbf16>
    %210 = vector.extract_strided_slice %209 {offsets = [0, 0], sizes = [4, 16], strides = [1, 1]} : vector<4x18xbf16> to vector<4x16xbf16>
    %211 = vector.extract_strided_slice %209 {offsets = [0, 1], sizes = [4, 16], strides = [1, 1]} : vector<4x18xbf16> to vector<4x16xbf16>
    %212 = vector.extract_strided_slice %209 {offsets = [0, 2], sizes = [4, 16], strides = [1, 1]} : vector<4x18xbf16> to vector<4x16xbf16>
    %213 = vector.extract_strided_slice %1 {offsets = [0, 12, 0], sizes = [4, 1, 18], strides = [1, 1, 1]} : vector<4x18x18xbf16> to vector<4x1x18xbf16>
    %214 = vector.shape_cast %213 : vector<4x1x18xbf16> to vector<4x18xbf16>
    %215 = vector.extract_strided_slice %214 {offsets = [0, 0], sizes = [4, 16], strides = [1, 1]} : vector<4x18xbf16> to vector<4x16xbf16>
    %216 = vector.extract_strided_slice %214 {offsets = [0, 1], sizes = [4, 16], strides = [1, 1]} : vector<4x18xbf16> to vector<4x16xbf16>
    %217 = vector.extract_strided_slice %214 {offsets = [0, 2], sizes = [4, 16], strides = [1, 1]} : vector<4x18xbf16> to vector<4x16xbf16>
    %218 = tpu.concatenate %205, %206, %207, %210, %211, %212, %215, %216, %217 in 0 : vector<4x16xbf16>, vector<4x16xbf16>, vector<4x16xbf16>, vector<4x16xbf16>, vector<4x16xbf16>, vector<4x16xbf16>, vector<4x16xbf16>, vector<4x16xbf16>, vector<4x16xbf16> -> vector<36x16xbf16>
    %cst_45 = arith.constant dense<0.000000e+00> : vector<6x16xf32>
    %219 = tpu.matmul %2, %218, %cst_45 {dimension_numbers = #tpu.dot_dimension_numbers<[1], [0], [0], [1], [0, 0, 1, 1], [], []>} : vector<6x36xbf16>, vector<36x16xbf16>, vector<6x16xf32> -> vector<6x16xf32>
    %c0_46 = arith.constant 0 : index
    %c0_47 = arith.constant 0 : index
    %c10 = arith.constant 10 : index
    %c0_48 = arith.constant 0 : index
    %220 = vector.load %arg4[%c0_46, %c0_47, %c10, %c0_48] : memref<1x6x16x16xf32, #tpu.memory_space<vmem>>, vector<1x6x1x16xf32>
    %221 = vector.shape_cast %220 : vector<1x6x1x16xf32> to vector<6x16xf32>
    %222 = vector.shape_cast %219 : vector<6x16xf32> to vector<1x6x1x16xf32>
    tpu.vector_store %arg4[%c0_46, %c0_47, %c10, %c0_48], %222 {strides = array<i32>} : memref<1x6x16x16xf32, #tpu.memory_space<vmem>>, vector<1x6x1x16xf32>,
    %223 = vector.extract_strided_slice %1 {offsets = [0, 11, 0], sizes = [4, 1, 18], strides = [1, 1, 1]} : vector<4x18x18xbf16> to vector<4x1x18xbf16>
    %224 = vector.shape_cast %223 : vector<4x1x18xbf16> to vector<4x18xbf16>
    %225 = vector.extract_strided_slice %224 {offsets = [0, 0], sizes = [4, 16], strides = [1, 1]} : vector<4x18xbf16> to vector<4x16xbf16>
    %226 = vector.extract_strided_slice %224 {offsets = [0, 1], sizes = [4, 16], strides = [1, 1]} : vector<4x18xbf16> to vector<4x16xbf16>
    %227 = vector.extract_strided_slice %224 {offsets = [0, 2], sizes = [4, 16], strides = [1, 1]} : vector<4x18xbf16> to vector<4x16xbf16>
    %228 = vector.extract_strided_slice %1 {offsets = [0, 12, 0], sizes = [4, 1, 18], strides = [1, 1, 1]} : vector<4x18x18xbf16> to vector<4x1x18xbf16>
    %229 = vector.shape_cast %228 : vector<4x1x18xbf16> to vector<4x18xbf16>
    %230 = vector.extract_strided_slice %229 {offsets = [0, 0], sizes = [4, 16], strides = [1, 1]} : vector<4x18xbf16> to vector<4x16xbf16>
    %231 = vector.extract_strided_slice %229 {offsets = [0, 1], sizes = [4, 16], strides = [1, 1]} : vector<4x18xbf16> to vector<4x16xbf16>
    %232 = vector.extract_strided_slice %229 {offsets = [0, 2], sizes = [4, 16], strides = [1, 1]} : vector<4x18xbf16> to vector<4x16xbf16>
    %233 = vector.extract_strided_slice %1 {offsets = [0, 13, 0], sizes = [4, 1, 18], strides = [1, 1, 1]} : vector<4x18x18xbf16> to vector<4x1x18xbf16>
    %234 = vector.shape_cast %233 : vector<4x1x18xbf16> to vector<4x18xbf16>
    %235 = vector.extract_strided_slice %234 {offsets = [0, 0], sizes = [4, 16], strides = [1, 1]} : vector<4x18xbf16> to vector<4x16xbf16>
    %236 = vector.extract_strided_slice %234 {offsets = [0, 1], sizes = [4, 16], strides = [1, 1]} : vector<4x18xbf16> to vector<4x16xbf16>
    %237 = vector.extract_strided_slice %234 {offsets = [0, 2], sizes = [4, 16], strides = [1, 1]} : vector<4x18xbf16> to vector<4x16xbf16>
    %238 = tpu.concatenate %225, %226, %227, %230, %231, %232, %235, %236, %237 in 0 : vector<4x16xbf16>, vector<4x16xbf16>, vector<4x16xbf16>, vector<4x16xbf16>, vector<4x16xbf16>, vector<4x16xbf16>, vector<4x16xbf16>, vector<4x16xbf16>, vector<4x16xbf16> -> vector<36x16xbf16>
    %cst_49 = arith.constant dense<0.000000e+00> : vector<6x16xf32>
    %239 = tpu.matmul %2, %238, %cst_49 {dimension_numbers = #tpu.dot_dimension_numbers<[1], [0], [0], [1], [0, 0, 1, 1], [], []>} : vector<6x36xbf16>, vector<36x16xbf16>, vector<6x16xf32> -> vector<6x16xf32>
    %c0_50 = arith.constant 0 : index
    %c0_51 = arith.constant 0 : index
    %c11 = arith.constant 11 : index
    %c0_52 = arith.constant 0 : index
    %240 = vector.load %arg4[%c0_50, %c0_51, %c11, %c0_52] : memref<1x6x16x16xf32, #tpu.memory_space<vmem>>, vector<1x6x1x16xf32>
    %241 = vector.shape_cast %240 : vector<1x6x1x16xf32> to vector<6x16xf32>
    %242 = vector.shape_cast %239 : vector<6x16xf32> to vector<1x6x1x16xf32>
    tpu.vector_store %arg4[%c0_50, %c0_51, %c11, %c0_52], %242 {strides = array<i32>} : memref<1x6x16x16xf32, #tpu.memory_space<vmem>>, vector<1x6x1x16xf32>,
    %243 = vector.extract_strided_slice %1 {offsets = [0, 12, 0], sizes = [4, 1, 18], strides = [1, 1, 1]} : vector<4x18x18xbf16> to vector<4x1x18xbf16>
    %244 = vector.shape_cast %243 : vector<4x1x18xbf16> to vector<4x18xbf16>
    %245 = vector.extract_strided_slice %244 {offsets = [0, 0], sizes = [4, 16], strides = [1, 1]} : vector<4x18xbf16> to vector<4x16xbf16>
    %246 = vector.extract_strided_slice %244 {offsets = [0, 1], sizes = [4, 16], strides = [1, 1]} : vector<4x18xbf16> to vector<4x16xbf16>
    %247 = vector.extract_strided_slice %244 {offsets = [0, 2], sizes = [4, 16], strides = [1, 1]} : vector<4x18xbf16> to vector<4x16xbf16>
    %248 = vector.extract_strided_slice %1 {offsets = [0, 13, 0], sizes = [4, 1, 18], strides = [1, 1, 1]} : vector<4x18x18xbf16> to vector<4x1x18xbf16>
    %249 = vector.shape_cast %248 : vector<4x1x18xbf16> to vector<4x18xbf16>
    %250 = vector.extract_strided_slice %249 {offsets = [0, 0], sizes = [4, 16], strides = [1, 1]} : vector<4x18xbf16> to vector<4x16xbf16>
    %251 = vector.extract_strided_slice %249 {offsets = [0, 1], sizes = [4, 16], strides = [1, 1]} : vector<4x18xbf16> to vector<4x16xbf16>
    %252 = vector.extract_strided_slice %249 {offsets = [0, 2], sizes = [4, 16], strides = [1, 1]} : vector<4x18xbf16> to vector<4x16xbf16>
    %253 = vector.extract_strided_slice %1 {offsets = [0, 14, 0], sizes = [4, 1, 18], strides = [1, 1, 1]} : vector<4x18x18xbf16> to vector<4x1x18xbf16>
    %254 = vector.shape_cast %253 : vector<4x1x18xbf16> to vector<4x18xbf16>
    %255 = vector.extract_strided_slice %254 {offsets = [0, 0], sizes = [4, 16], strides = [1, 1]} : vector<4x18xbf16> to vector<4x16xbf16>
    %256 = vector.extract_strided_slice %254 {offsets = [0, 1], sizes = [4, 16], strides = [1, 1]} : vector<4x18xbf16> to vector<4x16xbf16>
    %257 = vector.extract_strided_slice %254 {offsets = [0, 2], sizes = [4, 16], strides = [1, 1]} : vector<4x18xbf16> to vector<4x16xbf16>
    %258 = tpu.concatenate %245, %246, %247, %250, %251, %252, %255, %256, %257 in 0 : vector<4x16xbf16>, vector<4x16xbf16>, vector<4x16xbf16>, vector<4x16xbf16>, vector<4x16xbf16>, vector<4x16xbf16>, vector<4x16xbf16>, vector<4x16xbf16>, vector<4x16xbf16> -> vector<36x16xbf16>
    %cst_53 = arith.constant dense<0.000000e+00> : vector<6x16xf32>
    %259 = tpu.matmul %2, %258, %cst_53 {dimension_numbers = #tpu.dot_dimension_numbers<[1], [0], [0], [1], [0, 0, 1, 1], [], []>} : vector<6x36xbf16>, vector<36x16xbf16>, vector<6x16xf32> -> vector<6x16xf32>
    %c0_54 = arith.constant 0 : index
    %c0_55 = arith.constant 0 : index
    %c12 = arith.constant 12 : index
    %c0_56 = arith.constant 0 : index
    %260 = vector.load %arg4[%c0_54, %c0_55, %c12, %c0_56] : memref<1x6x16x16xf32, #tpu.memory_space<vmem>>, vector<1x6x1x16xf32>
    %261 = vector.shape_cast %260 : vector<1x6x1x16xf32> to vector<6x16xf32>
    %262 = vector.shape_cast %259 : vector<6x16xf32> to vector<1x6x1x16xf32>
    tpu.vector_store %arg4[%c0_54, %c0_55, %c12, %c0_56], %262 {strides = array<i32>} : memref<1x6x16x16xf32, #tpu.memory_space<vmem>>, vector<1x6x1x16xf32>,
    %263 = vector.extract_strided_slice %1 {offsets = [0, 13, 0], sizes = [4, 1, 18], strides = [1, 1, 1]} : vector<4x18x18xbf16> to vector<4x1x18xbf16>
    %264 = vector.shape_cast %263 : vector<4x1x18xbf16> to vector<4x18xbf16>
    %265 = vector.extract_strided_slice %264 {offsets = [0, 0], sizes = [4, 16], strides = [1, 1]} : vector<4x18xbf16> to vector<4x16xbf16>
    %266 = vector.extract_strided_slice %264 {offsets = [0, 1], sizes = [4, 16], strides = [1, 1]} : vector<4x18xbf16> to vector<4x16xbf16>
    %267 = vector.extract_strided_slice %264 {offsets = [0, 2], sizes = [4, 16], strides = [1, 1]} : vector<4x18xbf16> to vector<4x16xbf16>
    %268 = vector.extract_strided_slice %1 {offsets = [0, 14, 0], sizes = [4, 1, 18], strides = [1, 1, 1]} : vector<4x18x18xbf16> to vector<4x1x18xbf16>
    %269 = vector.shape_cast %268 : vector<4x1x18xbf16> to vector<4x18xbf16>
    %270 = vector.extract_strided_slice %269 {offsets = [0, 0], sizes = [4, 16], strides = [1, 1]} : vector<4x18xbf16> to vector<4x16xbf16>
    %271 = vector.extract_strided_slice %269 {offsets = [0, 1], sizes = [4, 16], strides = [1, 1]} : vector<4x18xbf16> to vector<4x16xbf16>
    %272 = vector.extract_strided_slice %269 {offsets = [0, 2], sizes = [4, 16], strides = [1, 1]} : vector<4x18xbf16> to vector<4x16xbf16>
    %273 = vector.extract_strided_slice %1 {offsets = [0, 15, 0], sizes = [4, 1, 18], strides = [1, 1, 1]} : vector<4x18x18xbf16> to vector<4x1x18xbf16>
    %274 = vector.shape_cast %273 : vector<4x1x18xbf16> to vector<4x18xbf16>
    %275 = vector.extract_strided_slice %274 {offsets = [0, 0], sizes = [4, 16], strides = [1, 1]} : vector<4x18xbf16> to vector<4x16xbf16>
    %276 = vector.extract_strided_slice %274 {offsets = [0, 1], sizes = [4, 16], strides = [1, 1]} : vector<4x18xbf16> to vector<4x16xbf16>
    %277 = vector.extract_strided_slice %274 {offsets = [0, 2], sizes = [4, 16], strides = [1, 1]} : vector<4x18xbf16> to vector<4x16xbf16>
    %278 = tpu.concatenate %265, %266, %267, %270, %271, %272, %275, %276, %277 in 0 : vector<4x16xbf16>, vector<4x16xbf16>, vector<4x16xbf16>, vector<4x16xbf16>, vector<4x16xbf16>, vector<4x16xbf16>, vector<4x16xbf16>, vector<4x16xbf16>, vector<4x16xbf16> -> vector<36x16xbf16>
    %cst_57 = arith.constant dense<0.000000e+00> : vector<6x16xf32>
    %279 = tpu.matmul %2, %278, %cst_57 {dimension_numbers = #tpu.dot_dimension_numbers<[1], [0], [0], [1], [0, 0, 1, 1], [], []>} : vector<6x36xbf16>, vector<36x16xbf16>, vector<6x16xf32> -> vector<6x16xf32>
    %c0_58 = arith.constant 0 : index
    %c0_59 = arith.constant 0 : index
    %c13 = arith.constant 13 : index
    %c0_60 = arith.constant 0 : index
    %280 = vector.load %arg4[%c0_58, %c0_59, %c13, %c0_60] : memref<1x6x16x16xf32, #tpu.memory_space<vmem>>, vector<1x6x1x16xf32>
    %281 = vector.shape_cast %280 : vector<1x6x1x16xf32> to vector<6x16xf32>
    %282 = vector.shape_cast %279 : vector<6x16xf32> to vector<1x6x1x16xf32>
    tpu.vector_store %arg4[%c0_58, %c0_59, %c13, %c0_60], %282 {strides = array<i32>} : memref<1x6x16x16xf32, #tpu.memory_space<vmem>>, vector<1x6x1x16xf32>,
    %283 = vector.extract_strided_slice %1 {offsets = [0, 14, 0], sizes = [4, 1, 18], strides = [1, 1, 1]} : vector<4x18x18xbf16> to vector<4x1x18xbf16>
    %284 = vector.shape_cast %283 : vector<4x1x18xbf16> to vector<4x18xbf16>
    %285 = vector.extract_strided_slice %284 {offsets = [0, 0], sizes = [4, 16], strides = [1, 1]} : vector<4x18xbf16> to vector<4x16xbf16>
    %286 = vector.extract_strided_slice %284 {offsets = [0, 1], sizes = [4, 16], strides = [1, 1]} : vector<4x18xbf16> to vector<4x16xbf16>
    %287 = vector.extract_strided_slice %284 {offsets = [0, 2], sizes = [4, 16], strides = [1, 1]} : vector<4x18xbf16> to vector<4x16xbf16>
    %288 = vector.extract_strided_slice %1 {offsets = [0, 15, 0], sizes = [4, 1, 18], strides = [1, 1, 1]} : vector<4x18x18xbf16> to vector<4x1x18xbf16>
    %289 = vector.shape_cast %288 : vector<4x1x18xbf16> to vector<4x18xbf16>
    %290 = vector.extract_strided_slice %289 {offsets = [0, 0], sizes = [4, 16], strides = [1, 1]} : vector<4x18xbf16> to vector<4x16xbf16>
    %291 = vector.extract_strided_slice %289 {offsets = [0, 1], sizes = [4, 16], strides = [1, 1]} : vector<4x18xbf16> to vector<4x16xbf16>
    %292 = vector.extract_strided_slice %289 {offsets = [0, 2], sizes = [4, 16], strides = [1, 1]} : vector<4x18xbf16> to vector<4x16xbf16>
    %293 = vector.extract_strided_slice %1 {offsets = [0, 16, 0], sizes = [4, 1, 18], strides = [1, 1, 1]} : vector<4x18x18xbf16> to vector<4x1x18xbf16>
    %294 = vector.shape_cast %293 : vector<4x1x18xbf16> to vector<4x18xbf16>
    %295 = vector.extract_strided_slice %294 {offsets = [0, 0], sizes = [4, 16], strides = [1, 1]} : vector<4x18xbf16> to vector<4x16xbf16>
    %296 = vector.extract_strided_slice %294 {offsets = [0, 1], sizes = [4, 16], strides = [1, 1]} : vector<4x18xbf16> to vector<4x16xbf16>
    %297 = vector.extract_strided_slice %294 {offsets = [0, 2], sizes = [4, 16], strides = [1, 1]} : vector<4x18xbf16> to vector<4x16xbf16>
    %298 = tpu.concatenate %285, %286, %287, %290, %291, %292, %295, %296, %297 in 0 : vector<4x16xbf16>, vector<4x16xbf16>, vector<4x16xbf16>, vector<4x16xbf16>, vector<4x16xbf16>, vector<4x16xbf16>, vector<4x16xbf16>, vector<4x16xbf16>, vector<4x16xbf16> -> vector<36x16xbf16>
    %cst_61 = arith.constant dense<0.000000e+00> : vector<6x16xf32>
    %299 = tpu.matmul %2, %298, %cst_61 {dimension_numbers = #tpu.dot_dimension_numbers<[1], [0], [0], [1], [0, 0, 1, 1], [], []>} : vector<6x36xbf16>, vector<36x16xbf16>, vector<6x16xf32> -> vector<6x16xf32>
    %c0_62 = arith.constant 0 : index
    %c0_63 = arith.constant 0 : index
    %c14 = arith.constant 14 : index
    %c0_64 = arith.constant 0 : index
    %300 = vector.load %arg4[%c0_62, %c0_63, %c14, %c0_64] : memref<1x6x16x16xf32, #tpu.memory_space<vmem>>, vector<1x6x1x16xf32>
    %301 = vector.shape_cast %300 : vector<1x6x1x16xf32> to vector<6x16xf32>
    %302 = vector.shape_cast %299 : vector<6x16xf32> to vector<1x6x1x16xf32>
    tpu.vector_store %arg4[%c0_62, %c0_63, %c14, %c0_64], %302 {strides = array<i32>} : memref<1x6x16x16xf32, #tpu.memory_space<vmem>>, vector<1x6x1x16xf32>,
    %303 = vector.extract_strided_slice %1 {offsets = [0, 15, 0], sizes = [4, 1, 18], strides = [1, 1, 1]} : vector<4x18x18xbf16> to vector<4x1x18xbf16>
    %304 = vector.shape_cast %303 : vector<4x1x18xbf16> to vector<4x18xbf16>
    %305 = vector.extract_strided_slice %304 {offsets = [0, 0], sizes = [4, 16], strides = [1, 1]} : vector<4x18xbf16> to vector<4x16xbf16>
    %306 = vector.extract_strided_slice %304 {offsets = [0, 1], sizes = [4, 16], strides = [1, 1]} : vector<4x18xbf16> to vector<4x16xbf16>
    %307 = vector.extract_strided_slice %304 {offsets = [0, 2], sizes = [4, 16], strides = [1, 1]} : vector<4x18xbf16> to vector<4x16xbf16>
    %308 = vector.extract_strided_slice %1 {offsets = [0, 16, 0], sizes = [4, 1, 18], strides = [1, 1, 1]} : vector<4x18x18xbf16> to vector<4x1x18xbf16>
    %309 = vector.shape_cast %308 : vector<4x1x18xbf16> to vector<4x18xbf16>
    %310 = vector.extract_strided_slice %309 {offsets = [0, 0], sizes = [4, 16], strides = [1, 1]} : vector<4x18xbf16> to vector<4x16xbf16>
    %311 = vector.extract_strided_slice %309 {offsets = [0, 1], sizes = [4, 16], strides = [1, 1]} : vector<4x18xbf16> to vector<4x16xbf16>
    %312 = vector.extract_strided_slice %309 {offsets = [0, 2], sizes = [4, 16], strides = [1, 1]} : vector<4x18xbf16> to vector<4x16xbf16>
    %313 = vector.extract_strided_slice %1 {offsets = [0, 17, 0], sizes = [4, 1, 18], strides = [1, 1, 1]} : vector<4x18x18xbf16> to vector<4x1x18xbf16>
    %314 = vector.shape_cast %313 : vector<4x1x18xbf16> to vector<4x18xbf16>
    %315 = vector.extract_strided_slice %314 {offsets = [0, 0], sizes = [4, 16], strides = [1, 1]} : vector<4x18xbf16> to vector<4x16xbf16>
    %316 = vector.extract_strided_slice %314 {offsets = [0, 1], sizes = [4, 16], strides = [1, 1]} : vector<4x18xbf16> to vector<4x16xbf16>
    %317 = vector.extract_strided_slice %314 {offsets = [0, 2], sizes = [4, 16], strides = [1, 1]} : vector<4x18xbf16> to vector<4x16xbf16>
    %318 = tpu.concatenate %305, %306, %307, %310, %311, %312, %315, %316, %317 in 0 : vector<4x16xbf16>, vector<4x16xbf16>, vector<4x16xbf16>, vector<4x16xbf16>, vector<4x16xbf16>, vector<4x16xbf16>, vector<4x16xbf16>, vector<4x16xbf16>, vector<4x16xbf16> -> vector<36x16xbf16>
    %cst_65 = arith.constant dense<0.000000e+00> : vector<6x16xf32>
    %319 = tpu.matmul %2, %318, %cst_65 {dimension_numbers = #tpu.dot_dimension_numbers<[1], [0], [0], [1], [0, 0, 1, 1], [], []>} : vector<6x36xbf16>, vector<36x16xbf16>, vector<6x16xf32> -> vector<6x16xf32>
    %c0_66 = arith.constant 0 : index
    %c0_67 = arith.constant 0 : index
    %c15 = arith.constant 15 : index
    %c0_68 = arith.constant 0 : index
    %320 = vector.load %arg4[%c0_66, %c0_67, %c15, %c0_68] : memref<1x6x16x16xf32, #tpu.memory_space<vmem>>, vector<1x6x1x16xf32>
    %321 = vector.shape_cast %320 : vector<1x6x1x16xf32> to vector<6x16xf32>
    %322 = vector.shape_cast %319 : vector<6x16xf32> to vector<1x6x1x16xf32>
    tpu.vector_store %arg4[%c0_66, %c0_67, %c15, %c0_68], %322 {strides = array<i32>} : memref<1x6x16x16xf32, #tpu.memory_space<vmem>>, vector<1x6x1x16xf32>,
    return
  }
  func.func @transform_0(%arg0: i32, %arg1: i32) -> (i32, i32, i32, i32) {
    %c0_i32 = arith.constant 0 : i32
    %c0_i32_0 = arith.constant 0 : i32
    %c0_i32_1 = arith.constant 0 : i32
    %c0_i32_2 = arith.constant 0 : i32
    return %arg0, %c0_i32, %c0_i32_0, %c0_i32_1 : i32, i32, i32, i32
  }
  func.func @transform_1(%arg0: i32, %arg1: i32) -> (i32, i32) {
    %c0_i32 = arith.constant 0 : i32
    %c0_i32_0 = arith.constant 0 : i32
    %c0_i32_1 = arith.constant 0 : i32
    return %c0_i32, %c0_i32_0 : i32, i32
  }
  func.func @transform_2(%arg0: i32, %arg1: i32) -> (i32, i32, i32, i32) {
    %c0_i32 = arith.constant 0 : i32
    %c0_i32_0 = arith.constant 0 : i32
    %c0_i32_1 = arith.constant 0 : i32
    return %arg0, %c0_i32, %arg1, %c0_i32_0 : i32, i32, i32, i32
  }
}

</mosaic_0001>

<llo_original>
// kernel: tpu_custom_call.1
$region0: #{tpu_custom_call.1}
  #allocation0 [shape = 'u32[]', space=smem, size = 0x4, offset = 0x4, fixed_abs, tag = 'smem constant byte address 0x4 - core index']
  #allocation1 [shape = 'u32[144,128]{1,0:T(1,128)}', space=vmem, size = 0x12000, scoped, tag = 'internal scratch']
  %s0 = inlined_call_operand.vmem [shape: bf16[2,4,18,18], index: 0, kind: input, shape index: {}]
  %s1 = inlined_call_operand.vmem [shape: bf16[6,36], index: 1, kind: input, shape index: {}]
  %s2 = inlined_call_operand.hbm [shape: f32[2,6,16,16], index: 2, kind: output, shape index: {}]
  %s3 = sld [smem:[#allocation0]]
  $region41: #{tpu_custom_call.1} parent=0
    _
  %s5 = ssub.s32 1, %s3
  %s6 = scalar_select 0, %s5, %s3
  $region1: #{tpu_custom_call.1} parent=0
    #allocation2 [shape = 'u8[98304]{0}', space=vmem, size = 0x18000, scoped, tag = 'output window, operand 0']
    #allocation3 [shape = 's32[2]{0}', space=sflag, size = 0x8, scoped, tag = 'scoped memory for tpu_custom_call.1']
    %7 = vsyncpa [#allocation3], 0
    %s8 = scalar_lea.sflag [#allocation3], 1
    %9 = vsyncpa %s8, 0
    loop: start=0, step=1, limit=4
    $region2: #{tpu_custom_call.1} parent=1 // loop_pre_header
      _
    $region3: #{tpu_custom_call.1} parent=1 // loop_header
      %s11 = sphi 0, %s15
      %p12 = scmp.ge.s32.totalorder %s11, 4
      %s18 = sphi 0, %s30
      %s19 = sphi 0, %s26
      %s20 = sphi 0, %s18
      %s21 = sphi 0, %s19
      %s22 = sphi 0, %s20
      %s23 = sphi 0, %s21
      %s33 = sphi 0, %s35
      %s36 = sphi 0, %s33
      %s37 = sphi 0, %s36
      %s53 = sphi 0, %s37
      %s57 = sphi 0, %s57
      %s59 = sphi 0, %s57
      %s60 = sphi 0, %s59
      %s74 = sphi 0, %s60
      %s82 = sphi 0, %s84
      %s85 = sphi 0, %s82
      %s86 = sphi 0, %s85
      %s102 = sphi 0, %s86
    $region4: #{tpu_custom_call.1} parent=1 // loop_header_branch
      %14 = sbr.rel (%p12) target = $region8
    $region5: #{tpu_custom_call.1} parent=1 // loop_body
      %s16 = ssub.s32 %s11, 1
      %s17 = ssub.s32 %s11, 2
      %s24 = sadd.s32 1, %s19
      %p25 = scmp.ge.s32.totalorder %s24, 1
      %s26 = scalar_select %p25, 0, %s24
      %s27 = sadd.s32 1, %s18
      %s28 = scalar_select %p25, %s27, %s18
      %p29 = scmp.ge.s32.totalorder %s28, 2
      %s30 = scalar_select %p29, 0, %s28
      %s31 = ssub.s32 %s18, %s30
      %p32 = scmp.eq.s32.totalorder %s31, 0
      %s34 = sadd.s32 %s33, 1
      %s35 = scalar_select %p32, %s33, %s34
      %p38 = pneg %p32
      %p39 = scmp.eq.s32.totalorder %s11, 1
      %p40 = por %p38, %p39
      %p41 = scmp.ne.s32.totalorder %s33, %s36
      %p42 = scmp.eq.s32.totalorder %s11, 0
      %p43 = por %p41, %p42
      %p44 = scmp.ne.s32.totalorder %s33, %s36
      %p45 = scmp.eq.s32.totalorder %s16, 1
      %p46 = por %p44, %p45
      %p47 = scmp.ne.s32.totalorder %s36, %s37
      %p48 = scmp.eq.s32.totalorder %s16, 0
      %p49 = por %p47, %p48
      %p50 = scmp.ne.s32.totalorder %s36, %s37
      %p51 = scmp.eq.s32.totalorder %s17, 1
      %p52 = por %p50, %p51
      %p54 = scmp.ne.s32.totalorder %s37, %s53
      %p55 = scmp.eq.s32.totalorder %s17, 0
      %p56 = por %p54, %p55
      %s58 = sadd.s32 %s57, 1
      %p61 = scmp.eq.s32.totalorder %s11, 1
      %p62 = scmp.ne.s32.totalorder %s57, %s59
      %p63 = scmp.eq.s32.totalorder %s11, 0
      %p64 = por %p62, %p63
      %p65 = scmp.ne.s32.totalorder %s57, %s59
      %p66 = scmp.eq.s32.totalorder %s16, 1
      %p67 = por %p65, %p66
      %p68 = scmp.ne.s32.totalorder %s59, %s60
      %p69 = scmp.eq.s32.totalorder %s16, 0
      %p70 = por %p68, %p69
      %p71 = scmp.ne.s32.totalorder %s59, %s60
      %p72 = scmp.eq.s32.totalorder %s17, 1
      %p73 = por %p71, %p72
      %p75 = scmp.ne.s32.totalorder %s60, %s74
      %p76 = scmp.eq.s32.totalorder %s17, 0
      %p77 = por %p75, %p76
      %s78 = ssub.s32 %s18, %s30
      %s79 = ssub.s32 %s19, %s26
      %s80 = sor.u32 %s78, %s79
      %p81 = scmp.eq.s32.totalorder %s80, 0
      %s83 = sadd.s32 %s82, 1
      %s84 = scalar_select %p81, %s82, %s83
      %p87 = pneg %p81
      %p88 = scmp.eq.s32.totalorder %s11, 1
      %p89 = por %p87, %p88
      %p90 = scmp.ne.s32.totalorder %s82, %s85
      %p91 = scmp.eq.s32.totalorder %s11, 0
      %p92 = por %p90, %p91
      %p93 = scmp.ne.s32.totalorder %s82, %s85
      %p94 = scmp.eq.s32.totalorder %s16, 1
      %p95 = por %p93, %p94
      %p96 = scmp.ne.s32.totalorder %s85, %s86
      %p97 = scmp.eq.s32.totalorder %s16, 0
      %p98 = por %p96, %p97
      %p99 = scmp.ne.s32.totalorder %s85, %s86
      %p100 = scmp.eq.s32.totalorder %s17, 1
      %p101 = por %p99, %p100
      %p103 = scmp.ne.s32.totalorder %s86, %s102
      %p104 = scmp.eq.s32.totalorder %s17, 0
      %p105 = por %p103, %p104
      %p106 = scmp.le.s32.totalorder 1, %s11
      %p107 = scmp.lt.s32.totalorder %s11, 3
      %p108 = pnand %p106, %p107
      %p109 = pneg %p108
      // Predicated region
      $region9: #{tpu_custom_call.1} parent=5 // pred_check
        _
      $region10: #{tpu_custom_call.1} parent=5 // pred_check_branch
        %111 = sbr.rel (%p108) target = $region12
      $region11: #{tpu_custom_call.1} parent=5 // pred_region
        %s112 = ssub.s32 %s11, 1
        // Predicated region
        $region13: #{tpu_custom_call.1} parent=11 // pred_check
          %p113 = pneg %p70
        $region14: #{tpu_custom_call.1} parent=11 // pred_check_branch
          %115 = sbr.rel (%p113) target = $region16
        $region15: #{tpu_custom_call.1} parent=11 // pred_region
          _
        $region16: #{tpu_custom_call.1} parent=11 // pred_fallthru
          _
      $region12: #{tpu_custom_call.1} parent=5 // pred_fallthru
        _
      %p116 = scmp.lt.s32.totalorder %s11, 2
      // Predicated region
      $region17: #{tpu_custom_call.1} parent=5 // pred_check
        %p117 = pneg %p116
      $region18: #{tpu_custom_call.1} parent=5 // pred_check_branch
        %119 = sbr.rel (%p117) target = $region20
      $region19: #{tpu_custom_call.1} parent=5 // pred_region
        // Predicated region
        $region21: #{tpu_custom_call.1} parent=19 // pred_check
          %p120 = pneg %p43
        $region22: #{tpu_custom_call.1} parent=19 // pred_check_branch
          %122 = sbr.rel (%p120) target = $region24
        $region23: #{tpu_custom_call.1} parent=19 // pred_region
          %p123 = scmp.lt.s32.totalorder %s18, 1
          %s124 = scalar_select %p123, %s18, 1
          %s125 = smul.addr %s124, 12
          %s126 = smul.addr %s125, 4
          %s127 = scalar_lea.vmem %s0, %s126
        $region24: #{tpu_custom_call.1} parent=19 // pred_fallthru
          _
      $region20: #{tpu_custom_call.1} parent=5 // pred_fallthru
        _
      %p128 = scmp.le.s32.totalorder 1, %s11
      %p129 = scmp.lt.s32.totalorder %s11, 3
      %p130 = pnand %p128, %p129
      %p131 = pneg %p130
      // Predicated region
      $region25: #{tpu_custom_call.1} parent=5 // pred_check
        _
      $region26: #{tpu_custom_call.1} parent=5 // pred_check_branch
        %133 = sbr.rel (%p130) target = $region28
      $region27: #{tpu_custom_call.1} parent=5 // pred_region
        %s134 = ssub.s32 %s11, 1
        %p135 = scmp.lt.s32.totalorder %s20, 1
        %s136 = scalar_select %p135, %s20, 1
        %s137 = smul.addr %s136, 12
        %s138 = smul.addr %s137, 4
        %s139 = scalar_lea.vmem %s0, %s138
        %p140 = pneg %p49
        %p141 = pneg %p46
        %p142 = pneg %p70
        %p143 = pneg %p67
        %p144 = pneg %p98
        %p145 = pneg %p95
        %s146 = sand.u32 %s85, 1
        %s147 = scalar_lea.sflag [#allocation3], %s146
        %s148 = sand.u32 %s85, 1
        %s149 = smul.addr %s148, 96
        %s150 = scalar_lea.vmem [#allocation2], %s149
        %p151 = scmp.lt.s32.totalorder %s20, 1
        %s152 = scalar_select %p151, %s20, 1
        %s153 = smul.addr %s152, 12
        %s154 = smul.addr %s153, 4
        %s155 = scalar_lea.vmem %s0, %s154
        %s156 = smul.u32 2, %s21
        %v158 = vld [vmem:[%s155] sm:$0xf]
        %v159 = vld [vmem:[%s155 + $0x4] sm:$0xf]
        %v160 = vld [vmem:[%s155 + $0x8] sm:$0x1]
        %v161 = vld [vmem:[%s155 + $0xc] sm:$0xf]
        %v162 = vld [vmem:[%s155 + $0x10] sm:$0xf]
        %v163 = vld [vmem:[%s155 + $0x14] sm:$0x1]
        %v164 = vld [vmem:[%s155 + $0x18] sm:$0xf]
        %v165 = vld [vmem:[%s155 + $0x1c] sm:$0xf]
        %v166 = vld [vmem:[%s155 + $0x20] sm:$0x1]
        %v167 = vld [vmem:[%s155 + $0x24] sm:$0xf]
        %v168 = vld [vmem:[%s155 + $0x28] sm:$0xf]
        %v169 = vld [vmem:[%s155 + $0x2c] sm:$0x1]
        %v170 = vld [vmem:[%s1] sm:$0x7]
        %v175 = vunpack.c.l.b16 %v158
        %v176 = vunpack.c.l.b16 %v161
        %v177 = vunpack.c.l.b16 %v164
        %v178 = vunpack.c.l.b16 %v167
        %v179 = vpack.c.b16 %v175, %v175
        %v180 = vpack.c.b16 %v176, %v176
        %v181 = vpack.c.b16 %v177, %v177
        %v182 = vpack.c.b16 %v178, %v178
        %v183 = vunpack.c.l.b16 %v179
        %v184 = vunpack.c.l.b16 %v180
        %v185 = vunpack.c.l.b16 %v181
        %v186 = vunpack.c.l.b16 %v182
        %v187 = vrot.slane %v184, 7
        %vm188 = vcmask 1041409
        %v189 = vsel %vm188, %v187, %v183
        %v190 = vrot.slane %v185, 6
        %vm191 = vcmask 1042434
        %v192 = vsel %vm191, %v190, %v189
        %v193 = vrot.slane %v186, 5
        %vm194 = vcmask 1043459
        %v195 = vsel %vm194, %v193, %v192
        %v196 = vpack.c.b16 %v195, %v195
        %v197 = vrot.slane %v183, 4
        %v198 = vrot.slane %v184, 3
        %vm199 = vcmask 1045509
        %v200 = vsel %vm199, %v198, %v197
        %v201 = vrot.slane %v185, 2
        %vm202 = vcmask 1046534
        %v203 = vsel %vm202, %v201, %v200
        %v204 = vrot.slane %v186, 1
        %vm205 = vcmask 1047559
        %v206 = vsel %vm205, %v204, %v203
        %v207 = vpack.c.b16 %v206, %v206
        %208 = vrot.lane.b32.xlu0 %v207, 127
        %v209 = vpop.permute.xlu0 %208
        %v210 = vunpack.c.h.b16 %v179
        %v211 = vunpack.c.h.b16 %v180
        %v212 = vunpack.c.h.b16 %v181
        %v213 = vunpack.c.h.b16 %v182
        %v214 = vrot.slane %v211, 7
        %v215 = vsel %vm188, %v214, %v210
        %v216 = vrot.slane %v212, 6
        %v217 = vsel %vm191, %v216, %v215
        %v218 = vrot.slane %v213, 5
        %v219 = vsel %vm194, %v218, %v217
        %v220 = vpack.c.b16 %v219, %v219
        %221 = vrot.lane.b32.xlu0 %v220, 126
        %v222 = vpop.permute.xlu0 %221
        %v223 = vrot.slane %v183, 5
        %v224 = vrot.slane %v184, 4
        %v225 = vsel %vm199, %v224, %v223
        %v226 = vrot.slane %v185, 3
        %v227 = vsel %vm202, %v226, %v225
        %v228 = vrot.slane %v186, 2
        %v229 = vsel %vm205, %v228, %v227
        %v230 = vpack.c.b16 %v229, %v229
        %v231 = vrot.slane %v183, 1
        %v232 = vsel %vm188, %v184, %v231
        %v233 = vrot.slane %v185, 7
        %v234 = vsel %vm191, %v233, %v232
        %v235 = vrot.slane %v186, 6
        %v236 = vsel %vm194, %v235, %v234
        %v237 = vpack.c.b16 %v236, %v236
        %238 = vrot.lane.b32.xlu0 %v237, 127
        %v239 = vpop.permute.xlu0 %238
        %240 = vrot.lane.b32.xlu0 %v230, 126
        %v241 = vpop.permute.xlu0 %240
        %v242 = vrot.slane %v183, 2
        %v243 = vrot.slane %v184, 1
        %v244 = vsel %vm188, %v243, %v242
        %v245 = vsel %vm191, %v185, %v244
        %v246 = vrot.slane %v186, 7
        %v247 = vsel %vm194, %v246, %v245
        %v248 = vpack.c.b16 %v247, %v247
        %v249 = vrot.slane %v183, 6
        %v250 = vrot.slane %v184, 5
        %v251 = vsel %vm199, %v250, %v249
        %v252 = vrot.slane %v185, 4
        %v253 = vsel %vm202, %v252, %v251
        %v254 = vrot.slane %v186, 3
        %v255 = vsel %vm205, %v254, %v253
        %v256 = vpack.c.b16 %v255, %v255
        %257 = vrot.lane.b32.xlu0 %v256, 127
        %v258 = vpop.permute.xlu0 %257
        %259 = vrot.lane.b32.xlu0 %v248, 126
        %v260 = vpop.permute.xlu0 %259
        %vm261 = vcmask 1041408
        %v264 = vsel %vm261, %v196, %v209
        %vm265 = vcmask 1043456
        %v267 = vsel %vm265, %v264, %v222
        %vm268 = vcmask 1045504
        %v270 = vsel %vm268, %v267, %v230
        %v274 = vsel %vm261, %v239, %v241
        %v276 = vsel %vm265, %v274, %v248
        %v278 = vsel %vm268, %v276, %v258
        %vm280 = vcmask 293888
        %v282 = vsel %vm280, %v170, 0
        %v285 = vsel %vm261, %v260, 0
        %287 = vmatprep.subr.bf16.mxu0 0
        %288 = vmatpush1.bf16.msra.mxu0 0
        %289 = vmatprep.subr.bf16.mxu0 0
        %290 = vmatpush1.bf16.msra.mxu0 0
        %291 = vmatprep.subr.bf16.mxu0 0
        %292 = vmatpush1.bf16.msra.mxu0 0
        %293 = vmatprep.subr.bf16.mxu0 0
        %294 = vmatpush1.bf16.msra.mxu0 0
        %295 = vmatprep.subr.bf16.mxu0 0
        %296 = vmatpush1.bf16.msra.mxu0 0
        %297 = vmatprep.subr.bf16.mxu0 0
        %298 = vmatpush1.bf16.msra.mxu0 %v285
        %299 = vmatprep.subr.bf16.mxu0 0
        %300 = vmatpush1.bf16.msra.mxu0 %v278
        %301 = vmatprep.subr.bf16.mxu0 0
        %302 = vmatpush1.bf16.msra.mxu0 %v270
        %303 = vmatprep.subr.bf16.mxu0 0
        %304 = vmatpush2.bf16.msra.mxu0 0
        %305 = vmatprep.subr.bf16.mxu0 0
        %306 = vmatpush2.bf16.msra.mxu0 0
        %307 = vmatprep.subr.bf16.mxu0 0
        %308 = vmatpush2.bf16.msra.mxu0 0
        %309 = vmatprep.subr.bf16.mxu0 0
        %310 = vmatpush2.bf16.msra.mxu0 0
        %311 = vmatprep.subr.bf16.mxu0 0
        %312 = vmatpush2.bf16.msra.mxu0 0
        %313 = vmatprep.subr.bf16.mxu0 0
        %314 = vmatpush2.bf16.msra.mxu0 0
        %315 = vmatprep.subr.bf16.mxu0 0
        %316 = vmatpush2.bf16.msra.mxu0 0
        %317 = vmatprep.subr.bf16.mxu0 0
        %318 = vmatpush2.bf16.msra.mxu0 0
        %319 = vmatprep.mubr.bf16.mxu0 0
        %320 = vmatmul.mubr.bf16.gmra.mxu0 %v282
        %v321 = vpop.f32.mrf.mxu0
        %v322 = vadd.f32 0.0, %v321
        %v323 = vpop.f32.mrf.mxu0
        %v324 = vpop.f32.mrf.mxu0
        %v325 = vpop.f32.mrf.mxu0
        %326 = vdwg.mxu0
        %v328 = vcombine.high %v322, %v322
        %v330 = vunpack.c.l.s4 1966171168
        %v331 = vunpack.c.0.s8 %v330
        %v332 = vlaneseq
        %v333 = vshrl.u32 %v332, 7
        %v334 = vsub.s32 %v331, %v333
        %v335 = vrot.slane %v322, %v334
        %v337 = vunpack.c.l.s4 1966171168
        %v338 = vunpack.c.0.s8 %v337
        %v339 = vlaneseq
        %v340 = vshrl.u32 %v339, 7
        %v341 = vsub.s32 %v338, %v340
        %v342 = vrot.slane %v328, %v341
        %v343 = vcombine.high %v335, %v335
        %v344 = vcombine.high %v342, %v342
        %v346 = vunpack.c.l.s4 1966171168
        %v347 = vunpack.c.0.s8 %v346
        %v348 = vlaneseq
        %v349 = vshrl.u32 %v348, 7
        %v350 = vsub.s32 %v347, %v349
        %v351 = vrot.slane %v335, %v350
        %v353 = vunpack.c.l.s4 1966171168
        %v354 = vunpack.c.0.s8 %v353
        %v355 = vlaneseq
        %v356 = vshrl.u32 %v355, 7
        %v357 = vsub.s32 %v354, %v356
        %v358 = vrot.slane %v342, %v357
        %v360 = vunpack.c.l.s4 1966171168
        %v361 = vunpack.c.0.s8 %v360
        %v362 = vlaneseq
        %v363 = vshrl.u32 %v362, 7
        %v364 = vsub.s32 %v361, %v363
        %v365 = vrot.slane %v343, %v364
        %v367 = vunpack.c.l.s4 1966171168
        %v368 = vunpack.c.0.s8 %v367
        %v369 = vlaneseq
        %v370 = vshrl.u32 %v369, 7
        %v371 = vsub.s32 %v368, %v370
        %v372 = vrot.slane %v344, %v371
        %v373 = vcombine.high %v351, %v351
        %v374 = vcombine.high %v365, %v365
        %vm381 = vcmask 122880
        %382 = vst.msk [vmem:[%s150] sm:$0x1] %vm381, %v351
        %383 = vst.msk [vmem:[%s150 + $0x10] sm:$0x1] %vm381, %v365
        %384 = vst.msk [vmem:[%s150 + $0x20] sm:$0x1] %vm381, %v373
        %385 = vst.msk [vmem:[%s150 + $0x30] sm:$0x1] %vm381, %v374
        %386 = vst.msk [vmem:[%s150 + $0x40] sm:$0x1] %vm381, %v358
        %387 = vst.msk [vmem:[%s150 + $0x50] sm:$0x1] %vm381, %v372
        %388 = vrot.lane.b32.xlu0 %v230, 127
        %v389 = vpop.permute.xlu0 %388
        %390 = vrot.lane.b32.xlu0 %v237, 126
        %v391 = vpop.permute.xlu0 %390
        %392 = vrot.lane.b32.xlu0 %v248, 127
        %v393 = vpop.permute.xlu0 %392
        %394 = vrot.lane.b32.xlu0 %v256, 126
        %v395 = vpop.permute.xlu0 %394
        %v396 = vrot.slane %v183, 3
        %v397 = vrot.slane %v184, 2
        %v398 = vsel %vm188, %v397, %v396
        %v399 = vrot.slane %v185, 1
        %v400 = vsel %vm191, %v399, %v398
        %v401 = vsel %vm194, %v186, %v400
        %v402 = vpack.c.b16 %v401, %v401
        %v403 = vrot.slane %v183, 7
        %v404 = vrot.slane %v184, 6
        %v405 = vsel %vm199, %v404, %v403
        %v406 = vrot.slane %v185, 5
        %v407 = vsel %vm202, %v406, %v405
        %v408 = vrot.slane %v186, 4
        %v409 = vsel %vm205, %v408, %v407
        %v410 = vpack.c.b16 %v409, %v409
        %411 = vrot.lane.b32.xlu0 %v410, 127
        %v412 = vpop.permute.xlu0 %411
        %413 = vrot.lane.b32.xlu0 %v402, 126
        %v414 = vpop.permute.xlu0 %413
        %v417 = vsel %vm261, %v237, %v389
        %v419 = vsel %vm265, %v417, %v391
        %v421 = vsel %vm268, %v419, %v256
        %v425 = vsel %vm261, %v393, %v395
        %v427 = vsel %vm265, %v425, %v402
        %v429 = vsel %vm268, %v427, %v412
        %v432 = vsel %vm261, %v414, 0
        %434 = vmatprep.subr.bf16.mxu0 0
        %435 = vmatpush1.bf16.msra.mxu0 0
        %436 = vmatprep.subr.bf16.mxu0 0
        %437 = vmatpush1.bf16.msra.mxu0 0
        %438 = vmatprep.subr.bf16.mxu0 0
        %439 = vmatpush1.bf16.msra.mxu0 0
        %440 = vmatprep.subr.bf16.mxu0 0
        %441 = vmatpush1.bf16.msra.mxu0 0
        %442 = vmatprep.subr.bf16.mxu0 0
        %443 = vmatpush1.bf16.msra.mxu0 0
        %444 = vmatprep.subr.bf16.mxu0 0
        %445 = vmatpush1.bf16.msra.mxu0 %v432
        %446 = vmatprep.subr.bf16.mxu0 0
        %447 = vmatpush1.bf16.msra.mxu0 %v429
        %448 = vmatprep.subr.bf16.mxu0 0
        %449 = vmatpush1.bf16.msra.mxu0 %v421
        %450 = vmatprep.subr.bf16.mxu0 0
        %451 = vmatpush2.bf16.msra.mxu0 0
        %452 = vmatprep.subr.bf16.mxu0 0
        %453 = vmatpush2.bf16.msra.mxu0 0
        %454 = vmatprep.subr.bf16.mxu0 0
        %455 = vmatpush2.bf16.msra.mxu0 0
        %456 = vmatprep.subr.bf16.mxu0 0
        %457 = vmatpush2.bf16.msra.mxu0 0
        %458 = vmatprep.subr.bf16.mxu0 0
        %459 = vmatpush2.bf16.msra.mxu0 0
        %460 = vmatprep.subr.bf16.mxu0 0
        %461 = vmatpush2.bf16.msra.mxu0 0
        %462 = vmatprep.subr.bf16.mxu0 0
        %463 = vmatpush2.bf16.msra.mxu0 0
        %464 = vmatprep.subr.bf16.mxu0 0
        %465 = vmatpush2.bf16.msra.mxu0 0
        %466 = vmatprep.mubr.bf16.mxu0 0
        %467 = vmatmul.mubr.bf16.gmra.mxu0 %v282
        %v468 = vpop.f32.mrf.mxu0
        %v469 = vadd.f32 0.0, %v468
        %v470 = vpop.f32.mrf.mxu0
        %v471 = vpop.f32.mrf.mxu0
        %v472 = vpop.f32.mrf.mxu0
        %473 = vdwg.mxu0
        %v475 = vcombine.high %v469, %v469
        %v477 = vunpack.c.l.s4 1966171168
        %v478 = vunpack.c.0.s8 %v477
        %v479 = vlaneseq
        %v480 = vshrl.u32 %v479, 7
        %v481 = vsub.s32 %v478, %v480
        %v482 = vrot.slane %v469, %v481
        %v484 = vunpack.c.l.s4 1966171168
        %v485 = vunpack.c.0.s8 %v484
        %v486 = vlaneseq
        %v487 = vshrl.u32 %v486, 7
        %v488 = vsub.s32 %v485, %v487
        %v489 = vrot.slane %v475, %v488
        %v490 = vcombine.high %v482, %v482
        %v491 = vcombine.high %v489, %v489
        %v493 = vunpack.c.l.s4 1966171168
        %v494 = vunpack.c.0.s8 %v493
        %v495 = vlaneseq
        %v496 = vshrl.u32 %v495, 7
        %v497 = vsub.s32 %v494, %v496
        %v498 = vrot.slane %v482, %v497
        %v500 = vunpack.c.l.s4 1966171168
        %v501 = vunpack.c.0.s8 %v500
        %v502 = vlaneseq
        %v503 = vshrl.u32 %v502, 7
        %v504 = vsub.s32 %v501, %v503
        %v505 = vrot.slane %v489, %v504
        %v507 = vunpack.c.l.s4 1966171168
        %v508 = vunpack.c.0.s8 %v507
        %v509 = vlaneseq
        %v510 = vshrl.u32 %v509, 7
        %v511 = vsub.s32 %v508, %v510
        %v512 = vrot.slane %v490, %v511
        %v514 = vunpack.c.l.s4 1966171168
        %v515 = vunpack.c.0.s8 %v514
        %v516 = vlaneseq
        %v517 = vshrl.u32 %v516, 7
        %v518 = vsub.s32 %v515, %v517
        %v519 = vrot.slane %v491, %v518
        %v520 = vcombine.high %v498, %v498
        %v521 = vcombine.high %v512, %v512
        %528 = vst.msk [vmem:[%s150 + $0x1] sm:$0x1] %vm381, %v498
        %529 = vst.msk [vmem:[%s150 + $0x11] sm:$0x1] %vm381, %v512
        %530 = vst.msk [vmem:[%s150 + $0x21] sm:$0x1] %vm381, %v520
        %531 = vst.msk [vmem:[%s150 + $0x31] sm:$0x1] %vm381, %v521
        %532 = vst.msk [vmem:[%s150 + $0x41] sm:$0x1] %vm381, %v505
        %533 = vst.msk [vmem:[%s150 + $0x51] sm:$0x1] %vm381, %v519
        %534 = vrot.lane.b32.xlu0 %v402, 127
        %v535 = vpop.permute.xlu0 %534
        %536 = vrot.lane.b32.xlu0 %v410, 126
        %v537 = vpop.permute.xlu0 %536
        %v538 = vsel %vm188, %v198, %v197
        %v539 = vsel %vm191, %v201, %v538
        %v540 = vsel %vm194, %v204, %v539
        %v541 = vpack.c.b16 %v540, %v540
        %v542 = vsel %vm199, %v214, %v210
        %v543 = vsel %vm202, %v216, %v542
        %v544 = vsel %vm205, %v218, %v543
        %v545 = vpack.c.b16 %v544, %v544
        %546 = vrot.lane.b32.xlu0 %v545, 127
        %v547 = vpop.permute.xlu0 %546
        %548 = vrot.lane.b32.xlu0 %v541, 126
        %v549 = vpop.permute.xlu0 %548
        %v550 = vsel %vm261, %v248, %v258
        %v551 = vsel %vm265, %v550, %v260
        %v553 = vsel %vm268, %v551, %v410
        %v557 = vsel %vm261, %v535, %v537
        %v559 = vsel %vm265, %v557, %v541
        %v561 = vsel %vm268, %v559, %v547
        %v564 = vsel %vm261, %v549, 0
        %566 = vmatprep.subr.bf16.mxu0 0
        %567 = vmatpush1.bf16.msra.mxu0 0
        %568 = vmatprep.subr.bf16.mxu0 0
        %569 = vmatpush1.bf16.msra.mxu0 0
        %570 = vmatprep.subr.bf16.mxu0 0
        %571 = vmatpush1.bf16.msra.mxu0 0
        %572 = vmatprep.subr.bf16.mxu0 0
        %573 = vmatpush1.bf16.msra.mxu0 0
        %574 = vmatprep.subr.bf16.mxu0 0
        %575 = vmatpush1.bf16.msra.mxu0 0
        %576 = vmatprep.subr.bf16.mxu0 0
        %577 = vmatpush1.bf16.msra.mxu0 %v564
        %578 = vmatprep.subr.bf16.mxu0 0
        %579 = vmatpush1.bf16.msra.mxu0 %v561
        %580 = vmatprep.subr.bf16.mxu0 0
        %581 = vmatpush1.bf16.msra.mxu0 %v553
        %582 = vmatprep.subr.bf16.mxu0 0
        %583 = vmatpush2.bf16.msra.mxu0 0
        %584 = vmatprep.subr.bf16.mxu0 0
        %585 = vmatpush2.bf16.msra.mxu0 0
        %586 = vmatprep.subr.bf16.mxu0 0
        %587 = vmatpush2.bf16.msra.mxu0 0
        %588 = vmatprep.subr.bf16.mxu0 0
        %589 = vmatpush2.bf16.msra.mxu0 0
        %590 = vmatprep.subr.bf16.mxu0 0
        %591 = vmatpush2.bf16.msra.mxu0 0
        %592 = vmatprep.subr.bf16.mxu0 0
        %593 = vmatpush2.bf16.msra.mxu0 0
        %594 = vmatprep.subr.bf16.mxu0 0
        %595 = vmatpush2.bf16.msra.mxu0 0
        %596 = vmatprep.subr.bf16.mxu0 0
        %597 = vmatpush2.bf16.msra.mxu0 0
        %598 = vmatprep.mubr.bf16.mxu0 0
        %599 = vmatmul.mubr.bf16.gmra.mxu0 %v282
        %v600 = vpop.f32.mrf.mxu0
        %v601 = vadd.f32 0.0, %v600
        %v602 = vpop.f32.mrf.mxu0
        %v603 = vpop.f32.mrf.mxu0
        %v604 = vpop.f32.mrf.mxu0
        %605 = vdwg.mxu0
        %v607 = vcombine.high %v601, %v601
        %v609 = vunpack.c.l.s4 1966171168
        %v610 = vunpack.c.0.s8 %v609
        %v611 = vlaneseq
        %v612 = vshrl.u32 %v611, 7
        %v613 = vsub.s32 %v610, %v612
        %v614 = vrot.slane %v601, %v613
        %v616 = vunpack.c.l.s4 1966171168
        %v617 = vunpack.c.0.s8 %v616
        %v618 = vlaneseq
        %v619 = vshrl.u32 %v618, 7
        %v620 = vsub.s32 %v617, %v619
        %v621 = vrot.slane %v607, %v620
        %v622 = vcombine.high %v614, %v614
        %v623 = vcombine.high %v621, %v621
        %v625 = vunpack.c.l.s4 1966171168
        %v626 = vunpack.c.0.s8 %v625
        %v627 = vlaneseq
        %v628 = vshrl.u32 %v627, 7
        %v629 = vsub.s32 %v626, %v628
        %v630 = vrot.slane %v614, %v629
        %v632 = vunpack.c.l.s4 1966171168
        %v633 = vunpack.c.0.s8 %v632
        %v634 = vlaneseq
        %v635 = vshrl.u32 %v634, 7
        %v636 = vsub.s32 %v633, %v635
        %v637 = vrot.slane %v621, %v636
        %v639 = vunpack.c.l.s4 1966171168
        %v640 = vunpack.c.0.s8 %v639
        %v641 = vlaneseq
        %v642 = vshrl.u32 %v641, 7
        %v643 = vsub.s32 %v640, %v642
        %v644 = vrot.slane %v622, %v643
        %v646 = vunpack.c.l.s4 1966171168
        %v647 = vunpack.c.0.s8 %v646
        %v648 = vlaneseq
        %v649 = vshrl.u32 %v648, 7
        %v650 = vsub.s32 %v647, %v649
        %v651 = vrot.slane %v623, %v650
        %v652 = vcombine.high %v630, %v630
        %v653 = vcombine.high %v644, %v644
        %660 = vst.msk [vmem:[%s150 + $0x2] sm:$0x1] %vm381, %v630
        %661 = vst.msk [vmem:[%s150 + $0x12] sm:$0x1] %vm381, %v644
        %662 = vst.msk [vmem:[%s150 + $0x22] sm:$0x1] %vm381, %v652
        %663 = vst.msk [vmem:[%s150 + $0x32] sm:$0x1] %vm381, %v653
        %664 = vst.msk [vmem:[%s150 + $0x42] sm:$0x1] %vm381, %v637
        %665 = vst.msk [vmem:[%s150 + $0x52] sm:$0x1] %vm381, %v651
        %666 = vrot.lane.b32.xlu0 %v541, 127
        %v667 = vpop.permute.xlu0 %666
        %v668 = vsel %vm199, %v187, %v183
        %v669 = vsel %vm202, %v190, %v668
        %v670 = vsel %vm205, %v193, %v669
        %v671 = vpack.c.b16 %v670, %v670
        %672 = vrot.lane.b32.xlu0 %v671, 126
        %v673 = vpop.permute.xlu0 %672
        %v674 = vsel %vm188, %v224, %v223
        %v675 = vsel %vm191, %v226, %v674
        %v676 = vsel %vm194, %v228, %v675
        %v677 = vpack.c.b16 %v676, %v676
        %v678 = vsel %vm199, %v184, %v231
        %v679 = vsel %vm202, %v233, %v678
        %v680 = vsel %vm205, %v235, %v679
        %v681 = vpack.c.b16 %v680, %v680
        %682 = vrot.lane.b32.xlu0 %v681, 127
        %v683 = vpop.permute.xlu0 %682
        %684 = vrot.lane.b32.xlu0 %v677, 126
        %v685 = vpop.permute.xlu0 %684
        %v686 = vsel %vm261, %v402, %v412
        %v687 = vsel %vm265, %v686, %v414
        %v689 = vsel %vm268, %v687, %v545
        %v693 = vsel %vm261, %v667, %v673
        %v695 = vsel %vm265, %v693, %v677
        %v697 = vsel %vm268, %v695, %v683
        %v700 = vsel %vm261, %v685, 0
        %702 = vmatprep.subr.bf16.mxu0 0
        %703 = vmatpush1.bf16.msra.mxu0 0
        %704 = vmatprep.subr.bf16.mxu0 0
        %705 = vmatpush1.bf16.msra.mxu0 0
        %706 = vmatprep.subr.bf16.mxu0 0
        %707 = vmatpush1.bf16.msra.mxu0 0
        %708 = vmatprep.subr.bf16.mxu0 0
        %709 = vmatpush1.bf16.msra.mxu0 0
        %710 = vmatprep.subr.bf16.mxu0 0
        %711 = vmatpush1.bf16.msra.mxu0 0
        %712 = vmatprep.subr.bf16.mxu0 0
        %713 = vmatpush1.bf16.msra.mxu0 %v700
        %714 = vmatprep.subr.bf16.mxu0 0
        %715 = vmatpush1.bf16.msra.mxu0 %v697
        %716 = vmatprep.subr.bf16.mxu0 0
        %717 = vmatpush1.bf16.msra.mxu0 %v689
        %718 = vmatprep.subr.bf16.mxu0 0
        %719 = vmatpush2.bf16.msra.mxu0 0
        %720 = vmatprep.subr.bf16.mxu0 0
        %721 = vmatpush2.bf16.msra.mxu0 0
        %722 = vmatprep.subr.bf16.mxu0 0
        %723 = vmatpush2.bf16.msra.mxu0 0
        %724 = vmatprep.subr.bf16.mxu0 0
        %725 = vmatpush2.bf16.msra.mxu0 0
        %726 = vmatprep.subr.bf16.mxu0 0
        %727 = vmatpush2.bf16.msra.mxu0 0
        %728 = vmatprep.subr.bf16.mxu0 0
        %729 = vmatpush2.bf16.msra.mxu0 0
        %730 = vmatprep.subr.bf16.mxu0 0
        %731 = vmatpush2.bf16.msra.mxu0 0
        %732 = vmatprep.subr.bf16.mxu0 0
        %733 = vmatpush2.bf16.msra.mxu0 0
        %734 = vmatprep.mubr.bf16.mxu0 0
        %735 = vmatmul.mubr.bf16.gmra.mxu0 %v282
        %v736 = vpop.f32.mrf.mxu0
        %v737 = vadd.f32 0.0, %v736
        %v738 = vpop.f32.mrf.mxu0
        %v739 = vpop.f32.mrf.mxu0
        %v740 = vpop.f32.mrf.mxu0
        %741 = vdwg.mxu0
        %v743 = vcombine.high %v737, %v737
        %v745 = vunpack.c.l.s4 1966171168
        %v746 = vunpack.c.0.s8 %v745
        %v747 = vlaneseq
        %v748 = vshrl.u32 %v747, 7
        %v749 = vsub.s32 %v746, %v748
        %v750 = vrot.slane %v737, %v749
        %v752 = vunpack.c.l.s4 1966171168
        %v753 = vunpack.c.0.s8 %v752
        %v754 = vlaneseq
        %v755 = vshrl.u32 %v754, 7
        %v756 = vsub.s32 %v753, %v755
        %v757 = vrot.slane %v743, %v756
        %v758 = vcombine.high %v750, %v750
        %v759 = vcombine.high %v757, %v757
        %v761 = vunpack.c.l.s4 1966171168
        %v762 = vunpack.c.0.s8 %v761
        %v763 = vlaneseq
        %v764 = vshrl.u32 %v763, 7
        %v765 = vsub.s32 %v762, %v764
        %v766 = vrot.slane %v750, %v765
        %v768 = vunpack.c.l.s4 1966171168
        %v769 = vunpack.c.0.s8 %v768
        %v770 = vlaneseq
        %v771 = vshrl.u32 %v770, 7
        %v772 = vsub.s32 %v769, %v771
        %v773 = vrot.slane %v757, %v772
        %v775 = vunpack.c.l.s4 1966171168
        %v776 = vunpack.c.0.s8 %v775
        %v777 = vlaneseq
        %v778 = vshrl.u32 %v777, 7
        %v779 = vsub.s32 %v776, %v778
        %v780 = vrot.slane %v758, %v779
        %v782 = vunpack.c.l.s4 1966171168
        %v783 = vunpack.c.0.s8 %v782
        %v784 = vlaneseq
        %v785 = vshrl.u32 %v784, 7
        %v786 = vsub.s32 %v783, %v785
        %v787 = vrot.slane %v759, %v786
        %v788 = vcombine.high %v766, %v766
        %v789 = vcombine.high %v780, %v780
        %796 = vst.msk [vmem:[%s150 + $0x3] sm:$0x1] %vm381, %v766
        %797 = vst.msk [vmem:[%s150 + $0x13] sm:$0x1] %vm381, %v780
        %798 = vst.msk [vmem:[%s150 + $0x23] sm:$0x1] %vm381, %v788
        %799 = vst.msk [vmem:[%s150 + $0x33] sm:$0x1] %vm381, %v789
        %800 = vst.msk [vmem:[%s150 + $0x43] sm:$0x1] %vm381, %v773
        %801 = vst.msk [vmem:[%s150 + $0x53] sm:$0x1] %vm381, %v787
        %802 = vrot.lane.b32.xlu0 %v671, 127
        %v803 = vpop.permute.xlu0 %802
        %804 = vrot.lane.b32.xlu0 %v677, 127
        %v805 = vpop.permute.xlu0 %804
        %806 = vrot.lane.b32.xlu0 %v681, 126
        %v807 = vpop.permute.xlu0 %806
        %v808 = vsel %vm188, %v250, %v249
        %v809 = vsel %vm191, %v252, %v808
        %v810 = vsel %vm194, %v254, %v809
        %v811 = vpack.c.b16 %v810, %v810
        %v812 = vsel %vm199, %v243, %v242
        %v813 = vsel %vm202, %v185, %v812
        %v814 = vsel %vm205, %v246, %v813
        %v815 = vpack.c.b16 %v814, %v814
        %816 = vrot.lane.b32.xlu0 %v815, 127
        %v817 = vpop.permute.xlu0 %816
        %818 = vrot.lane.b32.xlu0 %v811, 126
        %v819 = vpop.permute.xlu0 %818
        %v821 = vsel %vm261, %v541, %v803
        %v822 = vsel %vm265, %v821, %v549
        %v824 = vsel %vm268, %v822, %v681
        %v828 = vsel %vm261, %v805, %v807
        %v830 = vsel %vm265, %v828, %v811
        %v832 = vsel %vm268, %v830, %v817
        %v835 = vsel %vm261, %v819, 0
        %837 = vmatprep.subr.bf16.mxu0 0
        %838 = vmatpush1.bf16.msra.mxu0 0
        %839 = vmatprep.subr.bf16.mxu0 0
        %840 = vmatpush1.bf16.msra.mxu0 0
        %841 = vmatprep.subr.bf16.mxu0 0
        %842 = vmatpush1.bf16.msra.mxu0 0
        %843 = vmatprep.subr.bf16.mxu0 0
        %844 = vmatpush1.bf16.msra.mxu0 0
        %845 = vmatprep.subr.bf16.mxu0 0
        %846 = vmatpush1.bf16.msra.mxu0 0
        %847 = vmatprep.subr.bf16.mxu0 0
        %848 = vmatpush1.bf16.msra.mxu0 %v835
        %849 = vmatprep.subr.bf16.mxu0 0
        %850 = vmatpush1.bf16.msra.mxu0 %v832
        %851 = vmatprep.subr.bf16.mxu0 0
        %852 = vmatpush1.bf16.msra.mxu0 %v824
        %853 = vmatprep.subr.bf16.mxu0 0
        %854 = vmatpush2.bf16.msra.mxu0 0
        %855 = vmatprep.subr.bf16.mxu0 0
        %856 = vmatpush2.bf16.msra.mxu0 0
        %857 = vmatprep.subr.bf16.mxu0 0
        %858 = vmatpush2.bf16.msra.mxu0 0
        %859 = vmatprep.subr.bf16.mxu0 0
        %860 = vmatpush2.bf16.msra.mxu0 0
        %861 = vmatprep.subr.bf16.mxu0 0
        %862 = vmatpush2.bf16.msra.mxu0 0
        %863 = vmatprep.subr.bf16.mxu0 0
        %864 = vmatpush2.bf16.msra.mxu0 0
        %865 = vmatprep.subr.bf16.mxu0 0
        %866 = vmatpush2.bf16.msra.mxu0 0
        %867 = vmatprep.subr.bf16.mxu0 0
        %868 = vmatpush2.bf16.msra.mxu0 0
        %869 = vmatprep.mubr.bf16.mxu0 0
        %870 = vmatmul.mubr.bf16.gmra.mxu0 %v282
        %v871 = vpop.f32.mrf.mxu0
        %v872 = vadd.f32 0.0, %v871
        %v873 = vpop.f32.mrf.mxu0
        %v874 = vpop.f32.mrf.mxu0
        %v875 = vpop.f32.mrf.mxu0
        %876 = vdwg.mxu0
        %v878 = vcombine.high %v872, %v872
        %v880 = vunpack.c.l.s4 1966171168
        %v881 = vunpack.c.0.s8 %v880
        %v882 = vlaneseq
        %v883 = vshrl.u32 %v882, 7
        %v884 = vsub.s32 %v881, %v883
        %v885 = vrot.slane %v872, %v884
        %v887 = vunpack.c.l.s4 1966171168
        %v888 = vunpack.c.0.s8 %v887
        %v889 = vlaneseq
        %v890 = vshrl.u32 %v889, 7
        %v891 = vsub.s32 %v888, %v890
        %v892 = vrot.slane %v878, %v891
        %v893 = vcombine.high %v885, %v885
        %v894 = vcombine.high %v892, %v892
        %v896 = vunpack.c.l.s4 1966171168
        %v897 = vunpack.c.0.s8 %v896
        %v898 = vlaneseq
        %v899 = vshrl.u32 %v898, 7
        %v900 = vsub.s32 %v897, %v899
        %v901 = vrot.slane %v885, %v900
        %v903 = vunpack.c.l.s4 1966171168
        %v904 = vunpack.c.0.s8 %v903
        %v905 = vlaneseq
        %v906 = vshrl.u32 %v905, 7
        %v907 = vsub.s32 %v904, %v906
        %v908 = vrot.slane %v892, %v907
        %v910 = vunpack.c.l.s4 1966171168
        %v911 = vunpack.c.0.s8 %v910
        %v912 = vlaneseq
        %v913 = vshrl.u32 %v912, 7
        %v914 = vsub.s32 %v911, %v913
        %v915 = vrot.slane %v893, %v914
        %v917 = vunpack.c.l.s4 1966171168
        %v918 = vunpack.c.0.s8 %v917
        %v919 = vlaneseq
        %v920 = vshrl.u32 %v919, 7
        %v921 = vsub.s32 %v918, %v920
        %v922 = vrot.slane %v894, %v921
        %v923 = vcombine.high %v901, %v901
        %v924 = vcombine.high %v915, %v915
        %931 = vst.msk [vmem:[%s150 + $0x4] sm:$0x1] %vm381, %v901
        %932 = vst.msk [vmem:[%s150 + $0x14] sm:$0x1] %vm381, %v915
        %933 = vst.msk [vmem:[%s150 + $0x24] sm:$0x1] %vm381, %v923
        %934 = vst.msk [vmem:[%s150 + $0x34] sm:$0x1] %vm381, %v924
        %935 = vst.msk [vmem:[%s150 + $0x44] sm:$0x1] %vm381, %v908
        %936 = vst.msk [vmem:[%s150 + $0x54] sm:$0x1] %vm381, %v922
        %937 = vrot.lane.b32.xlu0 %v811, 127
        %v938 = vpop.permute.xlu0 %937
        %939 = vrot.lane.b32.xlu0 %v815, 126
        %v940 = vpop.permute.xlu0 %939
        %v941 = vsel %vm188, %v404, %v403
        %v942 = vsel %vm191, %v406, %v941
        %v943 = vsel %vm194, %v408, %v942
        %v944 = vpack.c.b16 %v943, %v943
        %v945 = vsel %vm199, %v397, %v396
        %v946 = vsel %vm202, %v399, %v945
        %v947 = vsel %vm205, %v186, %v946
        %v948 = vpack.c.b16 %v947, %v947
        %949 = vrot.lane.b32.xlu0 %v948, 127
        %v950 = vpop.permute.xlu0 %949
        %951 = vrot.lane.b32.xlu0 %v944, 126
        %v952 = vpop.permute.xlu0 %951
        %v953 = vsel %vm261, %v677, %v683
        %v954 = vsel %vm265, %v953, %v685
        %v956 = vsel %vm268, %v954, %v815
        %v960 = vsel %vm261, %v938, %v940
        %v962 = vsel %vm265, %v960, %v944
        %v964 = vsel %vm268, %v962, %v950
        %v967 = vsel %vm261, %v952, 0
        %969 = vmatprep.subr.bf16.mxu0 0
        %970 = vmatpush1.bf16.msra.mxu0 0
        %971 = vmatprep.subr.bf16.mxu0 0
        %972 = vmatpush1.bf16.msra.mxu0 0
        %973 = vmatprep.subr.bf16.mxu0 0
        %974 = vmatpush1.bf16.msra.mxu0 0
        %975 = vmatprep.subr.bf16.mxu0 0
        %976 = vmatpush1.bf16.msra.mxu0 0
        %977 = vmatprep.subr.bf16.mxu0 0
        %978 = vmatpush1.bf16.msra.mxu0 0
        %979 = vmatprep.subr.bf16.mxu0 0
        %980 = vmatpush1.bf16.msra.mxu0 %v967
        %981 = vmatprep.subr.bf16.mxu0 0
        %982 = vmatpush1.bf16.msra.mxu0 %v964
        %983 = vmatprep.subr.bf16.mxu0 0
        %984 = vmatpush1.bf16.msra.mxu0 %v956
        %985 = vmatprep.subr.bf16.mxu0 0
        %986 = vmatpush2.bf16.msra.mxu0 0
        %987 = vmatprep.subr.bf16.mxu0 0
        %988 = vmatpush2.bf16.msra.mxu0 0
        %989 = vmatprep.subr.bf16.mxu0 0
        %990 = vmatpush2.bf16.msra.mxu0 0
        %991 = vmatprep.subr.bf16.mxu0 0
        %992 = vmatpush2.bf16.msra.mxu0 0
        %993 = vmatprep.subr.bf16.mxu0 0
        %994 = vmatpush2.bf16.msra.mxu0 0
        %995 = vmatprep.subr.bf16.mxu0 0
        %996 = vmatpush2.bf16.msra.mxu0 0
        %997 = vmatprep.subr.bf16.mxu0 0
        %998 = vmatpush2.bf16.msra.mxu0 0
        %999 = vmatprep.subr.bf16.mxu0 0
        %1000 = vmatpush2.bf16.msra.mxu0 0
        %1001 = vmatprep.mubr.bf16.mxu0 0
        %1002 = vmatmul.mubr.bf16.gmra.mxu0 %v282
        %v1003 = vpop.f32.mrf.mxu0
        %v1004 = vadd.f32 0.0, %v1003
        %v1005 = vpop.f32.mrf.mxu0
        %v1006 = vpop.f32.mrf.mxu0
        %v1007 = vpop.f32.mrf.mxu0
        %1008 = vdwg.mxu0
        %v1010 = vcombine.high %v1004, %v1004
        %v1012 = vunpack.c.l.s4 1966171168
        %v1013 = vunpack.c.0.s8 %v1012
        %v1014 = vlaneseq
        %v1015 = vshrl.u32 %v1014, 7
        %v1016 = vsub.s32 %v1013, %v1015
        %v1017 = vrot.slane %v1004, %v1016
        %v1019 = vunpack.c.l.s4 1966171168
        %v1020 = vunpack.c.0.s8 %v1019
        %v1021 = vlaneseq
        %v1022 = vshrl.u32 %v1021, 7
        %v1023 = vsub.s32 %v1020, %v1022
        %v1024 = vrot.slane %v1010, %v1023
        %v1025 = vcombine.high %v1017, %v1017
        %v1026 = vcombine.high %v1024, %v1024
        %v1028 = vunpack.c.l.s4 1966171168
        %v1029 = vunpack.c.0.s8 %v1028
        %v1030 = vlaneseq
        %v1031 = vshrl.u32 %v1030, 7
        %v1032 = vsub.s32 %v1029, %v1031
        %v1033 = vrot.slane %v1017, %v1032
        %v1035 = vunpack.c.l.s4 1966171168
        %v1036 = vunpack.c.0.s8 %v1035
        %v1037 = vlaneseq
        %v1038 = vshrl.u32 %v1037, 7
        %v1039 = vsub.s32 %v1036, %v1038
        %v1040 = vrot.slane %v1024, %v1039
        %v1042 = vunpack.c.l.s4 1966171168
        %v1043 = vunpack.c.0.s8 %v1042
        %v1044 = vlaneseq
        %v1045 = vshrl.u32 %v1044, 7
        %v1046 = vsub.s32 %v1043, %v1045
        %v1047 = vrot.slane %v1025, %v1046
        %v1049 = vunpack.c.l.s4 1966171168
        %v1050 = vunpack.c.0.s8 %v1049
        %v1051 = vlaneseq
        %v1052 = vshrl.u32 %v1051, 7
        %v1053 = vsub.s32 %v1050, %v1052
        %v1054 = vrot.slane %v1026, %v1053
        %v1055 = vcombine.high %v1033, %v1033
        %v1056 = vcombine.high %v1047, %v1047
        %1063 = vst.msk [vmem:[%s150 + $0x5] sm:$0x1] %vm381, %v1033
        %1064 = vst.msk [vmem:[%s150 + $0x15] sm:$0x1] %vm381, %v1047
        %1065 = vst.msk [vmem:[%s150 + $0x25] sm:$0x1] %vm381, %v1055
        %1066 = vst.msk [vmem:[%s150 + $0x35] sm:$0x1] %vm381, %v1056
        %1067 = vst.msk [vmem:[%s150 + $0x45] sm:$0x1] %vm381, %v1040
        %1068 = vst.msk [vmem:[%s150 + $0x55] sm:$0x1] %vm381, %v1054
        %1069 = vrot.lane.b32.xlu0 %v944, 127
        %v1070 = vpop.permute.xlu0 %1069
        %1071 = vrot.lane.b32.xlu0 %v948, 126
        %v1072 = vpop.permute.xlu0 %1071
        %v1077 = vunpack.c.l.b16 %v159
        %v1078 = vunpack.c.l.b16 %v162
        %v1079 = vunpack.c.l.b16 %v165
        %v1080 = vunpack.c.l.b16 %v168
        %v1081 = vpack.c.b16 %v1077, %v1077
        %v1082 = vpack.c.b16 %v1078, %v1078
        %v1083 = vpack.c.b16 %v1079, %v1079
        %v1084 = vpack.c.b16 %v1080, %v1080
        %v1085 = vunpack.c.h.b16 %v1081
        %v1086 = vunpack.c.h.b16 %v1082
        %v1087 = vunpack.c.h.b16 %v1083
        %v1088 = vunpack.c.h.b16 %v1084
        %v1089 = vrot.slane %v1086, 7
        %v1090 = vsel %vm188, %v1089, %v1085
        %v1091 = vrot.slane %v1087, 6
        %v1092 = vsel %vm191, %v1091, %v1090
        %v1093 = vrot.slane %v1088, 5
        %v1094 = vsel %vm194, %v1093, %v1092
        %v1095 = vpack.c.b16 %v1094, %v1094
        %v1096 = vunpack.c.l.b16 %v1081
        %v1097 = vunpack.c.l.b16 %v1082
        %v1098 = vunpack.c.l.b16 %v1083
        %v1099 = vunpack.c.l.b16 %v1084
        %v1100 = vrot.slane %v1096, 4
        %v1101 = vrot.slane %v1097, 3
        %v1102 = vsel %vm199, %v1101, %v1100
        %v1103 = vrot.slane %v1098, 2
        %v1104 = vsel %vm202, %v1103, %v1102
        %v1105 = vrot.slane %v1099, 1
        %v1106 = vsel %vm205, %v1105, %v1104
        %v1107 = vpack.c.b16 %v1106, %v1106
        %1108 = vrot.lane.b32.xlu0 %v1107, 127
        %v1109 = vpop.permute.xlu0 %1108
        %v1110 = vrot.slane %v1097, 7
        %v1111 = vsel %vm188, %v1110, %v1096
        %v1112 = vrot.slane %v1098, 6
        %v1113 = vsel %vm191, %v1112, %v1111
        %v1114 = vrot.slane %v1099, 5
        %v1115 = vsel %vm194, %v1114, %v1113
        %v1116 = vpack.c.b16 %v1115, %v1115
        %1117 = vrot.lane.b32.xlu0 %v1116, 126
        %v1118 = vpop.permute.xlu0 %1117
        %v1119 = vsel %vm261, %v811, %v817
        %v1120 = vsel %vm265, %v1119, %v819
        %v1122 = vsel %vm268, %v1120, %v948
        %v1126 = vsel %vm261, %v1070, %v1072
        %v1128 = vsel %vm265, %v1126, %v1095
        %v1130 = vsel %vm268, %v1128, %v1109
        %v1133 = vsel %vm261, %v1118, 0
        %1135 = vmatprep.subr.bf16.mxu0 0
        %1136 = vmatpush1.bf16.msra.mxu0 0
        %1137 = vmatprep.subr.bf16.mxu0 0
        %1138 = vmatpush1.bf16.msra.mxu0 0
        %1139 = vmatprep.subr.bf16.mxu0 0
        %1140 = vmatpush1.bf16.msra.mxu0 0
        %1141 = vmatprep.subr.bf16.mxu0 0
        %1142 = vmatpush1.bf16.msra.mxu0 0
        %1143 = vmatprep.subr.bf16.mxu0 0
        %1144 = vmatpush1.bf16.msra.mxu0 0
        %1145 = vmatprep.subr.bf16.mxu0 0
        %1146 = vmatpush1.bf16.msra.mxu0 %v1133
        %1147 = vmatprep.subr.bf16.mxu0 0
        %1148 = vmatpush1.bf16.msra.mxu0 %v1130
        %1149 = vmatprep.subr.bf16.mxu0 0
        %1150 = vmatpush1.bf16.msra.mxu0 %v1122
        %1151 = vmatprep.subr.bf16.mxu0 0
        %1152 = vmatpush2.bf16.msra.mxu0 0
        %1153 = vmatprep.subr.bf16.mxu0 0
        %1154 = vmatpush2.bf16.msra.mxu0 0
        %1155 = vmatprep.subr.bf16.mxu0 0
        %1156 = vmatpush2.bf16.msra.mxu0 0
        %1157 = vmatprep.subr.bf16.mxu0 0
        %1158 = vmatpush2.bf16.msra.mxu0 0
        %1159 = vmatprep.subr.bf16.mxu0 0
        %1160 = vmatpush2.bf16.msra.mxu0 0
        %1161 = vmatprep.subr.bf16.mxu0 0
        %1162 = vmatpush2.bf16.msra.mxu0 0
        %1163 = vmatprep.subr.bf16.mxu0 0
        %1164 = vmatpush2.bf16.msra.mxu0 0
        %1165 = vmatprep.subr.bf16.mxu0 0
        %1166 = vmatpush2.bf16.msra.mxu0 0
        %1167 = vmatprep.mubr.bf16.mxu0 0
        %1168 = vmatmul.mubr.bf16.gmra.mxu0 %v282
        %v1169 = vpop.f32.mrf.mxu0
        %v1170 = vadd.f32 0.0, %v1169
        %v1171 = vpop.f32.mrf.mxu0
        %v1172 = vpop.f32.mrf.mxu0
        %v1173 = vpop.f32.mrf.mxu0
        %1174 = vdwg.mxu0
        %v1176 = vcombine.high %v1170, %v1170
        %v1178 = vunpack.c.l.s4 1966171168
        %v1179 = vunpack.c.0.s8 %v1178
        %v1180 = vlaneseq
        %v1181 = vshrl.u32 %v1180, 7
        %v1182 = vsub.s32 %v1179, %v1181
        %v1183 = vrot.slane %v1170, %v1182
        %v1185 = vunpack.c.l.s4 1966171168
        %v1186 = vunpack.c.0.s8 %v1185
        %v1187 = vlaneseq
        %v1188 = vshrl.u32 %v1187, 7
        %v1189 = vsub.s32 %v1186, %v1188
        %v1190 = vrot.slane %v1176, %v1189
        %v1191 = vcombine.high %v1183, %v1183
        %v1192 = vcombine.high %v1190, %v1190
        %v1194 = vunpack.c.l.s4 1966171168
        %v1195 = vunpack.c.0.s8 %v1194
        %v1196 = vlaneseq
        %v1197 = vshrl.u32 %v1196, 7
        %v1198 = vsub.s32 %v1195, %v1197
        %v1199 = vrot.slane %v1183, %v1198
        %v1201 = vunpack.c.l.s4 1966171168
        %v1202 = vunpack.c.0.s8 %v1201
        %v1203 = vlaneseq
        %v1204 = vshrl.u32 %v1203, 7
        %v1205 = vsub.s32 %v1202, %v1204
        %v1206 = vrot.slane %v1190, %v1205
        %v1208 = vunpack.c.l.s4 1966171168
        %v1209 = vunpack.c.0.s8 %v1208
        %v1210 = vlaneseq
        %v1211 = vshrl.u32 %v1210, 7
        %v1212 = vsub.s32 %v1209, %v1211
        %v1213 = vrot.slane %v1191, %v1212
        %v1215 = vunpack.c.l.s4 1966171168
        %v1216 = vunpack.c.0.s8 %v1215
        %v1217 = vlaneseq
        %v1218 = vshrl.u32 %v1217, 7
        %v1219 = vsub.s32 %v1216, %v1218
        %v1220 = vrot.slane %v1192, %v1219
        %v1221 = vcombine.high %v1199, %v1199
        %v1222 = vcombine.high %v1213, %v1213
        %1229 = vst.msk [vmem:[%s150 + $0x6] sm:$0x1] %vm381, %v1199
        %1230 = vst.msk [vmem:[%s150 + $0x16] sm:$0x1] %vm381, %v1213
        %1231 = vst.msk [vmem:[%s150 + $0x26] sm:$0x1] %vm381, %v1221
        %1232 = vst.msk [vmem:[%s150 + $0x36] sm:$0x1] %vm381, %v1222
        %1233 = vst.msk [vmem:[%s150 + $0x46] sm:$0x1] %vm381, %v1206
        %1234 = vst.msk [vmem:[%s150 + $0x56] sm:$0x1] %vm381, %v1220
        %1235 = vrot.lane.b32.xlu0 %v1116, 127
        %v1236 = vpop.permute.xlu0 %1235
        %1237 = vrot.lane.b32.xlu0 %v1107, 126
        %v1238 = vpop.permute.xlu0 %1237
        %v1239 = vrot.slane %v1096, 1
        %v1240 = vsel %vm188, %v1097, %v1239
        %v1241 = vrot.slane %v1098, 7
        %v1242 = vsel %vm191, %v1241, %v1240
        %v1243 = vrot.slane %v1099, 6
        %v1244 = vsel %vm194, %v1243, %v1242
        %v1245 = vpack.c.b16 %v1244, %v1244
        %v1246 = vrot.slane %v1096, 5
        %v1247 = vrot.slane %v1097, 4
        %v1248 = vsel %vm199, %v1247, %v1246
        %v1249 = vrot.slane %v1098, 3
        %v1250 = vsel %vm202, %v1249, %v1248
        %v1251 = vrot.slane %v1099, 2
        %v1252 = vsel %vm205, %v1251, %v1250
        %v1253 = vpack.c.b16 %v1252, %v1252
        %1254 = vrot.lane.b32.xlu0 %v1253, 127
        %v1255 = vpop.permute.xlu0 %1254
        %1256 = vrot.lane.b32.xlu0 %v1245, 126
        %v1257 = vpop.permute.xlu0 %1256
        %v1258 = vsel %vm261, %v944, %v950
        %v1259 = vsel %vm265, %v1258, %v952
        %v1261 = vsel %vm268, %v1259, %v1107
        %v1265 = vsel %vm261, %v1236, %v1238
        %v1267 = vsel %vm265, %v1265, %v1245
        %v1269 = vsel %vm268, %v1267, %v1255
        %v1272 = vsel %vm261, %v1257, 0
        %1274 = vmatprep.subr.bf16.mxu0 0
        %1275 = vmatpush1.bf16.msra.mxu0 0
        %1276 = vmatprep.subr.bf16.mxu0 0
        %1277 = vmatpush1.bf16.msra.mxu0 0
        %1278 = vmatprep.subr.bf16.mxu0 0
        %1279 = vmatpush1.bf16.msra.mxu0 0
        %1280 = vmatprep.subr.bf16.mxu0 0
        %1281 = vmatpush1.bf16.msra.mxu0 0
        %1282 = vmatprep.subr.bf16.mxu0 0
        %1283 = vmatpush1.bf16.msra.mxu0 0
        %1284 = vmatprep.subr.bf16.mxu0 0
        %1285 = vmatpush1.bf16.msra.mxu0 %v1272
        %1286 = vmatprep.subr.bf16.mxu0 0
        %1287 = vmatpush1.bf16.msra.mxu0 %v1269
        %1288 = vmatprep.subr.bf16.mxu0 0
        %1289 = vmatpush1.bf16.msra.mxu0 %v1261
        %1290 = vmatprep.subr.bf16.mxu0 0
        %1291 = vmatpush2.bf16.msra.mxu0 0
        %1292 = vmatprep.subr.bf16.mxu0 0
        %1293 = vmatpush2.bf16.msra.mxu0 0
        %1294 = vmatprep.subr.bf16.mxu0 0
        %1295 = vmatpush2.bf16.msra.mxu0 0
        %1296 = vmatprep.subr.bf16.mxu0 0
        %1297 = vmatpush2.bf16.msra.mxu0 0
        %1298 = vmatprep.subr.bf16.mxu0 0
        %1299 = vmatpush2.bf16.msra.mxu0 0
        %1300 = vmatprep.subr.bf16.mxu0 0
        %1301 = vmatpush2.bf16.msra.mxu0 0
        %1302 = vmatprep.subr.bf16.mxu0 0
        %1303 = vmatpush2.bf16.msra.mxu0 0
        %1304 = vmatprep.subr.bf16.mxu0 0
        %1305 = vmatpush2.bf16.msra.mxu0 0
        %1306 = vmatprep.mubr.bf16.mxu0 0
        %1307 = vmatmul.mubr.bf16.gmra.mxu0 %v282
        %v1308 = vpop.f32.mrf.mxu0
        %v1309 = vadd.f32 0.0, %v1308
        %v1310 = vpop.f32.mrf.mxu0
        %v1311 = vpop.f32.mrf.mxu0
        %v1312 = vpop.f32.mrf.mxu0
        %1313 = vdwg.mxu0
        %v1315 = vcombine.high %v1309, %v1309
        %v1317 = vunpack.c.l.s4 1966171168
        %v1318 = vunpack.c.0.s8 %v1317
        %v1319 = vlaneseq
        %v1320 = vshrl.u32 %v1319, 7
        %v1321 = vsub.s32 %v1318, %v1320
        %v1322 = vrot.slane %v1309, %v1321
        %v1324 = vunpack.c.l.s4 1966171168
        %v1325 = vunpack.c.0.s8 %v1324
        %v1326 = vlaneseq
        %v1327 = vshrl.u32 %v1326, 7
        %v1328 = vsub.s32 %v1325, %v1327
        %v1329 = vrot.slane %v1315, %v1328
        %v1330 = vcombine.high %v1322, %v1322
        %v1331 = vcombine.high %v1329, %v1329
        %v1333 = vunpack.c.l.s4 1966171168
        %v1334 = vunpack.c.0.s8 %v1333
        %v1335 = vlaneseq
        %v1336 = vshrl.u32 %v1335, 7
        %v1337 = vsub.s32 %v1334, %v1336
        %v1338 = vrot.slane %v1322, %v1337
        %v1340 = vunpack.c.l.s4 1966171168
        %v1341 = vunpack.c.0.s8 %v1340
        %v1342 = vlaneseq
        %v1343 = vshrl.u32 %v1342, 7
        %v1344 = vsub.s32 %v1341, %v1343
        %v1345 = vrot.slane %v1329, %v1344
        %v1347 = vunpack.c.l.s4 1966171168
        %v1348 = vunpack.c.0.s8 %v1347
        %v1349 = vlaneseq
        %v1350 = vshrl.u32 %v1349, 7
        %v1351 = vsub.s32 %v1348, %v1350
        %v1352 = vrot.slane %v1330, %v1351
        %v1354 = vunpack.c.l.s4 1966171168
        %v1355 = vunpack.c.0.s8 %v1354
        %v1356 = vlaneseq
        %v1357 = vshrl.u32 %v1356, 7
        %v1358 = vsub.s32 %v1355, %v1357
        %v1359 = vrot.slane %v1331, %v1358
        %v1360 = vcombine.high %v1338, %v1338
        %v1361 = vcombine.high %v1352, %v1352
        %1368 = vst.msk [vmem:[%s150 + $0x7] sm:$0x1] %vm381, %v1338
        %1369 = vst.msk [vmem:[%s150 + $0x17] sm:$0x1] %vm381, %v1352
        %1370 = vst.msk [vmem:[%s150 + $0x27] sm:$0x1] %vm381, %v1360
        %1371 = vst.msk [vmem:[%s150 + $0x37] sm:$0x1] %vm381, %v1361
        %1372 = vst.msk [vmem:[%s150 + $0x47] sm:$0x1] %vm381, %v1345
        %1373 = vst.msk [vmem:[%s150 + $0x57] sm:$0x1] %vm381, %v1359
        %1374 = vrot.lane.b32.xlu0 %v1095, 126
        %v1375 = vpop.permute.xlu0 %1374
        %1376 = vrot.lane.b32.xlu0 %v1245, 127
        %v1377 = vpop.permute.xlu0 %1376
        %1378 = vrot.lane.b32.xlu0 %v1253, 126
        %v1379 = vpop.permute.xlu0 %1378
        %v1380 = vrot.slane %v1096, 2
        %v1381 = vrot.slane %v1097, 1
        %v1382 = vsel %vm188, %v1381, %v1380
        %v1383 = vsel %vm191, %v1098, %v1382
        %v1384 = vrot.slane %v1099, 7
        %v1385 = vsel %vm194, %v1384, %v1383
        %v1386 = vpack.c.b16 %v1385, %v1385
        %v1387 = vrot.slane %v1096, 6
        %v1388 = vrot.slane %v1097, 5
        %v1389 = vsel %vm199, %v1388, %v1387
        %v1390 = vrot.slane %v1098, 4
        %v1391 = vsel %vm202, %v1390, %v1389
        %v1392 = vrot.slane %v1099, 3
        %v1393 = vsel %vm205, %v1392, %v1391
        %v1394 = vpack.c.b16 %v1393, %v1393
        %1395 = vrot.lane.b32.xlu0 %v1394, 127
        %v1396 = vpop.permute.xlu0 %1395
        %1397 = vrot.lane.b32.xlu0 %v1386, 126
        %v1398 = vpop.permute.xlu0 %1397
        %v1400 = vsel %vm261, %v1116, %v1109
        %v1402 = vsel %vm265, %v1400, %v1375
        %v1404 = vsel %vm268, %v1402, %v1253
        %v1408 = vsel %vm261, %v1377, %v1379
        %v1410 = vsel %vm265, %v1408, %v1386
        %v1412 = vsel %vm268, %v1410, %v1396
        %v1415 = vsel %vm261, %v1398, 0
        %1417 = vmatprep.subr.bf16.mxu0 0
        %1418 = vmatpush1.bf16.msra.mxu0 0
        %1419 = vmatprep.subr.bf16.mxu0 0
        %1420 = vmatpush1.bf16.msra.mxu0 0
        %1421 = vmatprep.subr.bf16.mxu0 0
        %1422 = vmatpush1.bf16.msra.mxu0 0
        %1423 = vmatprep.subr.bf16.mxu0 0
        %1424 = vmatpush1.bf16.msra.mxu0 0
        %1425 = vmatprep.subr.bf16.mxu0 0
        %1426 = vmatpush1.bf16.msra.mxu0 0
        %1427 = vmatprep.subr.bf16.mxu0 0
        %1428 = vmatpush1.bf16.msra.mxu0 %v1415
        %1429 = vmatprep.subr.bf16.mxu0 0
        %1430 = vmatpush1.bf16.msra.mxu0 %v1412
        %1431 = vmatprep.subr.bf16.mxu0 0
        %1432 = vmatpush1.bf16.msra.mxu0 %v1404
        %1433 = vmatprep.subr.bf16.mxu0 0
        %1434 = vmatpush2.bf16.msra.mxu0 0
        %1435 = vmatprep.subr.bf16.mxu0 0
        %1436 = vmatpush2.bf16.msra.mxu0 0
        %1437 = vmatprep.subr.bf16.mxu0 0
        %1438 = vmatpush2.bf16.msra.mxu0 0
        %1439 = vmatprep.subr.bf16.mxu0 0
        %1440 = vmatpush2.bf16.msra.mxu0 0
        %1441 = vmatprep.subr.bf16.mxu0 0
        %1442 = vmatpush2.bf16.msra.mxu0 0
        %1443 = vmatprep.subr.bf16.mxu0 0
        %1444 = vmatpush2.bf16.msra.mxu0 0
        %1445 = vmatprep.subr.bf16.mxu0 0
        %1446 = vmatpush2.bf16.msra.mxu0 0
        %1447 = vmatprep.subr.bf16.mxu0 0
        %1448 = vmatpush2.bf16.msra.mxu0 0
        %1449 = vmatprep.mubr.bf16.mxu0 0
        %1450 = vmatmul.mubr.bf16.gmra.mxu0 %v282
        %v1451 = vpop.f32.mrf.mxu0
        %v1452 = vadd.f32 0.0, %v1451
        %v1453 = vpop.f32.mrf.mxu0
        %v1454 = vpop.f32.mrf.mxu0
        %v1455 = vpop.f32.mrf.mxu0
        %1456 = vdwg.mxu0
        %v1458 = vcombine.high %v1452, %v1452
        %v1460 = vunpack.c.l.s4 1966171168
        %v1461 = vunpack.c.0.s8 %v1460
        %v1462 = vlaneseq
        %v1463 = vshrl.u32 %v1462, 7
        %v1464 = vsub.s32 %v1461, %v1463
        %v1465 = vrot.slane %v1452, %v1464
        %v1467 = vunpack.c.l.s4 1966171168
        %v1468 = vunpack.c.0.s8 %v1467
        %v1469 = vlaneseq
        %v1470 = vshrl.u32 %v1469, 7
        %v1471 = vsub.s32 %v1468, %v1470
        %v1472 = vrot.slane %v1458, %v1471
        %v1473 = vcombine.high %v1465, %v1465
        %v1474 = vcombine.high %v1472, %v1472
        %v1476 = vunpack.c.l.s4 1966171168
        %v1477 = vunpack.c.0.s8 %v1476
        %v1478 = vlaneseq
        %v1479 = vshrl.u32 %v1478, 7
        %v1480 = vsub.s32 %v1477, %v1479
        %v1481 = vrot.slane %v1465, %v1480
        %v1483 = vunpack.c.l.s4 1966171168
        %v1484 = vunpack.c.0.s8 %v1483
        %v1485 = vlaneseq
        %v1486 = vshrl.u32 %v1485, 7
        %v1487 = vsub.s32 %v1484, %v1486
        %v1488 = vrot.slane %v1472, %v1487
        %v1490 = vunpack.c.l.s4 1966171168
        %v1491 = vunpack.c.0.s8 %v1490
        %v1492 = vlaneseq
        %v1493 = vshrl.u32 %v1492, 7
        %v1494 = vsub.s32 %v1491, %v1493
        %v1495 = vrot.slane %v1473, %v1494
        %v1497 = vunpack.c.l.s4 1966171168
        %v1498 = vunpack.c.0.s8 %v1497
        %v1499 = vlaneseq
        %v1500 = vshrl.u32 %v1499, 7
        %v1501 = vsub.s32 %v1498, %v1500
        %v1502 = vrot.slane %v1474, %v1501
        %v1503 = vcombine.high %v1481, %v1481
        %v1504 = vcombine.high %v1495, %v1495
        %1511 = vst.msk [vmem:[%s150 + $0x8] sm:$0x1] %vm381, %v1481
        %1512 = vst.msk [vmem:[%s150 + $0x18] sm:$0x1] %vm381, %v1495
        %1513 = vst.msk [vmem:[%s150 + $0x28] sm:$0x1] %vm381, %v1503
        %1514 = vst.msk [vmem:[%s150 + $0x38] sm:$0x1] %vm381, %v1504
        %1515 = vst.msk [vmem:[%s150 + $0x48] sm:$0x1] %vm381, %v1488
        %1516 = vst.msk [vmem:[%s150 + $0x58] sm:$0x1] %vm381, %v1502
        %1517 = vrot.lane.b32.xlu0 %v1386, 127
        %v1518 = vpop.permute.xlu0 %1517
        %1519 = vrot.lane.b32.xlu0 %v1394, 126
        %v1520 = vpop.permute.xlu0 %1519
        %v1521 = vrot.slane %v1096, 3
        %v1522 = vrot.slane %v1097, 2
        %v1523 = vsel %vm188, %v1522, %v1521
        %v1524 = vrot.slane %v1098, 1
        %v1525 = vsel %vm191, %v1524, %v1523
        %v1526 = vsel %vm194, %v1099, %v1525
        %v1527 = vpack.c.b16 %v1526, %v1526
        %v1528 = vrot.slane %v1096, 7
        %v1529 = vrot.slane %v1097, 6
        %v1530 = vsel %vm199, %v1529, %v1528
        %v1531 = vrot.slane %v1098, 5
        %v1532 = vsel %vm202, %v1531, %v1530
        %v1533 = vrot.slane %v1099, 4
        %v1534 = vsel %vm205, %v1533, %v1532
        %v1535 = vpack.c.b16 %v1534, %v1534
        %1536 = vrot.lane.b32.xlu0 %v1535, 127
        %v1537 = vpop.permute.xlu0 %1536
        %1538 = vrot.lane.b32.xlu0 %v1527, 126
        %v1539 = vpop.permute.xlu0 %1538
        %v1540 = vsel %vm261, %v1245, %v1255
        %v1541 = vsel %vm265, %v1540, %v1257
        %v1543 = vsel %vm268, %v1541, %v1394
        %v1547 = vsel %vm261, %v1518, %v1520
        %v1549 = vsel %vm265, %v1547, %v1527
        %v1551 = vsel %vm268, %v1549, %v1537
        %v1554 = vsel %vm261, %v1539, 0
        %1556 = vmatprep.subr.bf16.mxu0 0
        %1557 = vmatpush1.bf16.msra.mxu0 0
        %1558 = vmatprep.subr.bf16.mxu0 0
        %1559 = vmatpush1.bf16.msra.mxu0 0
        %1560 = vmatprep.subr.bf16.mxu0 0
        %1561 = vmatpush1.bf16.msra.mxu0 0
        %1562 = vmatprep.subr.bf16.mxu0 0
        %1563 = vmatpush1.bf16.msra.mxu0 0
        %1564 = vmatprep.subr.bf16.mxu0 0
        %1565 = vmatpush1.bf16.msra.mxu0 0
        %1566 = vmatprep.subr.bf16.mxu0 0
        %1567 = vmatpush1.bf16.msra.mxu0 %v1554
        %1568 = vmatprep.subr.bf16.mxu0 0
        %1569 = vmatpush1.bf16.msra.mxu0 %v1551
        %1570 = vmatprep.subr.bf16.mxu0 0
        %1571 = vmatpush1.bf16.msra.mxu0 %v1543
        %1572 = vmatprep.subr.bf16.mxu0 0
        %1573 = vmatpush2.bf16.msra.mxu0 0
        %1574 = vmatprep.subr.bf16.mxu0 0
        %1575 = vmatpush2.bf16.msra.mxu0 0
        %1576 = vmatprep.subr.bf16.mxu0 0
        %1577 = vmatpush2.bf16.msra.mxu0 0
        %1578 = vmatprep.subr.bf16.mxu0 0
        %1579 = vmatpush2.bf16.msra.mxu0 0
        %1580 = vmatprep.subr.bf16.mxu0 0
        %1581 = vmatpush2.bf16.msra.mxu0 0
        %1582 = vmatprep.subr.bf16.mxu0 0
        %1583 = vmatpush2.bf16.msra.mxu0 0
        %1584 = vmatprep.subr.bf16.mxu0 0
        %1585 = vmatpush2.bf16.msra.mxu0 0
        %1586 = vmatprep.subr.bf16.mxu0 0
        %1587 = vmatpush2.bf16.msra.mxu0 0
        %1588 = vmatprep.mubr.bf16.mxu0 0
        %1589 = vmatmul.mubr.bf16.gmra.mxu0 %v282
        %v1590 = vpop.f32.mrf.mxu0
        %v1591 = vadd.f32 0.0, %v1590
        %v1592 = vpop.f32.mrf.mxu0
        %v1593 = vpop.f32.mrf.mxu0
        %v1594 = vpop.f32.mrf.mxu0
        %1595 = vdwg.mxu0
        %v1597 = vcombine.high %v1591, %v1591
        %v1599 = vunpack.c.l.s4 1966171168
        %v1600 = vunpack.c.0.s8 %v1599
        %v1601 = vlaneseq
        %v1602 = vshrl.u32 %v1601, 7
        %v1603 = vsub.s32 %v1600, %v1602
        %v1604 = vrot.slane %v1591, %v1603
        %v1606 = vunpack.c.l.s4 1966171168
        %v1607 = vunpack.c.0.s8 %v1606
        %v1608 = vlaneseq
        %v1609 = vshrl.u32 %v1608, 7
        %v1610 = vsub.s32 %v1607, %v1609
        %v1611 = vrot.slane %v1597, %v1610
        %v1612 = vcombine.high %v1604, %v1604
        %v1613 = vcombine.high %v1611, %v1611
        %v1615 = vunpack.c.l.s4 1966171168
        %v1616 = vunpack.c.0.s8 %v1615
        %v1617 = vlaneseq
        %v1618 = vshrl.u32 %v1617, 7
        %v1619 = vsub.s32 %v1616, %v1618
        %v1620 = vrot.slane %v1604, %v1619
        %v1622 = vunpack.c.l.s4 1966171168
        %v1623 = vunpack.c.0.s8 %v1622
        %v1624 = vlaneseq
        %v1625 = vshrl.u32 %v1624, 7
        %v1626 = vsub.s32 %v1623, %v1625
        %v1627 = vrot.slane %v1611, %v1626
        %v1629 = vunpack.c.l.s4 1966171168
        %v1630 = vunpack.c.0.s8 %v1629
        %v1631 = vlaneseq
        %v1632 = vshrl.u32 %v1631, 7
        %v1633 = vsub.s32 %v1630, %v1632
        %v1634 = vrot.slane %v1612, %v1633
        %v1636 = vunpack.c.l.s4 1966171168
        %v1637 = vunpack.c.0.s8 %v1636
        %v1638 = vlaneseq
        %v1639 = vshrl.u32 %v1638, 7
        %v1640 = vsub.s32 %v1637, %v1639
        %v1641 = vrot.slane %v1613, %v1640
        %v1642 = vcombine.high %v1620, %v1620
        %v1643 = vcombine.high %v1634, %v1634
        %1650 = vst.msk [vmem:[%s150 + $0x9] sm:$0x1] %vm381, %v1620
        %1651 = vst.msk [vmem:[%s150 + $0x19] sm:$0x1] %vm381, %v1634
        %1652 = vst.msk [vmem:[%s150 + $0x29] sm:$0x1] %vm381, %v1642
        %1653 = vst.msk [vmem:[%s150 + $0x39] sm:$0x1] %vm381, %v1643
        %1654 = vst.msk [vmem:[%s150 + $0x49] sm:$0x1] %vm381, %v1627
        %1655 = vst.msk [vmem:[%s150 + $0x59] sm:$0x1] %vm381, %v1641
        %1656 = vrot.lane.b32.xlu0 %v1527, 127
        %v1657 = vpop.permute.xlu0 %1656
        %1658 = vrot.lane.b32.xlu0 %v1535, 126
        %v1659 = vpop.permute.xlu0 %1658
        %v1660 = vsel %vm188, %v1101, %v1100
        %v1661 = vsel %vm191, %v1103, %v1660
        %v1662 = vsel %vm194, %v1105, %v1661
        %v1663 = vpack.c.b16 %v1662, %v1662
        %v1664 = vsel %vm199, %v1089, %v1085
        %v1665 = vsel %vm202, %v1091, %v1664
        %v1666 = vsel %vm205, %v1093, %v1665
        %v1667 = vpack.c.b16 %v1666, %v1666
        %1668 = vrot.lane.b32.xlu0 %v1667, 127
        %v1669 = vpop.permute.xlu0 %1668
        %1670 = vrot.lane.b32.xlu0 %v1663, 126
        %v1671 = vpop.permute.xlu0 %1670
        %v1672 = vsel %vm261, %v1386, %v1396
        %v1673 = vsel %vm265, %v1672, %v1398
        %v1675 = vsel %vm268, %v1673, %v1535
        %v1679 = vsel %vm261, %v1657, %v1659
        %v1681 = vsel %vm265, %v1679, %v1663
        %v1683 = vsel %vm268, %v1681, %v1669
        %v1686 = vsel %vm261, %v1671, 0
        %1688 = vmatprep.subr.bf16.mxu0 0
        %1689 = vmatpush1.bf16.msra.mxu0 0
        %1690 = vmatprep.subr.bf16.mxu0 0
        %1691 = vmatpush1.bf16.msra.mxu0 0
        %1692 = vmatprep.subr.bf16.mxu0 0
        %1693 = vmatpush1.bf16.msra.mxu0 0
        %1694 = vmatprep.subr.bf16.mxu0 0
        %1695 = vmatpush1.bf16.msra.mxu0 0
        %1696 = vmatprep.subr.bf16.mxu0 0
        %1697 = vmatpush1.bf16.msra.mxu0 0
        %1698 = vmatprep.subr.bf16.mxu0 0
        %1699 = vmatpush1.bf16.msra.mxu0 %v1686
        %1700 = vmatprep.subr.bf16.mxu0 0
        %1701 = vmatpush1.bf16.msra.mxu0 %v1683
        %1702 = vmatprep.subr.bf16.mxu0 0
        %1703 = vmatpush1.bf16.msra.mxu0 %v1675
        %1704 = vmatprep.subr.bf16.mxu0 0
        %1705 = vmatpush2.bf16.msra.mxu0 0
        %1706 = vmatprep.subr.bf16.mxu0 0
        %1707 = vmatpush2.bf16.msra.mxu0 0
        %1708 = vmatprep.subr.bf16.mxu0 0
        %1709 = vmatpush2.bf16.msra.mxu0 0
        %1710 = vmatprep.subr.bf16.mxu0 0
        %1711 = vmatpush2.bf16.msra.mxu0 0
        %1712 = vmatprep.subr.bf16.mxu0 0
        %1713 = vmatpush2.bf16.msra.mxu0 0
        %1714 = vmatprep.subr.bf16.mxu0 0
        %1715 = vmatpush2.bf16.msra.mxu0 0
        %1716 = vmatprep.subr.bf16.mxu0 0
        %1717 = vmatpush2.bf16.msra.mxu0 0
        %1718 = vmatprep.subr.bf16.mxu0 0
        %1719 = vmatpush2.bf16.msra.mxu0 0
        %1720 = vmatprep.mubr.bf16.mxu0 0
        %1721 = vmatmul.mubr.bf16.gmra.mxu0 %v282
        %v1722 = vpop.f32.mrf.mxu0
        %v1723 = vadd.f32 0.0, %v1722
        %v1724 = vpop.f32.mrf.mxu0
        %v1725 = vpop.f32.mrf.mxu0
        %v1726 = vpop.f32.mrf.mxu0
        %1727 = vdwg.mxu0
        %v1729 = vcombine.high %v1723, %v1723
        %v1731 = vunpack.c.l.s4 1966171168
        %v1732 = vunpack.c.0.s8 %v1731
        %v1733 = vlaneseq
        %v1734 = vshrl.u32 %v1733, 7
        %v1735 = vsub.s32 %v1732, %v1734
        %v1736 = vrot.slane %v1723, %v1735
        %v1738 = vunpack.c.l.s4 1966171168
        %v1739 = vunpack.c.0.s8 %v1738
        %v1740 = vlaneseq
        %v1741 = vshrl.u32 %v1740, 7
        %v1742 = vsub.s32 %v1739, %v1741
        %v1743 = vrot.slane %v1729, %v1742
        %v1744 = vcombine.high %v1736, %v1736
        %v1745 = vcombine.high %v1743, %v1743
        %v1747 = vunpack.c.l.s4 1966171168
        %v1748 = vunpack.c.0.s8 %v1747
        %v1749 = vlaneseq
        %v1750 = vshrl.u32 %v1749, 7
        %v1751 = vsub.s32 %v1748, %v1750
        %v1752 = vrot.slane %v1736, %v1751
        %v1754 = vunpack.c.l.s4 1966171168
        %v1755 = vunpack.c.0.s8 %v1754
        %v1756 = vlaneseq
        %v1757 = vshrl.u32 %v1756, 7
        %v1758 = vsub.s32 %v1755, %v1757
        %v1759 = vrot.slane %v1743, %v1758
        %v1761 = vunpack.c.l.s4 1966171168
        %v1762 = vunpack.c.0.s8 %v1761
        %v1763 = vlaneseq
        %v1764 = vshrl.u32 %v1763, 7
        %v1765 = vsub.s32 %v1762, %v1764
        %v1766 = vrot.slane %v1744, %v1765
        %v1768 = vunpack.c.l.s4 1966171168
        %v1769 = vunpack.c.0.s8 %v1768
        %v1770 = vlaneseq
        %v1771 = vshrl.u32 %v1770, 7
        %v1772 = vsub.s32 %v1769, %v1771
        %v1773 = vrot.slane %v1745, %v1772
        %v1774 = vcombine.high %v1752, %v1752
        %v1775 = vcombine.high %v1766, %v1766
        %1782 = vst.msk [vmem:[%s150 + $0xa] sm:$0x1] %vm381, %v1752
        %1783 = vst.msk [vmem:[%s150 + $0x1a] sm:$0x1] %vm381, %v1766
        %1784 = vst.msk [vmem:[%s150 + $0x2a] sm:$0x1] %vm381, %v1774
        %1785 = vst.msk [vmem:[%s150 + $0x3a] sm:$0x1] %vm381, %v1775
        %1786 = vst.msk [vmem:[%s150 + $0x4a] sm:$0x1] %vm381, %v1759
        %1787 = vst.msk [vmem:[%s150 + $0x5a] sm:$0x1] %vm381, %v1773
        %1788 = vrot.lane.b32.xlu0 %v1663, 127
        %v1789 = vpop.permute.xlu0 %1788
        %v1790 = vsel %vm199, %v1110, %v1096
        %v1791 = vsel %vm202, %v1112, %v1790
        %v1792 = vsel %vm205, %v1114, %v1791
        %v1793 = vpack.c.b16 %v1792, %v1792
        %1794 = vrot.lane.b32.xlu0 %v1793, 126
        %v1795 = vpop.permute.xlu0 %1794
        %v1796 = vsel %vm188, %v1247, %v1246
        %v1797 = vsel %vm191, %v1249, %v1796
        %v1798 = vsel %vm194, %v1251, %v1797
        %v1799 = vpack.c.b16 %v1798, %v1798
        %v1800 = vsel %vm199, %v1097, %v1239
        %v1801 = vsel %vm202, %v1241, %v1800
        %v1802 = vsel %vm205, %v1243, %v1801
        %v1803 = vpack.c.b16 %v1802, %v1802
        %1804 = vrot.lane.b32.xlu0 %v1803, 127
        %v1805 = vpop.permute.xlu0 %1804
        %1806 = vrot.lane.b32.xlu0 %v1799, 126
        %v1807 = vpop.permute.xlu0 %1806
        %v1808 = vsel %vm261, %v1527, %v1537
        %v1809 = vsel %vm265, %v1808, %v1539
        %v1811 = vsel %vm268, %v1809, %v1667
        %v1815 = vsel %vm261, %v1789, %v1795
        %v1817 = vsel %vm265, %v1815, %v1799
        %v1819 = vsel %vm268, %v1817, %v1805
        %v1822 = vsel %vm261, %v1807, 0
        %1824 = vmatprep.subr.bf16.mxu0 0
        %1825 = vmatpush1.bf16.msra.mxu0 0
        %1826 = vmatprep.subr.bf16.mxu0 0
        %1827 = vmatpush1.bf16.msra.mxu0 0
        %1828 = vmatprep.subr.bf16.mxu0 0
        %1829 = vmatpush1.bf16.msra.mxu0 0
        %1830 = vmatprep.subr.bf16.mxu0 0
        %1831 = vmatpush1.bf16.msra.mxu0 0
        %1832 = vmatprep.subr.bf16.mxu0 0
        %1833 = vmatpush1.bf16.msra.mxu0 0
        %1834 = vmatprep.subr.bf16.mxu0 0
        %1835 = vmatpush1.bf16.msra.mxu0 %v1822
        %1836 = vmatprep.subr.bf16.mxu0 0
        %1837 = vmatpush1.bf16.msra.mxu0 %v1819
        %1838 = vmatprep.subr.bf16.mxu0 0
        %1839 = vmatpush1.bf16.msra.mxu0 %v1811
        %1840 = vmatprep.subr.bf16.mxu0 0
        %1841 = vmatpush2.bf16.msra.mxu0 0
        %1842 = vmatprep.subr.bf16.mxu0 0
        %1843 = vmatpush2.bf16.msra.mxu0 0
        %1844 = vmatprep.subr.bf16.mxu0 0
        %1845 = vmatpush2.bf16.msra.mxu0 0
        %1846 = vmatprep.subr.bf16.mxu0 0
        %1847 = vmatpush2.bf16.msra.mxu0 0
        %1848 = vmatprep.subr.bf16.mxu0 0
        %1849 = vmatpush2.bf16.msra.mxu0 0
        %1850 = vmatprep.subr.bf16.mxu0 0
        %1851 = vmatpush2.bf16.msra.mxu0 0
        %1852 = vmatprep.subr.bf16.mxu0 0
        %1853 = vmatpush2.bf16.msra.mxu0 0
        %1854 = vmatprep.subr.bf16.mxu0 0
        %1855 = vmatpush2.bf16.msra.mxu0 0
        %1856 = vmatprep.mubr.bf16.mxu0 0
        %1857 = vmatmul.mubr.bf16.gmra.mxu0 %v282
        %v1858 = vpop.f32.mrf.mxu0
        %v1859 = vadd.f32 0.0, %v1858
        %v1860 = vpop.f32.mrf.mxu0
        %v1861 = vpop.f32.mrf.mxu0
        %v1862 = vpop.f32.mrf.mxu0
        %1863 = vdwg.mxu0
        %v1865 = vcombine.high %v1859, %v1859
        %v1867 = vunpack.c.l.s4 1966171168
        %v1868 = vunpack.c.0.s8 %v1867
        %v1869 = vlaneseq
        %v1870 = vshrl.u32 %v1869, 7
        %v1871 = vsub.s32 %v1868, %v1870
        %v1872 = vrot.slane %v1859, %v1871
        %v1874 = vunpack.c.l.s4 1966171168
        %v1875 = vunpack.c.0.s8 %v1874
        %v1876 = vlaneseq
        %v1877 = vshrl.u32 %v1876, 7
        %v1878 = vsub.s32 %v1875, %v1877
        %v1879 = vrot.slane %v1865, %v1878
        %v1880 = vcombine.high %v1872, %v1872
        %v1881 = vcombine.high %v1879, %v1879
        %v1883 = vunpack.c.l.s4 1966171168
        %v1884 = vunpack.c.0.s8 %v1883
        %v1885 = vlaneseq
        %v1886 = vshrl.u32 %v1885, 7
        %v1887 = vsub.s32 %v1884, %v1886
        %v1888 = vrot.slane %v1872, %v1887
        %v1890 = vunpack.c.l.s4 1966171168
        %v1891 = vunpack.c.0.s8 %v1890
        %v1892 = vlaneseq
        %v1893 = vshrl.u32 %v1892, 7
        %v1894 = vsub.s32 %v1891, %v1893
        %v1895 = vrot.slane %v1879, %v1894
        %v1897 = vunpack.c.l.s4 1966171168
        %v1898 = vunpack.c.0.s8 %v1897
        %v1899 = vlaneseq
        %v1900 = vshrl.u32 %v1899, 7
        %v1901 = vsub.s32 %v1898, %v1900
        %v1902 = vrot.slane %v1880, %v1901
        %v1904 = vunpack.c.l.s4 1966171168
        %v1905 = vunpack.c.0.s8 %v1904
        %v1906 = vlaneseq
        %v1907 = vshrl.u32 %v1906, 7
        %v1908 = vsub.s32 %v1905, %v1907
        %v1909 = vrot.slane %v1881, %v1908
        %v1910 = vcombine.high %v1888, %v1888
        %v1911 = vcombine.high %v1902, %v1902
        %1918 = vst.msk [vmem:[%s150 + $0xb] sm:$0x1] %vm381, %v1888
        %1919 = vst.msk [vmem:[%s150 + $0x1b] sm:$0x1] %vm381, %v1902
        %1920 = vst.msk [vmem:[%s150 + $0x2b] sm:$0x1] %vm381, %v1910
        %1921 = vst.msk [vmem:[%s150 + $0x3b] sm:$0x1] %vm381, %v1911
        %1922 = vst.msk [vmem:[%s150 + $0x4b] sm:$0x1] %vm381, %v1895
        %1923 = vst.msk [vmem:[%s150 + $0x5b] sm:$0x1] %vm381, %v1909
        %1924 = vrot.lane.b32.xlu0 %v1793, 127
        %v1925 = vpop.permute.xlu0 %1924
        %1926 = vrot.lane.b32.xlu0 %v1799, 127
        %v1927 = vpop.permute.xlu0 %1926
        %1928 = vrot.lane.b32.xlu0 %v1803, 126
        %v1929 = vpop.permute.xlu0 %1928
        %v1930 = vsel %vm188, %v1388, %v1387
        %v1931 = vsel %vm191, %v1390, %v1930
        %v1932 = vsel %vm194, %v1392, %v1931
        %v1933 = vpack.c.b16 %v1932, %v1932
        %v1934 = vsel %vm199, %v1381, %v1380
        %v1935 = vsel %vm202, %v1098, %v1934
        %v1936 = vsel %vm205, %v1384, %v1935
        %v1937 = vpack.c.b16 %v1936, %v1936
        %1938 = vrot.lane.b32.xlu0 %v1937, 127
        %v1939 = vpop.permute.xlu0 %1938
        %1940 = vrot.lane.b32.xlu0 %v1933, 126
        %v1941 = vpop.permute.xlu0 %1940
        %v1943 = vsel %vm261, %v1663, %v1925
        %v1944 = vsel %vm265, %v1943, %v1671
        %v1946 = vsel %vm268, %v1944, %v1803
        %v1950 = vsel %vm261, %v1927, %v1929
        %v1952 = vsel %vm265, %v1950, %v1933
        %v1954 = vsel %vm268, %v1952, %v1939
        %v1957 = vsel %vm261, %v1941, 0
        %1959 = vmatprep.subr.bf16.mxu0 0
        %1960 = vmatpush1.bf16.msra.mxu0 0
        %1961 = vmatprep.subr.bf16.mxu0 0
        %1962 = vmatpush1.bf16.msra.mxu0 0
        %1963 = vmatprep.subr.bf16.mxu0 0
        %1964 = vmatpush1.bf16.msra.mxu0 0
        %1965 = vmatprep.subr.bf16.mxu0 0
        %1966 = vmatpush1.bf16.msra.mxu0 0
        %1967 = vmatprep.subr.bf16.mxu0 0
        %1968 = vmatpush1.bf16.msra.mxu0 0
        %1969 = vmatprep.subr.bf16.mxu0 0
        %1970 = vmatpush1.bf16.msra.mxu0 %v1957
        %1971 = vmatprep.subr.bf16.mxu0 0
        %1972 = vmatpush1.bf16.msra.mxu0 %v1954
        %1973 = vmatprep.subr.bf16.mxu0 0
        %1974 = vmatpush1.bf16.msra.mxu0 %v1946
        %1975 = vmatprep.subr.bf16.mxu0 0
        %1976 = vmatpush2.bf16.msra.mxu0 0
        %1977 = vmatprep.subr.bf16.mxu0 0
        %1978 = vmatpush2.bf16.msra.mxu0 0
        %1979 = vmatprep.subr.bf16.mxu0 0
        %1980 = vmatpush2.bf16.msra.mxu0 0
        %1981 = vmatprep.subr.bf16.mxu0 0
        %1982 = vmatpush2.bf16.msra.mxu0 0
        %1983 = vmatprep.subr.bf16.mxu0 0
        %1984 = vmatpush2.bf16.msra.mxu0 0
        %1985 = vmatprep.subr.bf16.mxu0 0
        %1986 = vmatpush2.bf16.msra.mxu0 0
        %1987 = vmatprep.subr.bf16.mxu0 0
        %1988 = vmatpush2.bf16.msra.mxu0 0
        %1989 = vmatprep.subr.bf16.mxu0 0
        %1990 = vmatpush2.bf16.msra.mxu0 0
        %1991 = vmatprep.mubr.bf16.mxu0 0
        %1992 = vmatmul.mubr.bf16.gmra.mxu0 %v282
        %v1993 = vpop.f32.mrf.mxu0
        %v1994 = vadd.f32 0.0, %v1993
        %v1995 = vpop.f32.mrf.mxu0
        %v1996 = vpop.f32.mrf.mxu0
        %v1997 = vpop.f32.mrf.mxu0
        %1998 = vdwg.mxu0
        %v2000 = vcombine.high %v1994, %v1994
        %v2002 = vunpack.c.l.s4 1966171168
        %v2003 = vunpack.c.0.s8 %v2002
        %v2004 = vlaneseq
        %v2005 = vshrl.u32 %v2004, 7
        %v2006 = vsub.s32 %v2003, %v2005
        %v2007 = vrot.slane %v1994, %v2006
        %v2009 = vunpack.c.l.s4 1966171168
        %v2010 = vunpack.c.0.s8 %v2009
        %v2011 = vlaneseq
        %v2012 = vshrl.u32 %v2011, 7
        %v2013 = vsub.s32 %v2010, %v2012
        %v2014 = vrot.slane %v2000, %v2013
        %v2015 = vcombine.high %v2007, %v2007
        %v2016 = vcombine.high %v2014, %v2014
        %v2018 = vunpack.c.l.s4 1966171168
        %v2019 = vunpack.c.0.s8 %v2018
        %v2020 = vlaneseq
        %v2021 = vshrl.u32 %v2020, 7
        %v2022 = vsub.s32 %v2019, %v2021
        %v2023 = vrot.slane %v2007, %v2022
        %v2025 = vunpack.c.l.s4 1966171168
        %v2026 = vunpack.c.0.s8 %v2025
        %v2027 = vlaneseq
        %v2028 = vshrl.u32 %v2027, 7
        %v2029 = vsub.s32 %v2026, %v2028
        %v2030 = vrot.slane %v2014, %v2029
        %v2032 = vunpack.c.l.s4 1966171168
        %v2033 = vunpack.c.0.s8 %v2032
        %v2034 = vlaneseq
        %v2035 = vshrl.u32 %v2034, 7
        %v2036 = vsub.s32 %v2033, %v2035
        %v2037 = vrot.slane %v2015, %v2036
        %v2039 = vunpack.c.l.s4 1966171168
        %v2040 = vunpack.c.0.s8 %v2039
        %v2041 = vlaneseq
        %v2042 = vshrl.u32 %v2041, 7
        %v2043 = vsub.s32 %v2040, %v2042
        %v2044 = vrot.slane %v2016, %v2043
        %v2045 = vcombine.high %v2023, %v2023
        %v2046 = vcombine.high %v2037, %v2037
        %2053 = vst.msk [vmem:[%s150 + $0xc] sm:$0x1] %vm381, %v2023
        %2054 = vst.msk [vmem:[%s150 + $0x1c] sm:$0x1] %vm381, %v2037
        %2055 = vst.msk [vmem:[%s150 + $0x2c] sm:$0x1] %vm381, %v2045
        %2056 = vst.msk [vmem:[%s150 + $0x3c] sm:$0x1] %vm381, %v2046
        %2057 = vst.msk [vmem:[%s150 + $0x4c] sm:$0x1] %vm381, %v2030
        %2058 = vst.msk [vmem:[%s150 + $0x5c] sm:$0x1] %vm381, %v2044
        %2059 = vrot.lane.b32.xlu0 %v1933, 127
        %v2060 = vpop.permute.xlu0 %2059
        %2061 = vrot.lane.b32.xlu0 %v1937, 126
        %v2062 = vpop.permute.xlu0 %2061
        %v2063 = vsel %vm188, %v1529, %v1528
        %v2064 = vsel %vm191, %v1531, %v2063
        %v2065 = vsel %vm194, %v1533, %v2064
        %v2066 = vpack.c.b16 %v2065, %v2065
        %v2067 = vsel %vm199, %v1522, %v1521
        %v2068 = vsel %vm202, %v1524, %v2067
        %v2069 = vsel %vm205, %v1099, %v2068
        %v2070 = vpack.c.b16 %v2069, %v2069
        %2071 = vrot.lane.b32.xlu0 %v2070, 127
        %v2072 = vpop.permute.xlu0 %2071
        %2073 = vrot.lane.b32.xlu0 %v2066, 126
        %v2074 = vpop.permute.xlu0 %2073
        %v2075 = vsel %vm261, %v1799, %v1805
        %v2076 = vsel %vm265, %v2075, %v1807
        %v2078 = vsel %vm268, %v2076, %v1937
        %v2082 = vsel %vm261, %v2060, %v2062
        %v2084 = vsel %vm265, %v2082, %v2066
        %v2086 = vsel %vm268, %v2084, %v2072
        %v2089 = vsel %vm261, %v2074, 0
        %2091 = vmatprep.subr.bf16.mxu0 0
        %2092 = vmatpush1.bf16.msra.mxu0 0
        %2093 = vmatprep.subr.bf16.mxu0 0
        %2094 = vmatpush1.bf16.msra.mxu0 0
        %2095 = vmatprep.subr.bf16.mxu0 0
        %2096 = vmatpush1.bf16.msra.mxu0 0
        %2097 = vmatprep.subr.bf16.mxu0 0
        %2098 = vmatpush1.bf16.msra.mxu0 0
        %2099 = vmatprep.subr.bf16.mxu0 0
        %2100 = vmatpush1.bf16.msra.mxu0 0
        %2101 = vmatprep.subr.bf16.mxu0 0
        %2102 = vmatpush1.bf16.msra.mxu0 %v2089
        %2103 = vmatprep.subr.bf16.mxu0 0
        %2104 = vmatpush1.bf16.msra.mxu0 %v2086
        %2105 = vmatprep.subr.bf16.mxu0 0
        %2106 = vmatpush1.bf16.msra.mxu0 %v2078
        %2107 = vmatprep.subr.bf16.mxu0 0
        %2108 = vmatpush2.bf16.msra.mxu0 0
        %2109 = vmatprep.subr.bf16.mxu0 0
        %2110 = vmatpush2.bf16.msra.mxu0 0
        %2111 = vmatprep.subr.bf16.mxu0 0
        %2112 = vmatpush2.bf16.msra.mxu0 0
        %2113 = vmatprep.subr.bf16.mxu0 0
        %2114 = vmatpush2.bf16.msra.mxu0 0
        %2115 = vmatprep.subr.bf16.mxu0 0
        %2116 = vmatpush2.bf16.msra.mxu0 0
        %2117 = vmatprep.subr.bf16.mxu0 0
        %2118 = vmatpush2.bf16.msra.mxu0 0
        %2119 = vmatprep.subr.bf16.mxu0 0
        %2120 = vmatpush2.bf16.msra.mxu0 0
        %2121 = vmatprep.subr.bf16.mxu0 0
        %2122 = vmatpush2.bf16.msra.mxu0 0
        %2123 = vmatprep.mubr.bf16.mxu0 0
        %2124 = vmatmul.mubr.bf16.gmra.mxu0 %v282
        %v2125 = vpop.f32.mrf.mxu0
        %v2126 = vadd.f32 0.0, %v2125
        %v2127 = vpop.f32.mrf.mxu0
        %v2128 = vpop.f32.mrf.mxu0
        %v2129 = vpop.f32.mrf.mxu0
        %2130 = vdwg.mxu0
        %v2132 = vcombine.high %v2126, %v2126
        %v2134 = vunpack.c.l.s4 1966171168
        %v2135 = vunpack.c.0.s8 %v2134
        %v2136 = vlaneseq
        %v2137 = vshrl.u32 %v2136, 7
        %v2138 = vsub.s32 %v2135, %v2137
        %v2139 = vrot.slane %v2126, %v2138
        %v2141 = vunpack.c.l.s4 1966171168
        %v2142 = vunpack.c.0.s8 %v2141
        %v2143 = vlaneseq
        %v2144 = vshrl.u32 %v2143, 7
        %v2145 = vsub.s32 %v2142, %v2144
        %v2146 = vrot.slane %v2132, %v2145
        %v2147 = vcombine.high %v2139, %v2139
        %v2148 = vcombine.high %v2146, %v2146
        %v2150 = vunpack.c.l.s4 1966171168
        %v2151 = vunpack.c.0.s8 %v2150
        %v2152 = vlaneseq
        %v2153 = vshrl.u32 %v2152, 7
        %v2154 = vsub.s32 %v2151, %v2153
        %v2155 = vrot.slane %v2139, %v2154
        %v2157 = vunpack.c.l.s4 1966171168
        %v2158 = vunpack.c.0.s8 %v2157
        %v2159 = vlaneseq
        %v2160 = vshrl.u32 %v2159, 7
        %v2161 = vsub.s32 %v2158, %v2160
        %v2162 = vrot.slane %v2146, %v2161
        %v2164 = vunpack.c.l.s4 1966171168
        %v2165 = vunpack.c.0.s8 %v2164
        %v2166 = vlaneseq
        %v2167 = vshrl.u32 %v2166, 7
        %v2168 = vsub.s32 %v2165, %v2167
        %v2169 = vrot.slane %v2147, %v2168
        %v2171 = vunpack.c.l.s4 1966171168
        %v2172 = vunpack.c.0.s8 %v2171
        %v2173 = vlaneseq
        %v2174 = vshrl.u32 %v2173, 7
        %v2175 = vsub.s32 %v2172, %v2174
        %v2176 = vrot.slane %v2148, %v2175
        %v2177 = vcombine.high %v2155, %v2155
        %v2178 = vcombine.high %v2169, %v2169
        %2185 = vst.msk [vmem:[%s150 + $0xd] sm:$0x1] %vm381, %v2155
        %2186 = vst.msk [vmem:[%s150 + $0x1d] sm:$0x1] %vm381, %v2169
        %2187 = vst.msk [vmem:[%s150 + $0x2d] sm:$0x1] %vm381, %v2177
        %2188 = vst.msk [vmem:[%s150 + $0x3d] sm:$0x1] %vm381, %v2178
        %2189 = vst.msk [vmem:[%s150 + $0x4d] sm:$0x1] %vm381, %v2162
        %2190 = vst.msk [vmem:[%s150 + $0x5d] sm:$0x1] %vm381, %v2176
        %2191 = vrot.lane.b32.xlu0 %v2066, 127
        %v2192 = vpop.permute.xlu0 %2191
        %2193 = vrot.lane.b32.xlu0 %v2070, 126
        %v2194 = vpop.permute.xlu0 %2193
        %v2199 = vunpack.c.l.b16 %v160
        %v2200 = vunpack.c.l.b16 %v163
        %v2201 = vunpack.c.l.b16 %v166
        %v2202 = vunpack.c.l.b16 %v169
        %v2203 = vpack.c.b16 %v2199, %v2199
        %v2204 = vpack.c.b16 %v2200, %v2200
        %v2205 = vpack.c.b16 %v2201, %v2201
        %v2206 = vpack.c.b16 %v2202, %v2202
        %v2207 = vunpack.c.h.b16 %v2203
        %v2208 = vunpack.c.h.b16 %v2204
        %v2209 = vunpack.c.h.b16 %v2205
        %v2210 = vunpack.c.h.b16 %v2206
        %v2211 = vrot.slane %v2208, 7
        %v2212 = vsel %vm188, %v2211, %v2207
        %v2213 = vrot.slane %v2209, 6
        %v2214 = vsel %vm191, %v2213, %v2212
        %v2215 = vrot.slane %v2210, 5
        %v2216 = vsel %vm194, %v2215, %v2214
        %v2217 = vpack.c.b16 %v2216, %v2216
        %v2218 = vunpack.c.l.b16 %v2203
        %v2219 = vunpack.c.l.b16 %v2204
        %v2220 = vunpack.c.l.b16 %v2205
        %v2221 = vunpack.c.l.b16 %v2206
        %v2222 = vrot.slane %v2218, 4
        %v2223 = vrot.slane %v2219, 3
        %v2224 = vsel %vm199, %v2223, %v2222
        %v2225 = vrot.slane %v2220, 2
        %v2226 = vsel %vm202, %v2225, %v2224
        %v2227 = vrot.slane %v2221, 1
        %v2228 = vsel %vm205, %v2227, %v2226
        %v2229 = vpack.c.b16 %v2228, %v2228
        %2230 = vrot.lane.b32.xlu0 %v2229, 127
        %v2231 = vpop.permute.xlu0 %2230
        %v2232 = vrot.slane %v2219, 7
        %v2233 = vsel %vm188, %v2232, %v2218
        %v2234 = vrot.slane %v2220, 6
        %v2235 = vsel %vm191, %v2234, %v2233
        %v2236 = vrot.slane %v2221, 5
        %v2237 = vsel %vm194, %v2236, %v2235
        %v2238 = vpack.c.b16 %v2237, %v2237
        %2239 = vrot.lane.b32.xlu0 %v2238, 126
        %v2240 = vpop.permute.xlu0 %2239
        %v2241 = vsel %vm261, %v1933, %v1939
        %v2242 = vsel %vm265, %v2241, %v1941
        %v2244 = vsel %vm268, %v2242, %v2070
        %v2248 = vsel %vm261, %v2192, %v2194
        %v2250 = vsel %vm265, %v2248, %v2217
        %v2252 = vsel %vm268, %v2250, %v2231
        %v2255 = vsel %vm261, %v2240, 0
        %2257 = vmatprep.subr.bf16.mxu0 0
        %2258 = vmatpush1.bf16.msra.mxu0 0
        %2259 = vmatprep.subr.bf16.mxu0 0
        %2260 = vmatpush1.bf16.msra.mxu0 0
        %2261 = vmatprep.subr.bf16.mxu0 0
        %2262 = vmatpush1.bf16.msra.mxu0 0
        %2263 = vmatprep.subr.bf16.mxu0 0
        %2264 = vmatpush1.bf16.msra.mxu0 0
        %2265 = vmatprep.subr.bf16.mxu0 0
        %2266 = vmatpush1.bf16.msra.mxu0 0
        %2267 = vmatprep.subr.bf16.mxu0 0
        %2268 = vmatpush1.bf16.msra.mxu0 %v2255
        %2269 = vmatprep.subr.bf16.mxu0 0
        %2270 = vmatpush1.bf16.msra.mxu0 %v2252
        %2271 = vmatprep.subr.bf16.mxu0 0
        %2272 = vmatpush1.bf16.msra.mxu0 %v2244
        %2273 = vmatprep.subr.bf16.mxu0 0
        %2274 = vmatpush2.bf16.msra.mxu0 0
        %2275 = vmatprep.subr.bf16.mxu0 0
        %2276 = vmatpush2.bf16.msra.mxu0 0
        %2277 = vmatprep.subr.bf16.mxu0 0
        %2278 = vmatpush2.bf16.msra.mxu0 0
        %2279 = vmatprep.subr.bf16.mxu0 0
        %2280 = vmatpush2.bf16.msra.mxu0 0
        %2281 = vmatprep.subr.bf16.mxu0 0
        %2282 = vmatpush2.bf16.msra.mxu0 0
        %2283 = vmatprep.subr.bf16.mxu0 0
        %2284 = vmatpush2.bf16.msra.mxu0 0
        %2285 = vmatprep.subr.bf16.mxu0 0
        %2286 = vmatpush2.bf16.msra.mxu0 0
        %2287 = vmatprep.subr.bf16.mxu0 0
        %2288 = vmatpush2.bf16.msra.mxu0 0
        %2289 = vmatprep.mubr.bf16.mxu0 0
        %2290 = vmatmul.mubr.bf16.gmra.mxu0 %v282
        %v2291 = vpop.f32.mrf.mxu0
        %v2292 = vadd.f32 0.0, %v2291
        %v2293 = vpop.f32.mrf.mxu0
        %v2294 = vpop.f32.mrf.mxu0
        %v2295 = vpop.f32.mrf.mxu0
        %2296 = vdwg.mxu0
        %v2298 = vcombine.high %v2292, %v2292
        %v2300 = vunpack.c.l.s4 1966171168
        %v2301 = vunpack.c.0.s8 %v2300
        %v2302 = vlaneseq
        %v2303 = vshrl.u32 %v2302, 7
        %v2304 = vsub.s32 %v2301, %v2303
        %v2305 = vrot.slane %v2292, %v2304
        %v2307 = vunpack.c.l.s4 1966171168
        %v2308 = vunpack.c.0.s8 %v2307
        %v2309 = vlaneseq
        %v2310 = vshrl.u32 %v2309, 7
        %v2311 = vsub.s32 %v2308, %v2310
        %v2312 = vrot.slane %v2298, %v2311
        %v2313 = vcombine.high %v2305, %v2305
        %v2314 = vcombine.high %v2312, %v2312
        %v2316 = vunpack.c.l.s4 1966171168
        %v2317 = vunpack.c.0.s8 %v2316
        %v2318 = vlaneseq
        %v2319 = vshrl.u32 %v2318, 7
        %v2320 = vsub.s32 %v2317, %v2319
        %v2321 = vrot.slane %v2305, %v2320
        %v2323 = vunpack.c.l.s4 1966171168
        %v2324 = vunpack.c.0.s8 %v2323
        %v2325 = vlaneseq
        %v2326 = vshrl.u32 %v2325, 7
        %v2327 = vsub.s32 %v2324, %v2326
        %v2328 = vrot.slane %v2312, %v2327
        %v2330 = vunpack.c.l.s4 1966171168
        %v2331 = vunpack.c.0.s8 %v2330
        %v2332 = vlaneseq
        %v2333 = vshrl.u32 %v2332, 7
        %v2334 = vsub.s32 %v2331, %v2333
        %v2335 = vrot.slane %v2313, %v2334
        %v2337 = vunpack.c.l.s4 1966171168
        %v2338 = vunpack.c.0.s8 %v2337
        %v2339 = vlaneseq
        %v2340 = vshrl.u32 %v2339, 7
        %v2341 = vsub.s32 %v2338, %v2340
        %v2342 = vrot.slane %v2314, %v2341
        %v2343 = vcombine.high %v2321, %v2321
        %v2344 = vcombine.high %v2335, %v2335
        %2351 = vst.msk [vmem:[%s150 + $0xe] sm:$0x1] %vm381, %v2321
        %2352 = vst.msk [vmem:[%s150 + $0x1e] sm:$0x1] %vm381, %v2335
        %2353 = vst.msk [vmem:[%s150 + $0x2e] sm:$0x1] %vm381, %v2343
        %2354 = vst.msk [vmem:[%s150 + $0x3e] sm:$0x1] %vm381, %v2344
        %2355 = vst.msk [vmem:[%s150 + $0x4e] sm:$0x1] %vm381, %v2328
        %2356 = vst.msk [vmem:[%s150 + $0x5e] sm:$0x1] %vm381, %v2342
        %2357 = vrot.lane.b32.xlu0 %v2238, 127
        %v2358 = vpop.permute.xlu0 %2357
        %2359 = vrot.lane.b32.xlu0 %v2229, 126
        %v2360 = vpop.permute.xlu0 %2359
        %v2361 = vrot.slane %v2218, 1
        %v2362 = vsel %vm188, %v2219, %v2361
        %v2363 = vrot.slane %v2220, 7
        %v2364 = vsel %vm191, %v2363, %v2362
        %v2365 = vrot.slane %v2221, 6
        %v2366 = vsel %vm194, %v2365, %v2364
        %v2367 = vpack.c.b16 %v2366, %v2366
        %v2368 = vrot.slane %v2218, 5
        %v2369 = vrot.slane %v2219, 4
        %v2370 = vsel %vm199, %v2369, %v2368
        %v2371 = vrot.slane %v2220, 3
        %v2372 = vsel %vm202, %v2371, %v2370
        %v2373 = vrot.slane %v2221, 2
        %v2374 = vsel %vm205, %v2373, %v2372
        %v2375 = vpack.c.b16 %v2374, %v2374
        %2376 = vrot.lane.b32.xlu0 %v2375, 127
        %v2377 = vpop.permute.xlu0 %2376
        %2378 = vrot.lane.b32.xlu0 %v2367, 126
        %v2379 = vpop.permute.xlu0 %2378
        %v2380 = vsel %vm261, %v2066, %v2072
        %v2381 = vsel %vm265, %v2380, %v2074
        %v2383 = vsel %vm268, %v2381, %v2229
        %v2387 = vsel %vm261, %v2358, %v2360
        %v2389 = vsel %vm265, %v2387, %v2367
        %v2391 = vsel %vm268, %v2389, %v2377
        %v2394 = vsel %vm261, %v2379, 0
        %2396 = vmatprep.subr.bf16.mxu0 0
        %2397 = vmatpush1.bf16.msra.mxu0 0
        %2398 = vmatprep.subr.bf16.mxu0 0
        %2399 = vmatpush1.bf16.msra.mxu0 0
        %2400 = vmatprep.subr.bf16.mxu0 0
        %2401 = vmatpush1.bf16.msra.mxu0 0
        %2402 = vmatprep.subr.bf16.mxu0 0
        %2403 = vmatpush1.bf16.msra.mxu0 0
        %2404 = vmatprep.subr.bf16.mxu0 0
        %2405 = vmatpush1.bf16.msra.mxu0 0
        %2406 = vmatprep.subr.bf16.mxu0 0
        %2407 = vmatpush1.bf16.msra.mxu0 %v2394
        %2408 = vmatprep.subr.bf16.mxu0 0
        %2409 = vmatpush1.bf16.msra.mxu0 %v2391
        %2410 = vmatprep.subr.bf16.mxu0 0
        %2411 = vmatpush1.bf16.msra.mxu0 %v2383
        %2412 = vmatprep.subr.bf16.mxu0 0
        %2413 = vmatpush2.bf16.msra.mxu0 0
        %2414 = vmatprep.subr.bf16.mxu0 0
        %2415 = vmatpush2.bf16.msra.mxu0 0
        %2416 = vmatprep.subr.bf16.mxu0 0
        %2417 = vmatpush2.bf16.msra.mxu0 0
        %2418 = vmatprep.subr.bf16.mxu0 0
        %2419 = vmatpush2.bf16.msra.mxu0 0
        %2420 = vmatprep.subr.bf16.mxu0 0
        %2421 = vmatpush2.bf16.msra.mxu0 0
        %2422 = vmatprep.subr.bf16.mxu0 0
        %2423 = vmatpush2.bf16.msra.mxu0 0
        %2424 = vmatprep.subr.bf16.mxu0 0
        %2425 = vmatpush2.bf16.msra.mxu0 0
        %2426 = vmatprep.subr.bf16.mxu0 0
        %2427 = vmatpush2.bf16.msra.mxu0 0
        %2428 = vmatprep.mubr.bf16.mxu0 0
        %2429 = vmatmul.mubr.bf16.gmra.mxu0 %v282
        %v2430 = vpop.f32.mrf.mxu0
        %v2431 = vadd.f32 0.0, %v2430
        %v2432 = vpop.f32.mrf.mxu0
        %v2433 = vpop.f32.mrf.mxu0
        %v2434 = vpop.f32.mrf.mxu0
        %2435 = vdwg.mxu0
        %v2437 = vcombine.high %v2431, %v2431
        %v2439 = vunpack.c.l.s4 1966171168
        %v2440 = vunpack.c.0.s8 %v2439
        %v2441 = vlaneseq
        %v2442 = vshrl.u32 %v2441, 7
        %v2443 = vsub.s32 %v2440, %v2442
        %v2444 = vrot.slane %v2431, %v2443
        %v2446 = vunpack.c.l.s4 1966171168
        %v2447 = vunpack.c.0.s8 %v2446
        %v2448 = vlaneseq
        %v2449 = vshrl.u32 %v2448, 7
        %v2450 = vsub.s32 %v2447, %v2449
        %v2451 = vrot.slane %v2437, %v2450
        %v2452 = vcombine.high %v2444, %v2444
        %v2453 = vcombine.high %v2451, %v2451
        %v2455 = vunpack.c.l.s4 1966171168
        %v2456 = vunpack.c.0.s8 %v2455
        %v2457 = vlaneseq
        %v2458 = vshrl.u32 %v2457, 7
        %v2459 = vsub.s32 %v2456, %v2458
        %v2460 = vrot.slane %v2444, %v2459
        %v2462 = vunpack.c.l.s4 1966171168
        %v2463 = vunpack.c.0.s8 %v2462
        %v2464 = vlaneseq
        %v2465 = vshrl.u32 %v2464, 7
        %v2466 = vsub.s32 %v2463, %v2465
        %v2467 = vrot.slane %v2451, %v2466
        %v2469 = vunpack.c.l.s4 1966171168
        %v2470 = vunpack.c.0.s8 %v2469
        %v2471 = vlaneseq
        %v2472 = vshrl.u32 %v2471, 7
        %v2473 = vsub.s32 %v2470, %v2472
        %v2474 = vrot.slane %v2452, %v2473
        %v2476 = vunpack.c.l.s4 1966171168
        %v2477 = vunpack.c.0.s8 %v2476
        %v2478 = vlaneseq
        %v2479 = vshrl.u32 %v2478, 7
        %v2480 = vsub.s32 %v2477, %v2479
        %v2481 = vrot.slane %v2453, %v2480
        %v2482 = vcombine.high %v2460, %v2460
        %v2483 = vcombine.high %v2474, %v2474
        %2490 = vst.msk [vmem:[%s150 + $0xf] sm:$0x1] %vm381, %v2460
        %2491 = vst.msk [vmem:[%s150 + $0x1f] sm:$0x1] %vm381, %v2474
        %2492 = vst.msk [vmem:[%s150 + $0x2f] sm:$0x1] %vm381, %v2482
        %2493 = vst.msk [vmem:[%s150 + $0x3f] sm:$0x1] %vm381, %v2483
        %2494 = vst.msk [vmem:[%s150 + $0x4f] sm:$0x1] %vm381, %v2467
        %2495 = vst.msk [vmem:[%s150 + $0x5f] sm:$0x1] %vm381, %v2481
        %s2496 = sand.u32 %s85, 1
        %s2497 = scalar_lea.sflag [#allocation3], %s2496
        %s2498 = sand.u32 %s85, 1
        %s2499 = smul.addr %s2498, 96
        %s2500 = scalar_lea.vmem [#allocation2], %s2499
        // Predicated region
        $region29: #{tpu_custom_call.1} parent=27 // pred_check
          %p2501 = pneg %p95
        $region30: #{tpu_custom_call.1} parent=27 // pred_check_branch
          %2503 = sbr.rel (%p2501) target = $region32
        $region31: #{tpu_custom_call.1} parent=27 // pred_region
          %s2504 = smul.u32 2, %s21
          %s2506 = ssub.s32 1536, 1536
          %2507 = vsyncadd %s2497, %s2506
          %s2508 = smul.addr %s20, 12
          %s2509 = sadd.s32 %s2504, %s2508
          %s2510 = smul.addr %s2509, 128
          %s2511 = scalar_lea.hbm %s2, %s2510
          %s2512 = sshll.u32 %s2500, 4
          %s2513 = int_to_ptr.vmem [resolvable:$true] %s2512
          %2518 = dma.vmem_to_hbm [thread:$0]  %s2513, 1536, %s2511, %s2497, 128, 128, 8
        $region32: #{tpu_custom_call.1} parent=27 // pred_fallthru
          _
      $region28: #{tpu_custom_call.1} parent=5 // pred_fallthru
        _
      %p2519 = scmp.le.s32.totalorder 2, %s11
      // Predicated region
      $region33: #{tpu_custom_call.1} parent=5 // pred_check
        %p2520 = pneg %p2519
      $region34: #{tpu_custom_call.1} parent=5 // pred_check_branch
        %2522 = sbr.rel (%p2520) target = $region36
      $region35: #{tpu_custom_call.1} parent=5 // pred_region
        %s2523 = ssub.s32 %s11, 2
        // Predicated region
        $region37: #{tpu_custom_call.1} parent=35 // pred_check
          %p2524 = pneg %p101
        $region38: #{tpu_custom_call.1} parent=35 // pred_check_branch
          %2526 = sbr.rel (%p2524) target = $region40
        $region39: #{tpu_custom_call.1} parent=35 // pred_region
          %s2527 = sand.u32 %s86, 1
          %s2528 = scalar_lea.sflag [#allocation3], %s2527
          %s2529 = sand.u32 %s86, 1
          %s2530 = smul.addr %s2529, 96
          %s2531 = scalar_lea.vmem [#allocation2], %s2530
          %2532 = dma.done %s2528, 1536
        $region40: #{tpu_custom_call.1} parent=35 // pred_fallthru
          _
      $region36: #{tpu_custom_call.1} parent=5 // pred_fallthru
        _
    $region6: #{tpu_custom_call.1} parent=1 // loop_footer
      %s15 = sadd.s32 1, %s11
    $region7: #{tpu_custom_call.1} parent=1 // loop_footer_branch
      %10 = sbr.rel target = $region3
    $region8: #{tpu_custom_call.1} parent=1 // loop_exit
      _
    %2533 = vsyncpa [#allocation3], 1
    %s2534 = scalar_lea.sflag [#allocation3], 1
    %2535 = vsyncpa %s2534, 1

</llo_original>
